<compile_context>
chip_gen: v5e
topology: v5e:2x2
jax: 0.10.0
libtpu: 0.0.40
codegen_flags: <defaults>
</compile_context>

<pallas_src>
import numpy as np

import jax
import jax.numpy as jnp
from jax.experimental import pallas as pl
from jax.experimental.pallas import tpu as pltpu

# ----------------------------------------------------------------------------
# Static network dimensions
# ----------------------------------------------------------------------------
KS = 3                         # conv kernel size
C_IN, C1, C2 = 3, 7, 16        # channels: input, conv1 out, conv2 out
H_IN = W_IN = 26               # input spatial size implied by fc1
H1 = W1 = H_IN - KS + 1        # 24  (conv1 output)
HP = WP = H1 // 2              # 12  (after 2x2 max-pool)
H2 = W2 = HP - KS + 1          # 10  (conv2 output)
NE = HP + 1                    # 13  even (and odd) input rows per image
N_FC1, N_FC2, N_CLASSES = 100, 72, 10
FC1_IN = C2 * H2 * W2          # 1600

LANE = 128                     # TPU lane width; all lane groups padded to this
K1 = KS * LANE                 # 384  conv1 banded-matmul K
N1 = 2 * LANE                  # 256  conv1 banded-matmul N (two pool halves)
K2 = KS * LANE                 # 384  conv2 banded-matmul K
N2 = 2 * LANE                  # 256  conv2 banded-matmul N (160 used)


# ----------------------------------------------------------------------------
# Fused forward kernel (one grid step == TB images)
# ----------------------------------------------------------------------------
def _make_kernel(tb):
    """Kernel factory; `tb` (images per grid step) is compile-time static."""

    def kernel(x_ref, t1_ref, b1_ref, t2_ref, b2_ref,
               wf1_ref, bf1_ref, wf2_ref, bf2_ref, wf3_ref, bf3_ref, out_ref):
        f32 = jnp.float32
        bf16 = jnp.bfloat16

        x = x_ref[...]                               # (26*tb, 128) bf16
        odd0 = NE * tb                               # start of odd-row region

        # ---- conv1 (3x3, 3->7) + ReLU as two banded matmuls. --------------
        # Row r*tb + t of pe/po <-> image t, conv1 output row 2r / 2r+1.
        xe0 = x[0:HP * tb]                           # even input rows 0..11
        xe1 = x[tb:(HP + 1) * tb]                    # even input rows 1..12
        xo0 = x[odd0:odd0 + HP * tb]                 # odd  input rows 0..11
        xo1 = x[odd0 + tb:odd0 + (HP + 1) * tb]      # odd  input rows 1..12
        pe = jnp.concatenate([xe0, xo0, xe1], axis=1)      # (12*tb, 384) bf16
        po = jnp.concatenate([xo0, xe1, xo1], axis=1)      # (12*tb, 384) bf16

        t1 = t1_ref[...]
        b1 = b1_ref[...]
        z1e = jnp.maximum(jnp.dot(pe, t1, preferred_element_type=f32) + b1, 0.0)
        z1o = jnp.maximum(jnp.dot(po, t1, preferred_element_type=f32) + b1, 0.0)

        # ---- 2x2 max-pool: W-partners are the two 128-lane halves, --------
        # H-partners are the even/odd conv1 streams.  (12*tb, 128) f32.
        pool = jnp.maximum(
            jnp.maximum(z1e[:, 0:LANE], z1e[:, LANE:2 * LANE]),
            jnp.maximum(z1o[:, 0:LANE], z1o[:, LANE:2 * LANE]))
        poolb = pool.astype(bf16)

        # ---- conv2 (3x3, 7->16) + ReLU. ------------------------------------
        # Row h*tb + t of p2/z2 <-> image t, conv2 output row h.
        p2 = jnp.concatenate([poolb[0:H2 * tb],
                              poolb[tb:(H2 + 1) * tb],
                              poolb[2 * tb:(H2 + 2) * tb]], axis=1)  # (10*tb, 384)
        z2 = jnp.maximum(jnp.dot(p2, t2_ref[...], preferred_element_type=f32)
                         + b2_ref[...], 0.0)                          # (10*tb, 256)
        z2b = z2.astype(bf16)

        # ---- fc1: NCHW flatten folded into an h-accumulated matmul. --------
        acc = jnp.dot(z2b[0:tb], wf1_ref[0], preferred_element_type=f32)
        for h in range(1, H2):
            acc = acc + jnp.dot(z2b[h * tb:(h + 1) * tb], wf1_ref[h],
                                preferred_element_type=f32)
        h1 = jnp.maximum(acc + bf1_ref[...], 0.0)                     # (tb, 128)

        # ---- fc2(ReLU) -> fc3(Sigmoid), lane-padded to 128. ----------------
        hid2 = jnp.maximum(
            jnp.dot(h1.astype(bf16), wf2_ref[...],
                    preferred_element_type=f32) + bf2_ref[...], 0.0)  # (tb, 128)
        y = jax.nn.sigmoid(
            jnp.dot(hid2.astype(bf16), wf3_ref[...],
                    preferred_element_type=f32) + bf3_ref[...])       # (tb, 128)
        out_ref[...] = y

    return kernel


def _choose_tb(batch):
    """Images per grid step: multiple of 8, >=2 grid steps when possible."""
    if batch >= 128:
        return 64
    if batch >= 64:
        return 32
    tb = -(-batch // 2)                    # ceil(B/2)
    return max(8, min(32, -(-tb // 8) * 8))


@jax.jit
def hyper_params_conv_nn_forward(x_nchw, kp):
    """Forward pass matching HyperParamsConvNN.forward. x_nchw: (B, 3, 26, 26)."""
    B = x_nchw.shape[0]
    TB = _choose_tb(B)
    G = -(-B // TB)
    B_pad = G * TB

    # Input layout prep (tiny, XLA-side): NCHW -> (B, H, W*C), lane-pad to 128,
    # cast to bf16, split even/odd rows, and re-layout so each batch block is
    # one contiguous (26*TB, 128) slab with row index parity*13*TB + row*TB + t.
    x = jnp.transpose(x_nchw, (0, 2, 3, 1)).reshape(B, H_IN, W_IN * C_IN)
    x = jnp.pad(x, ((0, B_pad - B), (0, 0), (0, LANE - W_IN * C_IN)))
    x = x.astype(jnp.bfloat16)                                # (B_pad, 26, 128)
    xs = jnp.stack([x[:, 0::2, :], x[:, 1::2, :]], axis=1)    # (B_pad, 2, 13, 128)
    xs = xs.reshape(G, TB, 2, NE, LANE).transpose(0, 2, 3, 1, 4)
    xs = xs.reshape(G * 2 * NE * TB, LANE)                    # (G*26*TB, 128)

    weights = (kp["t1"], kp["b1"], kp["t2"], kp["b2"],
               kp["wf1"], kp["bf1"], kp["wf2"], kp["bf2"],
               kp["wf3"], kp["bf3"])

    def _const(ndim):
        return lambda g: (0,) * ndim

    in_specs = ([pl.BlockSpec((2 * NE * TB, LANE), lambda g: (g, 0))]
                + [pl.BlockSpec(w.shape, _const(w.ndim)) for w in weights])

    out = pl.pallas_call(
        _make_kernel(TB),
        out_shape=jax.ShapeDtypeStruct((B_pad, LANE), jnp.float32),
        grid=(G,),
        in_specs=in_specs,
        out_specs=pl.BlockSpec((TB, LANE), lambda g: (g, 0)),
        compiler_params=pltpu.CompilerParams(
            dimension_semantics=("parallel",)),
    )(xs, *weights)
    return out[:B, :N_CLASSES]


# ----------------------------------------------------------------------------
# Host-side (one-time) parameter packing
# ----------------------------------------------------------------------------
def init_params(key):
    """Deterministic synthetic parameters with PyTorch shapes."""
    ks = jax.random.split(key, 10)
    s = 0.1
    return {
        "conv1_w": jax.random.normal(ks[0], (C1, C_IN, KS, KS), jnp.float32) * s,
        "conv1_b": jax.random.normal(ks[1], (C1,), jnp.float32) * s,
        "conv2_w": jax.random.normal(ks[2], (C2, C1, KS, KS), jnp.float32) * s,
        "conv2_b": jax.random.normal(ks[3], (C2,), jnp.float32) * s,
        "fc1_w": jax.random.normal(ks[4], (N_FC1, FC1_IN), jnp.float32) * s,
        "fc1_b": jax.random.normal(ks[5], (N_FC1,), jnp.float32) * s,
        "fc2_w": jax.random.normal(ks[6], (N_FC2, N_FC1), jnp.float32) * s,
        "fc2_b": jax.random.normal(ks[7], (N_FC2,), jnp.float32) * s,
        "fc3_w": jax.random.normal(ks[8], (N_CLASSES, N_FC2), jnp.float32) * s,
        "fc3_b": jax.random.normal(ks[9], (N_CLASSES,), jnp.float32) * s,
    }


def pack_params(p):
    """Re-layout PyTorch-shaped params into lane-aligned banded matmul operands.

    Matmul weights are stored in bf16 (f32 accumulation in-kernel); biases f32.
    """
    w1 = np.asarray(p["conv1_w"], np.float32)       # (C1, C_IN, kh, kw)
    w2 = np.asarray(p["conv2_w"], np.float32)       # (C2, C1, kh, kw)
    cb1 = np.asarray(p["conv1_b"], np.float32)
    cb2 = np.asarray(p["conv2_b"], np.float32)
    f1 = np.asarray(p["fc1_w"], np.float32)         # (100, 1600)
    f2 = np.asarray(p["fc2_w"], np.float32)
    f3 = np.asarray(p["fc3_w"], np.float32)

    # conv1 banded matrix: rows (kh, w_in*C_IN + c_in) per 128-lane block,
    # columns (w_parity, (w_out//2)*C1 + c_out) per 128-lane half.
    t1 = np.zeros((K1, N1), np.float32)
    b1 = np.zeros((1, N1), np.float32)
    for w_out in range(W1):
        half, par = divmod(w_out, 2)
        col = par * LANE + half * C1
        b1[0, col:col + C1] = cb1
        for kh in range(KS):
            for kw in range(KS):
                row = kh * LANE + (w_out + kw) * C_IN
                t1[row:row + C_IN, col:col + C1] = w1[:, :, kh, kw].T

    # conv2 banded matrix: rows (kh, w_in*C1 + c1), columns (w_out*C2 + c2).
    t2 = np.zeros((K2, N2), np.float32)
    b2 = np.zeros((1, N2), np.float32)
    for w_out in range(W2):
        col = w_out * C2
        b2[0, col:col + C2] = cb2
        for kh in range(KS):
            for kw in range(KS):
                row = kh * LANE + (w_out + kw) * C1
                t2[row:row + C1, col:col + C2] = w2[:, :, kh, kw].T

    # fc1 as an h-sliced weight bank (no in-kernel flatten):
    #   wf1[h, w*C2 + c, n] = fc1_w[n, c*100 + h*10 + w]   (PyTorch NCHW flatten)
    wf1 = np.zeros((H2, N2, LANE), np.float32)
    wf1[:, :W2 * C2, :N_FC1] = (f1.reshape(N_FC1, C2, H2, W2)
                                  .transpose(2, 3, 1, 0)
                                  .reshape(H2, W2 * C2, N_FC1))
    bf1 = np.zeros((1, LANE), np.float32)
    bf1[0, :N_FC1] = np.asarray(p["fc1_b"], np.float32)

    wf2 = np.zeros((LANE, LANE), np.float32)
    wf2[:N_FC1, :N_FC2] = f2.T
    bf2 = np.zeros((1, LANE), np.float32)
    bf2[0, :N_FC2] = np.asarray(p["fc2_b"], np.float32)

    wf3 = np.zeros((LANE, LANE), np.float32)
    wf3[:N_FC2, :N_CLASSES] = f3.T
    bf3 = np.zeros((1, LANE), np.float32)
    bf3[0, :N_CLASSES] = np.asarray(p["fc3_b"], np.float32)

    bf16 = jnp.bfloat16
    return {
        "t1": jnp.asarray(t1, bf16), "b1": jnp.asarray(b1),
        "t2": jnp.asarray(t2, bf16), "b2": jnp.asarray(b2),
        "wf1": jnp.asarray(wf1, bf16), "bf1": jnp.asarray(bf1),
        "wf2": jnp.asarray(wf2, bf16), "bf2": jnp.asarray(bf2),
        "wf3": jnp.asarray(wf3, bf16), "bf3": jnp.asarray(bf3),
    }


# ----------------------------------------------------------------------------
# Pure-jnp reference (PyTorch semantics, raw f32 params) for correctness check
# ----------------------------------------------------------------------------
def _im2col(x, k):
    h, w = x.shape[1], x.shape[2]
    oh, ow = h - k + 1, w - k + 1
    cols = [x[:, i:i + oh, j:j + ow, :] for i in range(k) for j in range(k)]
    return jnp.concatenate(cols, axis=-1)


def reference_forward(x_nchw, p):
    B = x_nchw.shape[0]
    x = jnp.transpose(x_nchw, (0, 2, 3, 1))
    w1 = p["conv1_w"].transpose(2, 3, 1, 0).reshape(KS * KS * C_IN, C1)
    y1 = jnp.maximum(_im2col(x, KS).reshape(B * H1 * W1, -1) @ w1
                     + p["conv1_b"], 0.0).reshape(B, H1, W1, C1)
    y1p = jnp.max(y1.reshape(B, HP, 2, WP, 2, C1), axis=(2, 4))
    w2 = p["conv2_w"].transpose(2, 3, 1, 0).reshape(KS * KS * C1, C2)
    y2 = jnp.maximum(_im2col(y1p, KS).reshape(B * H2 * W2, -1) @ w2
                     + p["conv2_b"], 0.0).reshape(B, H2, W2, C2)
    flat = jnp.transpose(y2, (0, 3, 1, 2)).reshape(B, FC1_IN)
    h = jnp.maximum(flat @ p["fc1_w"].T + p["fc1_b"], 0.0)
    h = jnp.maximum(h @ p["fc2_w"].T + p["fc2_b"], 0.0)
    return jax.nn.sigmoid(h @ p["fc3_w"].T + p["fc3_b"])


if __name__ == "__main__":
    key = jax.random.PRNGKey(0)
    k_param, k_x = jax.random.split(key)

    params = init_params(k_param)
    kparams = pack_params(params)

    # fc1 = Linear(16*10*10, 100) forces 26x26 spatial input.
    # bf16 matmul operands (f32 accumulation) -> tolerance loosened vs pure f32.
    for B in (2, 20):   # B=20 exercises a multi-step grid + batch padding
        x = jax.random.normal(k_x, (B, C_IN, H_IN, W_IN), jnp.float32)
        out = jax.block_until_ready(hyper_params_conv_nn_forward(x, kparams))
        assert out.shape == (B, N_CLASSES), out.shape
        ref = reference_forward(x, params)
        max_err = float(jnp.max(jnp.abs(out - ref)))
        assert jnp.allclose(out, ref, rtol=3e-2, atol=3e-2), (
            f"mismatch vs reference (B={B}), max abs err = {max_err}")

    print("KERNEL_OK")
</pallas_src>

<mosaic_0001>
module attributes {stable_mosaic.version = 11 : i64} {
  func.func @kernel(%arg0: i32, %arg1: memref<208x128xbf16, #tpu.memory_space<vmem>>, %arg2: memref<384x256xbf16, #tpu.memory_space<vmem>>, %arg3: memref<1x256xf32, #tpu.memory_space<vmem>>, %arg4: memref<384x256xbf16, #tpu.memory_space<vmem>>, %arg5: memref<1x256xf32, #tpu.memory_space<vmem>>, %arg6: memref<10x256x128xbf16, #tpu.memory_space<vmem>>, %arg7: memref<1x128xf32, #tpu.memory_space<vmem>>, %arg8: memref<128x128xbf16, #tpu.memory_space<vmem>>, %arg9: memref<1x128xf32, #tpu.memory_space<vmem>>, %arg10: memref<128x128xbf16, #tpu.memory_space<vmem>>, %arg11: memref<1x128xf32, #tpu.memory_space<vmem>>, %arg12: memref<8x128xf32, #tpu.memory_space<vmem>>) attributes {dimension_semantics = [#tpu.dimension_semantics<parallel>], iteration_bounds = array<i64: 1>, scalar_prefetch = 0 : i64, scratch_operands = 0 : i64, tpu.core_type = #tpu.core_type<tc>, window_params = [{transform_indices = @transform_0, window_bounds = array<i64: 208, 128>}, {pipeline_mode = #tpu.pipeline_mode<synchronous>, transform_indices = @transform_1, window_bounds = array<i64: 384, 256>}, {pipeline_mode = #tpu.pipeline_mode<synchronous>, transform_indices = @transform_2, window_bounds = array<i64: 1, 256>}, {pipeline_mode = #tpu.pipeline_mode<synchronous>, transform_indices = @transform_3, window_bounds = array<i64: 384, 256>}, {pipeline_mode = #tpu.pipeline_mode<synchronous>, transform_indices = @transform_4, window_bounds = array<i64: 1, 256>}, {pipeline_mode = #tpu.pipeline_mode<synchronous>, transform_indices = @transform_5, window_bounds = array<i64: 10, 256, 128>}, {pipeline_mode = #tpu.pipeline_mode<synchronous>, transform_indices = @transform_6, window_bounds = array<i64: 1, 128>}, {pipeline_mode = #tpu.pipeline_mode<synchronous>, transform_indices = @transform_7, window_bounds = array<i64: 128, 128>}, {pipeline_mode = #tpu.pipeline_mode<synchronous>, transform_indices = @transform_8, window_bounds = array<i64: 1, 128>}, {pipeline_mode = #tpu.pipeline_mode<synchronous>, transform_indices = @transform_9, window_bounds = array<i64: 128, 128>}, {pipeline_mode = #tpu.pipeline_mode<synchronous>, transform_indices = @transform_10, window_bounds = array<i64: 1, 128>}, {transform_indices = @transform_11, window_bounds = array<i64: 8, 128>}]} {
    %c0 = arith.constant 0 : index
    %c0_0 = arith.constant 0 : index
    %0 = vector.load %arg1[%c0, %c0_0] : memref<208x128xbf16, #tpu.memory_space<vmem>>, vector<208x128xbf16>
    %1 = vector.extract_strided_slice %0 {offsets = [0, 0], sizes = [96, 128], strides = [1, 1]} : vector<208x128xbf16> to vector<96x128xbf16>
    %2 = vector.extract_strided_slice %0 {offsets = [8, 0], sizes = [96, 128], strides = [1, 1]} : vector<208x128xbf16> to vector<96x128xbf16>
    %3 = vector.extract_strided_slice %0 {offsets = [104, 0], sizes = [96, 128], strides = [1, 1]} : vector<208x128xbf16> to vector<96x128xbf16>
    %4 = vector.extract_strided_slice %0 {offsets = [112, 0], sizes = [96, 128], strides = [1, 1]} : vector<208x128xbf16> to vector<96x128xbf16>
    %5 = tpu.concatenate %1, %3, %2 in 1 : vector<96x128xbf16>, vector<96x128xbf16>, vector<96x128xbf16> -> vector<96x384xbf16>
    %6 = tpu.concatenate %3, %2, %4 in 1 : vector<96x128xbf16>, vector<96x128xbf16>, vector<96x128xbf16> -> vector<96x384xbf16>
    %c0_1 = arith.constant 0 : index
    %c0_2 = arith.constant 0 : index
    %7 = vector.load %arg2[%c0_1, %c0_2] : memref<384x256xbf16, #tpu.memory_space<vmem>>, vector<384x256xbf16>
    %c0_3 = arith.constant 0 : index
    %c0_4 = arith.constant 0 : index
    %8 = vector.load %arg3[%c0_3, %c0_4] : memref<1x256xf32, #tpu.memory_space<vmem>>, vector<1x256xf32>
    %cst = arith.constant dense<0.000000e+00> : vector<96x256xf32>
    %9 = tpu.matmul %5, %7, %cst {dimension_numbers = #tpu.dot_dimension_numbers<[1], [0], [0], [1], [0, 0, 1, 1], [], []>} : vector<96x384xbf16>, vector<384x256xbf16>, vector<96x256xf32> -> vector<96x256xf32>
    %10 = vector.broadcast %8 : vector<1x256xf32> to vector<96x256xf32>
    %11 = arith.addf %9, %10 : vector<96x256xf32>
    %cst_5 = arith.constant 0.000000e+00 : f32
    %12 = vector.broadcast %cst_5 : f32 to vector<96x256xf32>
    %13 = arith.maximumf %11, %12 : vector<96x256xf32>
    %cst_6 = arith.constant dense<0.000000e+00> : vector<96x256xf32>
    %14 = tpu.matmul %6, %7, %cst_6 {dimension_numbers = #tpu.dot_dimension_numbers<[1], [0], [0], [1], [0, 0, 1, 1], [], []>} : vector<96x384xbf16>, vector<384x256xbf16>, vector<96x256xf32> -> vector<96x256xf32>
    %15 = vector.broadcast %8 : vector<1x256xf32> to vector<96x256xf32>
    %16 = arith.addf %14, %15 : vector<96x256xf32>
    %cst_7 = arith.constant 0.000000e+00 : f32
    %17 = vector.broadcast %cst_7 : f32 to vector<96x256xf32>
    %18 = arith.maximumf %16, %17 : vector<96x256xf32>
    %19 = vector.extract_strided_slice %13 {offsets = [0, 0], sizes = [96, 128], strides = [1, 1]} : vector<96x256xf32> to vector<96x128xf32>
    %20 = vector.extract_strided_slice %13 {offsets = [0, 128], sizes = [96, 128], strides = [1, 1]} : vector<96x256xf32> to vector<96x128xf32>
    %21 = arith.maximumf %19, %20 : vector<96x128xf32>
    %22 = vector.extract_strided_slice %18 {offsets = [0, 0], sizes = [96, 128], strides = [1, 1]} : vector<96x256xf32> to vector<96x128xf32>
    %23 = vector.extract_strided_slice %18 {offsets = [0, 128], sizes = [96, 128], strides = [1, 1]} : vector<96x256xf32> to vector<96x128xf32>
    %24 = arith.maximumf %22, %23 : vector<96x128xf32>
    %25 = arith.maximumf %21, %24 : vector<96x128xf32>
    %26 = arith.truncf %25 : vector<96x128xf32> to vector<96x128xbf16>
    %27 = vector.extract_strided_slice %26 {offsets = [0, 0], sizes = [80, 128], strides = [1, 1]} : vector<96x128xbf16> to vector<80x128xbf16>
    %28 = vector.extract_strided_slice %26 {offsets = [8, 0], sizes = [80, 128], strides = [1, 1]} : vector<96x128xbf16> to vector<80x128xbf16>
    %29 = vector.extract_strided_slice %26 {offsets = [16, 0], sizes = [80, 128], strides = [1, 1]} : vector<96x128xbf16> to vector<80x128xbf16>
    %30 = tpu.concatenate %27, %28, %29 in 1 : vector<80x128xbf16>, vector<80x128xbf16>, vector<80x128xbf16> -> vector<80x384xbf16>
    %c0_8 = arith.constant 0 : index
    %c0_9 = arith.constant 0 : index
    %31 = vector.load %arg4[%c0_8, %c0_9] : memref<384x256xbf16, #tpu.memory_space<vmem>>, vector<384x256xbf16>
    %cst_10 = arith.constant dense<0.000000e+00> : vector<80x256xf32>
    %32 = tpu.matmul %30, %31, %cst_10 {dimension_numbers = #tpu.dot_dimension_numbers<[1], [0], [0], [1], [0, 0, 1, 1], [], []>} : vector<80x384xbf16>, vector<384x256xbf16>, vector<80x256xf32> -> vector<80x256xf32>
    %c0_11 = arith.constant 0 : index
    %c0_12 = arith.constant 0 : index
    %33 = vector.load %arg5[%c0_11, %c0_12] : memref<1x256xf32, #tpu.memory_space<vmem>>, vector<1x256xf32>
    %34 = vector.broadcast %33 : vector<1x256xf32> to vector<80x256xf32>
    %35 = arith.addf %32, %34 : vector<80x256xf32>
    %cst_13 = arith.constant 0.000000e+00 : f32
    %36 = vector.broadcast %cst_13 : f32 to vector<80x256xf32>
    %37 = arith.maximumf %35, %36 : vector<80x256xf32>
    %38 = arith.truncf %37 : vector<80x256xf32> to vector<80x256xbf16>
    %39 = vector.extract_strided_slice %38 {offsets = [0, 0], sizes = [8, 256], strides = [1, 1]} : vector<80x256xbf16> to vector<8x256xbf16>
    %c0_14 = arith.constant 0 : index
    %c0_15 = arith.constant 0 : index
    %c0_16 = arith.constant 0 : index
    %40 = vector.load %arg6[%c0_14, %c0_15, %c0_16] : memref<10x256x128xbf16, #tpu.memory_space<vmem>>, vector<1x256x128xbf16>
    %41 = vector.shape_cast %40 : vector<1x256x128xbf16> to vector<256x128xbf16>
    %cst_17 = arith.constant dense<0.000000e+00> : vector<8x128xf32>
    %42 = tpu.matmul %39, %41, %cst_17 {dimension_numbers = #tpu.dot_dimension_numbers<[1], [0], [0], [1], [0, 0, 1, 1], [], []>} : vector<8x256xbf16>, vector<256x128xbf16>, vector<8x128xf32> -> vector<8x128xf32>
    %43 = vector.extract_strided_slice %38 {offsets = [8, 0], sizes = [8, 256], strides = [1, 1]} : vector<80x256xbf16> to vector<8x256xbf16>
    %c1 = arith.constant 1 : index
    %c0_18 = arith.constant 0 : index
    %c0_19 = arith.constant 0 : index
    %44 = vector.load %arg6[%c1, %c0_18, %c0_19] : memref<10x256x128xbf16, #tpu.memory_space<vmem>>, vector<1x256x128xbf16>
    %45 = vector.shape_cast %44 : vector<1x256x128xbf16> to vector<256x128xbf16>
    %cst_20 = arith.constant dense<0.000000e+00> : vector<8x128xf32>
    %46 = tpu.matmul %43, %45, %cst_20 {dimension_numbers = #tpu.dot_dimension_numbers<[1], [0], [0], [1], [0, 0, 1, 1], [], []>} : vector<8x256xbf16>, vector<256x128xbf16>, vector<8x128xf32> -> vector<8x128xf32>
    %47 = arith.addf %42, %46 : vector<8x128xf32>
    %48 = vector.extract_strided_slice %38 {offsets = [16, 0], sizes = [8, 256], strides = [1, 1]} : vector<80x256xbf16> to vector<8x256xbf16>
    %c2 = arith.constant 2 : index
    %c0_21 = arith.constant 0 : index
    %c0_22 = arith.constant 0 : index
    %49 = vector.load %arg6[%c2, %c0_21, %c0_22] : memref<10x256x128xbf16, #tpu.memory_space<vmem>>, vector<1x256x128xbf16>
    %50 = vector.shape_cast %49 : vector<1x256x128xbf16> to vector<256x128xbf16>
    %cst_23 = arith.constant dense<0.000000e+00> : vector<8x128xf32>
    %51 = tpu.matmul %48, %50, %cst_23 {dimension_numbers = #tpu.dot_dimension_numbers<[1], [0], [0], [1], [0, 0, 1, 1], [], []>} : vector<8x256xbf16>, vector<256x128xbf16>, vector<8x128xf32> -> vector<8x128xf32>
    %52 = arith.addf %47, %51 : vector<8x128xf32>
    %53 = vector.extract_strided_slice %38 {offsets = [24, 0], sizes = [8, 256], strides = [1, 1]} : vector<80x256xbf16> to vector<8x256xbf16>
    %c3 = arith.constant 3 : index
    %c0_24 = arith.constant 0 : index
    %c0_25 = arith.constant 0 : index
    %54 = vector.load %arg6[%c3, %c0_24, %c0_25] : memref<10x256x128xbf16, #tpu.memory_space<vmem>>, vector<1x256x128xbf16>
    %55 = vector.shape_cast %54 : vector<1x256x128xbf16> to vector<256x128xbf16>
    %cst_26 = arith.constant dense<0.000000e+00> : vector<8x128xf32>
    %56 = tpu.matmul %53, %55, %cst_26 {dimension_numbers = #tpu.dot_dimension_numbers<[1], [0], [0], [1], [0, 0, 1, 1], [], []>} : vector<8x256xbf16>, vector<256x128xbf16>, vector<8x128xf32> -> vector<8x128xf32>
    %57 = arith.addf %52, %56 : vector<8x128xf32>
    %58 = vector.extract_strided_slice %38 {offsets = [32, 0], sizes = [8, 256], strides = [1, 1]} : vector<80x256xbf16> to vector<8x256xbf16>
    %c4 = arith.constant 4 : index
    %c0_27 = arith.constant 0 : index
    %c0_28 = arith.constant 0 : index
    %59 = vector.load %arg6[%c4, %c0_27, %c0_28] : memref<10x256x128xbf16, #tpu.memory_space<vmem>>, vector<1x256x128xbf16>
    %60 = vector.shape_cast %59 : vector<1x256x128xbf16> to vector<256x128xbf16>
    %cst_29 = arith.constant dense<0.000000e+00> : vector<8x128xf32>
    %61 = tpu.matmul %58, %60, %cst_29 {dimension_numbers = #tpu.dot_dimension_numbers<[1], [0], [0], [1], [0, 0, 1, 1], [], []>} : vector<8x256xbf16>, vector<256x128xbf16>, vector<8x128xf32> -> vector<8x128xf32>
    %62 = arith.addf %57, %61 : vector<8x128xf32>
    %63 = vector.extract_strided_slice %38 {offsets = [40, 0], sizes = [8, 256], strides = [1, 1]} : vector<80x256xbf16> to vector<8x256xbf16>
    %c5 = arith.constant 5 : index
    %c0_30 = arith.constant 0 : index
    %c0_31 = arith.constant 0 : index
    %64 = vector.load %arg6[%c5, %c0_30, %c0_31] : memref<10x256x128xbf16, #tpu.memory_space<vmem>>, vector<1x256x128xbf16>
    %65 = vector.shape_cast %64 : vector<1x256x128xbf16> to vector<256x128xbf16>
    %cst_32 = arith.constant dense<0.000000e+00> : vector<8x128xf32>
    %66 = tpu.matmul %63, %65, %cst_32 {dimension_numbers = #tpu.dot_dimension_numbers<[1], [0], [0], [1], [0, 0, 1, 1], [], []>} : vector<8x256xbf16>, vector<256x128xbf16>, vector<8x128xf32> -> vector<8x128xf32>
    %67 = arith.addf %62, %66 : vector<8x128xf32>
    %68 = vector.extract_strided_slice %38 {offsets = [48, 0], sizes = [8, 256], strides = [1, 1]} : vector<80x256xbf16> to vector<8x256xbf16>
    %c6 = arith.constant 6 : index
    %c0_33 = arith.constant 0 : index
    %c0_34 = arith.constant 0 : index
    %69 = vector.load %arg6[%c6, %c0_33, %c0_34] : memref<10x256x128xbf16, #tpu.memory_space<vmem>>, vector<1x256x128xbf16>
    %70 = vector.shape_cast %69 : vector<1x256x128xbf16> to vector<256x128xbf16>
    %cst_35 = arith.constant dense<0.000000e+00> : vector<8x128xf32>
    %71 = tpu.matmul %68, %70, %cst_35 {dimension_numbers = #tpu.dot_dimension_numbers<[1], [0], [0], [1], [0, 0, 1, 1], [], []>} : vector<8x256xbf16>, vector<256x128xbf16>, vector<8x128xf32> -> vector<8x128xf32>
    %72 = arith.addf %67, %71 : vector<8x128xf32>
    %73 = vector.extract_strided_slice %38 {offsets = [56, 0], sizes = [8, 256], strides = [1, 1]} : vector<80x256xbf16> to vector<8x256xbf16>
    %c7 = arith.constant 7 : index
    %c0_36 = arith.constant 0 : index
    %c0_37 = arith.constant 0 : index
    %74 = vector.load %arg6[%c7, %c0_36, %c0_37] : memref<10x256x128xbf16, #tpu.memory_space<vmem>>, vector<1x256x128xbf16>
    %75 = vector.shape_cast %74 : vector<1x256x128xbf16> to vector<256x128xbf16>
    %cst_38 = arith.constant dense<0.000000e+00> : vector<8x128xf32>
    %76 = tpu.matmul %73, %75, %cst_38 {dimension_numbers = #tpu.dot_dimension_numbers<[1], [0], [0], [1], [0, 0, 1, 1], [], []>} : vector<8x256xbf16>, vector<256x128xbf16>, vector<8x128xf32> -> vector<8x128xf32>
    %77 = arith.addf %72, %76 : vector<8x128xf32>
    %78 = vector.extract_strided_slice %38 {offsets = [64, 0], sizes = [8, 256], strides = [1, 1]} : vector<80x256xbf16> to vector<8x256xbf16>
    %c8 = arith.constant 8 : index
    %c0_39 = arith.constant 0 : index
    %c0_40 = arith.constant 0 : index
    %79 = vector.load %arg6[%c8, %c0_39, %c0_40] : memref<10x256x128xbf16, #tpu.memory_space<vmem>>, vector<1x256x128xbf16>
    %80 = vector.shape_cast %79 : vector<1x256x128xbf16> to vector<256x128xbf16>
    %cst_41 = arith.constant dense<0.000000e+00> : vector<8x128xf32>
    %81 = tpu.matmul %78, %80, %cst_41 {dimension_numbers = #tpu.dot_dimension_numbers<[1], [0], [0], [1], [0, 0, 1, 1], [], []>} : vector<8x256xbf16>, vector<256x128xbf16>, vector<8x128xf32> -> vector<8x128xf32>
    %82 = arith.addf %77, %81 : vector<8x128xf32>
    %83 = vector.extract_strided_slice %38 {offsets = [72, 0], sizes = [8, 256], strides = [1, 1]} : vector<80x256xbf16> to vector<8x256xbf16>
    %c9 = arith.constant 9 : index
    %c0_42 = arith.constant 0 : index
    %c0_43 = arith.constant 0 : index
    %84 = vector.load %arg6[%c9, %c0_42, %c0_43] : memref<10x256x128xbf16, #tpu.memory_space<vmem>>, vector<1x256x128xbf16>
    %85 = vector.shape_cast %84 : vector<1x256x128xbf16> to vector<256x128xbf16>
    %cst_44 = arith.constant dense<0.000000e+00> : vector<8x128xf32>
    %86 = tpu.matmul %83, %85, %cst_44 {dimension_numbers = #tpu.dot_dimension_numbers<[1], [0], [0], [1], [0, 0, 1, 1], [], []>} : vector<8x256xbf16>, vector<256x128xbf16>, vector<8x128xf32> -> vector<8x128xf32>
    %87 = arith.addf %82, %86 : vector<8x128xf32>
    %c0_45 = arith.constant 0 : index
    %c0_46 = arith.constant 0 : index
    %88 = vector.load %arg7[%c0_45, %c0_46] : memref<1x128xf32, #tpu.memory_space<vmem>>, vector<1x128xf32>
    %89 = vector.broadcast %88 : vector<1x128xf32> to vector<8x128xf32>
    %90 = arith.addf %87, %89 : vector<8x128xf32>
    %cst_47 = arith.constant 0.000000e+00 : f32
    %91 = vector.broadcast %cst_47 : f32 to vector<8x128xf32>
    %92 = arith.maximumf %90, %91 : vector<8x128xf32>
    %93 = arith.truncf %92 : vector<8x128xf32> to vector<8x128xbf16>
    %c0_48 = arith.constant 0 : index
    %c0_49 = arith.constant 0 : index
    %94 = vector.load %arg8[%c0_48, %c0_49] : memref<128x128xbf16, #tpu.memory_space<vmem>>, vector<128x128xbf16>
    %cst_50 = arith.constant dense<0.000000e+00> : vector<8x128xf32>
    %95 = tpu.matmul %93, %94, %cst_50 {dimension_numbers = #tpu.dot_dimension_numbers<[1], [0], [0], [1], [0, 0, 1, 1], [], []>} : vector<8x128xbf16>, vector<128x128xbf16>, vector<8x128xf32> -> vector<8x128xf32>
    %c0_51 = arith.constant 0 : index
    %c0_52 = arith.constant 0 : index
    %96 = vector.load %arg9[%c0_51, %c0_52] : memref<1x128xf32, #tpu.memory_space<vmem>>, vector<1x128xf32>
    %97 = vector.broadcast %96 : vector<1x128xf32> to vector<8x128xf32>
    %98 = arith.addf %95, %97 : vector<8x128xf32>
    %cst_53 = arith.constant 0.000000e+00 : f32
    %99 = vector.broadcast %cst_53 : f32 to vector<8x128xf32>
    %100 = arith.maximumf %98, %99 : vector<8x128xf32>
    %101 = arith.truncf %100 : vector<8x128xf32> to vector<8x128xbf16>
    %c0_54 = arith.constant 0 : index
    %c0_55 = arith.constant 0 : index
    %102 = vector.load %arg10[%c0_54, %c0_55] : memref<128x128xbf16, #tpu.memory_space<vmem>>, vector<128x128xbf16>
    %cst_56 = arith.constant dense<0.000000e+00> : vector<8x128xf32>
    %103 = tpu.matmul %101, %102, %cst_56 {dimension_numbers = #tpu.dot_dimension_numbers<[1], [0], [0], [1], [0, 0, 1, 1], [], []>} : vector<8x128xbf16>, vector<128x128xbf16>, vector<8x128xf32> -> vector<8x128xf32>
    %c0_57 = arith.constant 0 : index
    %c0_58 = arith.constant 0 : index
    %104 = vector.load %arg11[%c0_57, %c0_58] : memref<1x128xf32, #tpu.memory_space<vmem>>, vector<1x128xf32>
    %105 = vector.broadcast %104 : vector<1x128xf32> to vector<8x128xf32>
    %106 = arith.addf %103, %105 : vector<8x128xf32>
    %107 = arith.negf %106 : vector<8x128xf32>
    %108 = math.exp %107 : vector<8x128xf32>
    %cst_59 = arith.constant 1.000000e+00 : f32
    %109 = vector.broadcast %cst_59 : f32 to vector<8x128xf32>
    %110 = arith.addf %109, %108 : vector<8x128xf32>
    %111 = arith.divf %109, %110 : vector<8x128xf32>
    %c0_60 = arith.constant 0 : index
    %c0_61 = arith.constant 0 : index
    %112 = vector.load %arg12[%c0_60, %c0_61] : memref<8x128xf32, #tpu.memory_space<vmem>>, vector<8x128xf32>
    tpu.vector_store %arg12[%c0_60, %c0_61], %111 {strides = array<i32>} : memref<8x128xf32, #tpu.memory_space<vmem>>, vector<8x128xf32>,
    return
  }
  func.func @transform_0(%arg0: i32) -> (i32, i32) {
    %c0_i32 = arith.constant 0 : i32
    %c0_i32_0 = arith.constant 0 : i32
    return %arg0, %c0_i32 : i32, i32
  }
  func.func @transform_1(%arg0: i32) -> (i32, i32) {
    %c0_i32 = arith.constant 0 : i32
    %c0_i32_0 = arith.constant 0 : i32
    %c0_i32_1 = arith.constant 0 : i32
    return %c0_i32, %c0_i32_0 : i32, i32
  }
  func.func @transform_2(%arg0: i32) -> (i32, i32) {
    %c0_i32 = arith.constant 0 : i32
    %c0_i32_0 = arith.constant 0 : i32
    %c0_i32_1 = arith.constant 0 : i32
    return %c0_i32, %c0_i32_0 : i32, i32
  }
  func.func @transform_3(%arg0: i32) -> (i32, i32) {
    %c0_i32 = arith.constant 0 : i32
    %c0_i32_0 = arith.constant 0 : i32
    %c0_i32_1 = arith.constant 0 : i32
    return %c0_i32, %c0_i32_0 : i32, i32
  }
  func.func @transform_4(%arg0: i32) -> (i32, i32) {
    %c0_i32 = arith.constant 0 : i32
    %c0_i32_0 = arith.constant 0 : i32
    %c0_i32_1 = arith.constant 0 : i32
    return %c0_i32, %c0_i32_0 : i32, i32
  }
  func.func @transform_5(%arg0: i32) -> (i32, i32, i32) {
    %c0_i32 = arith.constant 0 : i32
    %c0_i32_0 = arith.constant 0 : i32
    %c0_i32_1 = arith.constant 0 : i32
    %c0_i32_2 = arith.constant 0 : i32
    return %c0_i32, %c0_i32_0, %c0_i32_1 : i32, i32, i32
  }
  func.func @transform_6(%arg0: i32) -> (i32, i32) {
    %c0_i32 = arith.constant 0 : i32
    %c0_i32_0 = arith.constant 0 : i32
    %c0_i32_1 = arith.constant 0 : i32
    return %c0_i32, %c0_i32_0 : i32, i32
  }
  func.func @transform_7(%arg0: i32) -> (i32, i32) {
    %c0_i32 = arith.constant 0 : i32
    %c0_i32_0 = arith.constant 0 : i32
    %c0_i32_1 = arith.constant 0 : i32
    return %c0_i32, %c0_i32_0 : i32, i32
  }
  func.func @transform_8(%arg0: i32) -> (i32, i32) {
    %c0_i32 = arith.constant 0 : i32
    %c0_i32_0 = arith.constant 0 : i32
    %c0_i32_1 = arith.constant 0 : i32
    return %c0_i32, %c0_i32_0 : i32, i32
  }
  func.func @transform_9(%arg0: i32) -> (i32, i32) {
    %c0_i32 = arith.constant 0 : i32
    %c0_i32_0 = arith.constant 0 : i32
    %c0_i32_1 = arith.constant 0 : i32
    return %c0_i32, %c0_i32_0 : i32, i32
  }
  func.func @transform_10(%arg0: i32) -> (i32, i32) {
    %c0_i32 = arith.constant 0 : i32
    %c0_i32_0 = arith.constant 0 : i32
    %c0_i32_1 = arith.constant 0 : i32
    return %c0_i32, %c0_i32_0 : i32, i32
  }
  func.func @transform_11(%arg0: i32) -> (i32, i32) {
    %c0_i32 = arith.constant 0 : i32
    %c0_i32_0 = arith.constant 0 : i32
    return %arg0, %c0_i32 : i32, i32
  }
}

</mosaic_0001>

<llo_original>
// kernel: hyper_params_conv_nn_forward.1
$region0: #{hyper_params_conv_nn_forward.1}
  #allocation0 [shape = 'u32[]', space=smem, size = 0x4, offset = 0x4, fixed_abs, tag = 'smem constant byte address 0x4 - core index']
  #allocation1 [shape = 'u32[72,128]{1,0:T(1,128)}', space=vmem, size = 0x9000, scoped, tag = 'internal scratch']
  %s0 = inlined_call_operand.vmem [shape: bf16[208,128], index: 0, kind: input, shape index: {}]
  %s1 = inlined_call_operand.vmem [shape: bf16[384,256], index: 1, kind: input, shape index: {}]
  %s2 = inlined_call_operand.vmem [shape: f32[1,256], index: 2, kind: input, shape index: {}]
  %s3 = inlined_call_operand.vmem [shape: bf16[384,256], index: 3, kind: input, shape index: {}]
  %s4 = inlined_call_operand.vmem [shape: f32[1,256], index: 4, kind: input, shape index: {}]
  %s5 = inlined_call_operand.vmem [shape: bf16[10,256,128], index: 5, kind: input, shape index: {}]
  %s6 = inlined_call_operand.vmem [shape: f32[1,128], index: 6, kind: input, shape index: {}]
  %s7 = inlined_call_operand.vmem [shape: bf16[128,128], index: 7, kind: input, shape index: {}]
  %s8 = inlined_call_operand.vmem [shape: f32[1,128], index: 8, kind: input, shape index: {}]
  %s9 = inlined_call_operand.vmem [shape: bf16[128,128], index: 9, kind: input, shape index: {}]
  %s10 = inlined_call_operand.vmem [shape: f32[1,128], index: 10, kind: input, shape index: {}]
  %s11 = inlined_call_operand.vmem [shape: f32[8,128], index: 11, kind: output, shape index: {}]
  %s12 = sld [smem:[#allocation0]]
  $region54: #{hyper_params_conv_nn_forward.1} parent=0
    _
  %s14 = ssub.s32 1, %s12
  %s15 = scalar_select 0, %s14, %s12
  // Predicated region
  $region2: #{hyper_params_conv_nn_forward.1} parent=0 // pred_check
    _
  $region3: #{hyper_params_conv_nn_forward.1} parent=0 // pred_check_branch
    %17 = sbr.rel (0) target = $region5
  $region4: #{hyper_params_conv_nn_forward.1} parent=0 // pred_region
    _
  $region5: #{hyper_params_conv_nn_forward.1} parent=0 // pred_fallthru
    _
  // Predicated region
  $region6: #{hyper_params_conv_nn_forward.1} parent=0 // pred_check
    _
  $region7: #{hyper_params_conv_nn_forward.1} parent=0 // pred_check_branch
    %19 = sbr.rel (0) target = $region9
  $region8: #{hyper_params_conv_nn_forward.1} parent=0 // pred_region
    _
  $region9: #{hyper_params_conv_nn_forward.1} parent=0 // pred_fallthru
    _
  // Predicated region
  $region10: #{hyper_params_conv_nn_forward.1} parent=0 // pred_check
    _
  $region11: #{hyper_params_conv_nn_forward.1} parent=0 // pred_check_branch
    %21 = sbr.rel (0) target = $region13
  $region12: #{hyper_params_conv_nn_forward.1} parent=0 // pred_region
    _
  $region13: #{hyper_params_conv_nn_forward.1} parent=0 // pred_fallthru
    _
  // Predicated region
  $region14: #{hyper_params_conv_nn_forward.1} parent=0 // pred_check
    _
  $region15: #{hyper_params_conv_nn_forward.1} parent=0 // pred_check_branch
    %23 = sbr.rel (0) target = $region17
  $region16: #{hyper_params_conv_nn_forward.1} parent=0 // pred_region
    _
  $region17: #{hyper_params_conv_nn_forward.1} parent=0 // pred_fallthru
    _
  // Predicated region
  $region18: #{hyper_params_conv_nn_forward.1} parent=0 // pred_check
    _
  $region19: #{hyper_params_conv_nn_forward.1} parent=0 // pred_check_branch
    %25 = sbr.rel (0) target = $region21
  $region20: #{hyper_params_conv_nn_forward.1} parent=0 // pred_region
    _
  $region21: #{hyper_params_conv_nn_forward.1} parent=0 // pred_fallthru
    _
  // Predicated region
  $region22: #{hyper_params_conv_nn_forward.1} parent=0 // pred_check
    _
  $region23: #{hyper_params_conv_nn_forward.1} parent=0 // pred_check_branch
    %27 = sbr.rel (0) target = $region25
  $region24: #{hyper_params_conv_nn_forward.1} parent=0 // pred_region
    _
  $region25: #{hyper_params_conv_nn_forward.1} parent=0 // pred_fallthru
    _
  // Predicated region
  $region26: #{hyper_params_conv_nn_forward.1} parent=0 // pred_check
    _
  $region27: #{hyper_params_conv_nn_forward.1} parent=0 // pred_check_branch
    %29 = sbr.rel (0) target = $region29
  $region28: #{hyper_params_conv_nn_forward.1} parent=0 // pred_region
    _
  $region29: #{hyper_params_conv_nn_forward.1} parent=0 // pred_fallthru
    _
  // Predicated region
  $region30: #{hyper_params_conv_nn_forward.1} parent=0 // pred_check
    _
  $region31: #{hyper_params_conv_nn_forward.1} parent=0 // pred_check_branch
    %31 = sbr.rel (0) target = $region33
  $region32: #{hyper_params_conv_nn_forward.1} parent=0 // pred_region
    _
  $region33: #{hyper_params_conv_nn_forward.1} parent=0 // pred_fallthru
    _
  // Predicated region
  $region34: #{hyper_params_conv_nn_forward.1} parent=0 // pred_check
    _
  $region35: #{hyper_params_conv_nn_forward.1} parent=0 // pred_check_branch
    %33 = sbr.rel (0) target = $region37
  $region36: #{hyper_params_conv_nn_forward.1} parent=0 // pred_region
    _
  $region37: #{hyper_params_conv_nn_forward.1} parent=0 // pred_fallthru
    _
  // Predicated region
  $region38: #{hyper_params_conv_nn_forward.1} parent=0 // pred_check
    _
  $region39: #{hyper_params_conv_nn_forward.1} parent=0 // pred_check_branch
    %35 = sbr.rel (0) target = $region41
  $region40: #{hyper_params_conv_nn_forward.1} parent=0 // pred_region
    _
  $region41: #{hyper_params_conv_nn_forward.1} parent=0 // pred_fallthru
    _
  // Predicated region
  $region42: #{hyper_params_conv_nn_forward.1} parent=0 // pred_check
    _
  $region43: #{hyper_params_conv_nn_forward.1} parent=0 // pred_check_branch
    %37 = sbr.rel (0) target = $region45
  $region44: #{hyper_params_conv_nn_forward.1} parent=0 // pred_region
    _
  $region45: #{hyper_params_conv_nn_forward.1} parent=0 // pred_fallthru
    _
  %v38 = vld [vmem:[%s0] sm:$0xf]
  %v39 = vld [vmem:[%s0 + $0x4] sm:$0xf]
  %v40 = vld [vmem:[%s0 + $0x8] sm:$0xf]
  %v41 = vld [vmem:[%s0 + $0xc] sm:$0xf]
  %v42 = vld [vmem:[%s0 + $0x10] sm:$0xf]
  %v43 = vld [vmem:[%s0 + $0x14] sm:$0xf]
  %v44 = vld [vmem:[%s0 + $0x18] sm:$0xf]
  %v45 = vld [vmem:[%s0 + $0x1c] sm:$0xf]
  %v46 = vld [vmem:[%s0 + $0x20] sm:$0xf]
  %v47 = vld [vmem:[%s0 + $0x24] sm:$0xf]
  %v48 = vld [vmem:[%s0 + $0x28] sm:$0xf]
  %v49 = vld [vmem:[%s0 + $0x2c] sm:$0xf]
  %v50 = vld [vmem:[%s0 + $0x30] sm:$0xf]
  %v51 = vld [vmem:[%s0 + $0x34] sm:$0xf]
  %v52 = vld [vmem:[%s0 + $0x38] sm:$0xf]
  %v53 = vld [vmem:[%s0 + $0x3c] sm:$0xf]
  %v54 = vld [vmem:[%s0 + $0x40] sm:$0xf]
  %v55 = vld [vmem:[%s0 + $0x44] sm:$0xf]
  %v56 = vld [vmem:[%s0 + $0x48] sm:$0xf]
  %v57 = vld [vmem:[%s0 + $0x4c] sm:$0xf]
  %v58 = vld [vmem:[%s0 + $0x50] sm:$0xf]
  %v59 = vld [vmem:[%s0 + $0x54] sm:$0xf]
  %v60 = vld [vmem:[%s0 + $0x58] sm:$0xf]
  %v61 = vld [vmem:[%s0 + $0x5c] sm:$0xf]
  %v62 = vld [vmem:[%s0 + $0x60] sm:$0xf]
  %v63 = vld [vmem:[%s0 + $0x64] sm:$0xf]
  %v76 = vunpack.c.l.b16 %v38
  %v77 = vunpack.c.l.b16 %v39
  %v78 = vunpack.c.l.b16 %v40
  %v79 = vunpack.c.l.b16 %v41
  %v80 = vunpack.c.l.b16 %v42
  %v81 = vunpack.c.l.b16 %v43
  %v82 = vunpack.c.l.b16 %v44
  %v83 = vunpack.c.l.b16 %v45
  %v84 = vunpack.c.l.b16 %v46
  %v85 = vunpack.c.l.b16 %v47
  %v86 = vunpack.c.l.b16 %v48
  %v87 = vunpack.c.l.b16 %v49
  %v88 = vpack.c.b16 %v77, %v76
  %v89 = vpack.c.b16 %v79, %v78
  %v90 = vpack.c.b16 %v81, %v80
  %v91 = vpack.c.b16 %v83, %v82
  %v92 = vpack.c.b16 %v85, %v84
  %v93 = vpack.c.b16 %v87, %v86
  %v112 = vunpack.c.l.b16 %v51
  %v113 = vunpack.c.l.b16 %v52
  %v114 = vunpack.c.l.b16 %v53
  %v115 = vunpack.c.l.b16 %v54
  %v116 = vunpack.c.l.b16 %v55
  %v117 = vunpack.c.l.b16 %v56
  %v118 = vunpack.c.l.b16 %v57
  %v119 = vunpack.c.l.b16 %v58
  %v120 = vunpack.c.l.b16 %v59
  %v121 = vunpack.c.l.b16 %v60
  %v122 = vunpack.c.l.b16 %v61
  %v123 = vunpack.c.l.b16 %v62
  %v124 = vpack.c.b16 %v113, %v112
  %v125 = vpack.c.b16 %v115, %v114
  %v126 = vpack.c.b16 %v117, %v116
  %v127 = vpack.c.b16 %v119, %v118
  %v128 = vpack.c.b16 %v121, %v120
  %v129 = vpack.c.b16 %v123, %v122
  %v137 = vunpack.c.l.b16 %v50
  %v138 = vpack.c.b16 %v78, %v77
  %v139 = vpack.c.b16 %v80, %v79
  %v140 = vpack.c.b16 %v82, %v81
  %v141 = vpack.c.b16 %v84, %v83
  %v142 = vpack.c.b16 %v86, %v85
  %v143 = vpack.c.b16 %v137, %v87
  %v151 = vunpack.c.l.b16 %v63
  %v152 = vpack.c.b16 %v114, %v113
  %v153 = vpack.c.b16 %v116, %v115
  %v154 = vpack.c.b16 %v118, %v117
  %v155 = vpack.c.b16 %v120, %v119
  %v156 = vpack.c.b16 %v122, %v121
  %v157 = vpack.c.b16 %v151, %v123
  %v164 = vld [vmem:[%s1] sm:$0xff]
  %v165 = vld [vmem:[%s1 + $0x8] sm:$0xff]
  %v166 = vld [vmem:[%s1 + $0x10] sm:$0xff]
  %v167 = vld [vmem:[%s1 + $0x18] sm:$0xff]
  %v168 = vld [vmem:[%s1 + $0x20] sm:$0xff]
  %v169 = vld [vmem:[%s1 + $0x28] sm:$0xff]
  %v170 = vld [vmem:[%s1 + $0x30] sm:$0xff]
  %v171 = vld [vmem:[%s1 + $0x38] sm:$0xff]
  %v172 = vld [vmem:[%s1 + $0x40] sm:$0xff]
  %v173 = vld [vmem:[%s1 + $0x48] sm:$0xff]
  %v174 = vld [vmem:[%s1 + $0x50] sm:$0xff]
  %v175 = vld [vmem:[%s1 + $0x58] sm:$0xff]
  %v176 = vld [vmem:[%s1 + $0x60] sm:$0xff]
  %v177 = vld [vmem:[%s1 + $0x68] sm:$0xff]
  %v178 = vld [vmem:[%s1 + $0x70] sm:$0xff]
  %v179 = vld [vmem:[%s1 + $0x78] sm:$0xff]
  %v180 = vld [vmem:[%s1 + $0x80] sm:$0xff]
  %v181 = vld [vmem:[%s1 + $0x88] sm:$0xff]
  %v182 = vld [vmem:[%s1 + $0x90] sm:$0xff]
  %v183 = vld [vmem:[%s1 + $0x98] sm:$0xff]
  %v184 = vld [vmem:[%s1 + $0xa0] sm:$0xff]
  %v185 = vld [vmem:[%s1 + $0xa8] sm:$0xff]
  %v186 = vld [vmem:[%s1 + $0xb0] sm:$0xff]
  %v187 = vld [vmem:[%s1 + $0xb8] sm:$0xff]
  %v188 = vld [vmem:[%s1 + $0xc0] sm:$0xff]
  %v189 = vld [vmem:[%s1 + $0xc8] sm:$0xff]
  %v190 = vld [vmem:[%s1 + $0xd0] sm:$0xff]
  %v191 = vld [vmem:[%s1 + $0xd8] sm:$0xff]
  %v192 = vld [vmem:[%s1 + $0xe0] sm:$0xff]
  %v193 = vld [vmem:[%s1 + $0xe8] sm:$0xff]
  %v194 = vld [vmem:[%s1 + $0xf0] sm:$0xff]
  %v195 = vld [vmem:[%s1 + $0xf8] sm:$0xff]
  %v196 = vld [vmem:[%s1 + $0x100] sm:$0xff]
  %v197 = vld [vmem:[%s1 + $0x108] sm:$0xff]
  %v198 = vld [vmem:[%s1 + $0x110] sm:$0xff]
  %v199 = vld [vmem:[%s1 + $0x118] sm:$0xff]
  %v200 = vld [vmem:[%s1 + $0x120] sm:$0xff]
  %v201 = vld [vmem:[%s1 + $0x128] sm:$0xff]
  %v202 = vld [vmem:[%s1 + $0x130] sm:$0xff]
  %v203 = vld [vmem:[%s1 + $0x138] sm:$0xff]
  %v204 = vld [vmem:[%s1 + $0x140] sm:$0xff]
  %v205 = vld [vmem:[%s1 + $0x148] sm:$0xff]
  %v206 = vld [vmem:[%s1 + $0x150] sm:$0xff]
  %v207 = vld [vmem:[%s1 + $0x158] sm:$0xff]
  %v208 = vld [vmem:[%s1 + $0x160] sm:$0xff]
  %v209 = vld [vmem:[%s1 + $0x168] sm:$0xff]
  %v210 = vld [vmem:[%s1 + $0x170] sm:$0xff]
  %v211 = vld [vmem:[%s1 + $0x178] sm:$0xff]
  %v212 = vld [vmem:[%s2] sm:$0x3]
  %v214 = vperm.slane %v212, 0
  %v215 = vperm.slane %v212, 1
  %v266 = vunpack.c.l.b16 %v164
  %v267 = vunpack.c.h.b16 %v164
  %v268 = vunpack.c.l.b16 %v165
  %v269 = vunpack.c.h.b16 %v165
  %v270 = vunpack.c.l.b16 %v166
  %v271 = vunpack.c.h.b16 %v166
  %v272 = vunpack.c.l.b16 %v167
  %v273 = vunpack.c.h.b16 %v167
  %v274 = vunpack.c.l.b16 %v168
  %v275 = vunpack.c.h.b16 %v168
  %v276 = vunpack.c.l.b16 %v169
  %v277 = vunpack.c.h.b16 %v169
  %v278 = vunpack.c.l.b16 %v170
  %v279 = vunpack.c.h.b16 %v170
  %v280 = vunpack.c.l.b16 %v171
  %v281 = vunpack.c.h.b16 %v171
  %v282 = vunpack.c.l.b16 %v172
  %v283 = vunpack.c.h.b16 %v172
  %v284 = vunpack.c.l.b16 %v173
  %v285 = vunpack.c.h.b16 %v173
  %v286 = vunpack.c.l.b16 %v174
  %v287 = vunpack.c.h.b16 %v174
  %v288 = vunpack.c.l.b16 %v175
  %v289 = vunpack.c.h.b16 %v175
  %v290 = vunpack.c.l.b16 %v176
  %v291 = vunpack.c.h.b16 %v176
  %v292 = vunpack.c.l.b16 %v177
  %v293 = vunpack.c.h.b16 %v177
  %v294 = vunpack.c.l.b16 %v178
  %v295 = vunpack.c.h.b16 %v178
  %v296 = vunpack.c.l.b16 %v179
  %v297 = vunpack.c.h.b16 %v179
  %v298 = vunpack.c.l.b16 %v180
  %v299 = vunpack.c.h.b16 %v180
  %v300 = vunpack.c.l.b16 %v181
  %v301 = vunpack.c.h.b16 %v181
  %v302 = vunpack.c.l.b16 %v182
  %v303 = vunpack.c.h.b16 %v182
  %v304 = vunpack.c.l.b16 %v183
  %v305 = vunpack.c.h.b16 %v183
  %v306 = vunpack.c.l.b16 %v184
  %v307 = vunpack.c.h.b16 %v184
  %v308 = vunpack.c.l.b16 %v185
  %v309 = vunpack.c.h.b16 %v185
  %v310 = vunpack.c.l.b16 %v186
  %v311 = vunpack.c.h.b16 %v186
  %v312 = vunpack.c.l.b16 %v187
  %v313 = vunpack.c.h.b16 %v187
  %v314 = vunpack.c.l.b16 %v188
  %v315 = vunpack.c.h.b16 %v188
  %v316 = vunpack.c.l.b16 %v189
  %v317 = vunpack.c.h.b16 %v189
  %v318 = vunpack.c.l.b16 %v190
  %v319 = vunpack.c.h.b16 %v190
  %v320 = vunpack.c.l.b16 %v191
  %v321 = vunpack.c.h.b16 %v191
  %v322 = vunpack.c.l.b16 %v192
  %v323 = vunpack.c.h.b16 %v192
  %v324 = vunpack.c.l.b16 %v193
  %v325 = vunpack.c.h.b16 %v193
  %v326 = vunpack.c.l.b16 %v194
  %v327 = vunpack.c.h.b16 %v194
  %v328 = vunpack.c.l.b16 %v195
  %v329 = vunpack.c.h.b16 %v195
  %v330 = vunpack.c.l.b16 %v196
  %v331 = vunpack.c.h.b16 %v196
  %v332 = vunpack.c.l.b16 %v197
  %v333 = vunpack.c.h.b16 %v197
  %v334 = vunpack.c.l.b16 %v198
  %v335 = vunpack.c.h.b16 %v198
  %v336 = vunpack.c.l.b16 %v199
  %v337 = vunpack.c.h.b16 %v199
  %v338 = vunpack.c.l.b16 %v200
  %v339 = vunpack.c.h.b16 %v200
  %v340 = vunpack.c.l.b16 %v201
  %v341 = vunpack.c.h.b16 %v201
  %v342 = vunpack.c.l.b16 %v202
  %v343 = vunpack.c.h.b16 %v202
  %v344 = vunpack.c.l.b16 %v203
  %v345 = vunpack.c.h.b16 %v203
  %v346 = vunpack.c.l.b16 %v204
  %v347 = vunpack.c.h.b16 %v204
  %v348 = vunpack.c.l.b16 %v205
  %v349 = vunpack.c.h.b16 %v205
  %v350 = vunpack.c.l.b16 %v206
  %v351 = vunpack.c.h.b16 %v206
  %v352 = vunpack.c.l.b16 %v207
  %v353 = vunpack.c.h.b16 %v207
  %v354 = vunpack.c.l.b16 %v208
  %v355 = vunpack.c.h.b16 %v208
  %v356 = vunpack.c.l.b16 %v209
  %v357 = vunpack.c.h.b16 %v209
  %v358 = vunpack.c.l.b16 %v210
  %v359 = vunpack.c.h.b16 %v210
  %v360 = vunpack.c.l.b16 %v211
  %v361 = vunpack.c.h.b16 %v211
  %v362 = vpack.c.b16 %v268, %v266
  %v363 = vpack.c.b16 %v269, %v267
  %v364 = vpack.c.b16 %v272, %v270
  %v365 = vpack.c.b16 %v273, %v271
  %v366 = vpack.c.b16 %v276, %v274
  %v367 = vpack.c.b16 %v277, %v275
  %v368 = vpack.c.b16 %v280, %v278
  %v369 = vpack.c.b16 %v281, %v279
  %v370 = vpack.c.b16 %v284, %v282
  %v371 = vpack.c.b16 %v285, %v283
  %v372 = vpack.c.b16 %v288, %v286
  %v373 = vpack.c.b16 %v289, %v287
  %v374 = vpack.c.b16 %v292, %v290
  %v375 = vpack.c.b16 %v293, %v291
  %v376 = vpack.c.b16 %v296, %v294
  %v377 = vpack.c.b16 %v297, %v295
  %v378 = vpack.c.b16 %v300, %v298
  %v379 = vpack.c.b16 %v301, %v299
  %v380 = vpack.c.b16 %v304, %v302
  %v381 = vpack.c.b16 %v305, %v303
  %v382 = vpack.c.b16 %v308, %v306
  %v383 = vpack.c.b16 %v309, %v307
  %v384 = vpack.c.b16 %v312, %v310
  %v385 = vpack.c.b16 %v313, %v311
  %v386 = vpack.c.b16 %v316, %v314
  %v387 = vpack.c.b16 %v317, %v315
  %v388 = vpack.c.b16 %v320, %v318
  %v389 = vpack.c.b16 %v321, %v319
  %v390 = vpack.c.b16 %v324, %v322
  %v391 = vpack.c.b16 %v325, %v323
  %v392 = vpack.c.b16 %v328, %v326
  %v393 = vpack.c.b16 %v329, %v327
  %v394 = vpack.c.b16 %v332, %v330
  %v395 = vpack.c.b16 %v333, %v331
  %v396 = vpack.c.b16 %v336, %v334
  %v397 = vpack.c.b16 %v337, %v335
  %v398 = vpack.c.b16 %v340, %v338
  %v399 = vpack.c.b16 %v341, %v339
  %v400 = vpack.c.b16 %v344, %v342
  %v401 = vpack.c.b16 %v345, %v343
  %v402 = vpack.c.b16 %v348, %v346
  %v403 = vpack.c.b16 %v349, %v347
  %v404 = vpack.c.b16 %v352, %v350
  %v405 = vpack.c.b16 %v353, %v351
  %v406 = vpack.c.b16 %v356, %v354
  %v407 = vpack.c.b16 %v357, %v355
  %v408 = vpack.c.b16 %v360, %v358
  %v409 = vpack.c.b16 %v361, %v359
  %458 = vmatpush.bf16.msra.mxu0 %v376
  %459 = vmatpush.bf16.msra.mxu0 %v374
  %460 = vmatpush.bf16.msra.mxu0 %v372
  %461 = vmatpush.bf16.msra.mxu0 %v370
  %462 = vmatpush.bf16.msra.mxu0 %v368
  %463 = vmatpush.bf16.msra.mxu0 %v366
  %464 = vmatpush.bf16.msra.mxu0 %v364
  %465 = vmatpush.bf16.msra.mxu0 %v362
  %466 = vmatmul.bf16.gmra.mxu0 %v88
  %v467 = vpop.f32.mrf.mxu0
  %v468 = vadd.f32 %v214, %v467
  %v469 = vpop.f32.mrf.mxu0
  %v470 = vadd.f32 %v214, %v469
  %471 = vmatmul.bf16.gmra.mxu0 %v89
  %v472 = vpop.f32.mrf.mxu0
  %v473 = vadd.f32 %v214, %v472
  %v474 = vpop.f32.mrf.mxu0
  %v475 = vadd.f32 %v214, %v474
  %476 = vmatmul.bf16.gmra.mxu0 %v90
  %v477 = vpop.f32.mrf.mxu0
  %v478 = vadd.f32 %v214, %v477
  %v479 = vpop.f32.mrf.mxu0
  %v480 = vadd.f32 %v214, %v479
  %481 = vmatmul.bf16.gmra.mxu0 %v91
  %v482 = vpop.f32.mrf.mxu0
  %v483 = vadd.f32 %v214, %v482
  %v484 = vpop.f32.mrf.mxu0
  %v485 = vadd.f32 %v214, %v484
  %486 = vmatmul.bf16.gmra.mxu0 %v92
  %v487 = vpop.f32.mrf.mxu0
  %v488 = vadd.f32 %v214, %v487
  %v489 = vpop.f32.mrf.mxu0
  %v490 = vadd.f32 %v214, %v489
  %491 = vmatmul.bf16.gmra.mxu0 %v93
  %v492 = vpop.f32.mrf.mxu0
  %v493 = vadd.f32 %v214, %v492
  %v494 = vpop.f32.mrf.mxu0
  %v495 = vadd.f32 %v214, %v494
  %496 = vdwg.mxu0
  %497 = vmatpush.bf16.msra.mxu0 %v392
  %498 = vmatpush.bf16.msra.mxu0 %v390
  %499 = vmatpush.bf16.msra.mxu0 %v388
  %500 = vmatpush.bf16.msra.mxu0 %v386
  %501 = vmatpush.bf16.msra.mxu0 %v384
  %502 = vmatpush.bf16.msra.mxu0 %v382
  %503 = vmatpush.bf16.msra.mxu0 %v380
  %504 = vmatpush.bf16.msra.mxu0 %v378
  %505 = vmatmul.bf16.gmra.mxu0 %v124
  %v506 = vpop.f32.mrf.mxu0
  %v507 = vadd.f32 %v468, %v506
  %v508 = vpop.f32.mrf.mxu0
  %v509 = vadd.f32 %v470, %v508
  %510 = vmatmul.bf16.gmra.mxu0 %v125
  %v511 = vpop.f32.mrf.mxu0
  %v512 = vadd.f32 %v473, %v511
  %v513 = vpop.f32.mrf.mxu0
  %v514 = vadd.f32 %v475, %v513
  %515 = vmatmul.bf16.gmra.mxu0 %v126
  %v516 = vpop.f32.mrf.mxu0
  %v517 = vadd.f32 %v478, %v516
  %v518 = vpop.f32.mrf.mxu0
  %v519 = vadd.f32 %v480, %v518
  %520 = vmatmul.bf16.gmra.mxu0 %v127
  %v521 = vpop.f32.mrf.mxu0
  %v522 = vadd.f32 %v483, %v521
  %v523 = vpop.f32.mrf.mxu0
  %v524 = vadd.f32 %v485, %v523
  %525 = vmatmul.bf16.gmra.mxu0 %v128
  %v526 = vpop.f32.mrf.mxu0
  %v527 = vadd.f32 %v488, %v526
  %v528 = vpop.f32.mrf.mxu0
  %v529 = vadd.f32 %v490, %v528
  %530 = vmatmul.bf16.gmra.mxu0 %v129
  %v531 = vpop.f32.mrf.mxu0
  %v532 = vadd.f32 %v493, %v531
  %v533 = vpop.f32.mrf.mxu0
  %v534 = vadd.f32 %v495, %v533
  %535 = vdwg.mxu0
  %536 = vmatpush.bf16.msra.mxu0 %v408
  %537 = vmatpush.bf16.msra.mxu0 %v406
  %538 = vmatpush.bf16.msra.mxu0 %v404
  %539 = vmatpush.bf16.msra.mxu0 %v402
  %540 = vmatpush.bf16.msra.mxu0 %v400
  %541 = vmatpush.bf16.msra.mxu0 %v398
  %542 = vmatpush.bf16.msra.mxu0 %v396
  %543 = vmatpush.bf16.msra.mxu0 %v394
  %544 = vmatmul.bf16.gmra.mxu0 %v138
  %v545 = vpop.f32.mrf.mxu0
  %v546 = vadd.f32 %v507, %v545
  %v547 = vpop.f32.mrf.mxu0
  %v548 = vadd.f32 %v509, %v547
  %549 = vmatmul.bf16.gmra.mxu0 %v139
  %v550 = vpop.f32.mrf.mxu0
  %v551 = vadd.f32 %v512, %v550
  %v552 = vpop.f32.mrf.mxu0
  %v553 = vadd.f32 %v514, %v552
  %554 = vmatmul.bf16.gmra.mxu0 %v140
  %v555 = vpop.f32.mrf.mxu0
  %v556 = vadd.f32 %v517, %v555
  %v557 = vpop.f32.mrf.mxu0
  %v558 = vadd.f32 %v519, %v557
  %559 = vmatmul.bf16.gmra.mxu0 %v141
  %v560 = vpop.f32.mrf.mxu0
  %v561 = vadd.f32 %v522, %v560
  %v562 = vpop.f32.mrf.mxu0
  %v563 = vadd.f32 %v524, %v562
  %564 = vmatmul.bf16.gmra.mxu0 %v142
  %v565 = vpop.f32.mrf.mxu0
  %v566 = vadd.f32 %v527, %v565
  %v567 = vpop.f32.mrf.mxu0
  %v568 = vadd.f32 %v529, %v567
  %569 = vmatmul.bf16.gmra.mxu0 %v143
  %v570 = vpop.f32.mrf.mxu0
  %v571 = vadd.f32 %v532, %v570
  %v572 = vpop.f32.mrf.mxu0
  %v573 = vadd.f32 %v534, %v572
  %574 = vdwg.mxu0
  %575 = vmatpush.bf16.msra.mxu0 %v377
  %576 = vmatpush.bf16.msra.mxu0 %v375
  %577 = vmatpush.bf16.msra.mxu0 %v373
  %578 = vmatpush.bf16.msra.mxu0 %v371
  %579 = vmatpush.bf16.msra.mxu0 %v369
  %580 = vmatpush.bf16.msra.mxu0 %v367
  %581 = vmatpush.bf16.msra.mxu0 %v365
  %582 = vmatpush.bf16.msra.mxu0 %v363
  %583 = vmatmul.bf16.gmra.mxu0 %v88
  %v584 = vpop.f32.mrf.mxu0
  %v585 = vadd.f32 %v215, %v584
  %v586 = vpop.f32.mrf.mxu0
  %v587 = vadd.f32 %v215, %v586
  %588 = vmatmul.bf16.gmra.mxu0 %v89
  %v589 = vpop.f32.mrf.mxu0
  %v590 = vadd.f32 %v215, %v589
  %v591 = vpop.f32.mrf.mxu0
  %v592 = vadd.f32 %v215, %v591
  %593 = vmatmul.bf16.gmra.mxu0 %v90
  %v594 = vpop.f32.mrf.mxu0
  %v595 = vadd.f32 %v215, %v594
  %v596 = vpop.f32.mrf.mxu0
  %v597 = vadd.f32 %v215, %v596
  %598 = vmatmul.bf16.gmra.mxu0 %v91
  %v599 = vpop.f32.mrf.mxu0
  %v600 = vadd.f32 %v215, %v599
  %v601 = vpop.f32.mrf.mxu0
  %v602 = vadd.f32 %v215, %v601
  %603 = vmatmul.bf16.gmra.mxu0 %v92
  %v604 = vpop.f32.mrf.mxu0
  %v605 = vadd.f32 %v215, %v604
  %v606 = vpop.f32.mrf.mxu0
  %v607 = vadd.f32 %v215, %v606
  %608 = vmatmul.bf16.gmra.mxu0 %v93
  %v609 = vpop.f32.mrf.mxu0
  %v610 = vadd.f32 %v215, %v609
  %v611 = vpop.f32.mrf.mxu0
  %v612 = vadd.f32 %v215, %v611
  %613 = vdwg.mxu0
  %614 = vmatpush.bf16.msra.mxu0 %v393
  %615 = vmatpush.bf16.msra.mxu0 %v391
  %616 = vmatpush.bf16.msra.mxu0 %v389
  %617 = vmatpush.bf16.msra.mxu0 %v387
  %618 = vmatpush.bf16.msra.mxu0 %v385
  %619 = vmatpush.bf16.msra.mxu0 %v383
  %620 = vmatpush.bf16.msra.mxu0 %v381
  %621 = vmatpush.bf16.msra.mxu0 %v379
  %622 = vmatmul.bf16.gmra.mxu0 %v124
  %v623 = vpop.f32.mrf.mxu0
  %v624 = vadd.f32 %v585, %v623
  %v625 = vpop.f32.mrf.mxu0
  %v626 = vadd.f32 %v587, %v625
  %627 = vmatmul.bf16.gmra.mxu0 %v125
  %v628 = vpop.f32.mrf.mxu0
  %v629 = vadd.f32 %v590, %v628
  %v630 = vpop.f32.mrf.mxu0
  %v631 = vadd.f32 %v592, %v630
  %632 = vmatmul.bf16.gmra.mxu0 %v126
  %v633 = vpop.f32.mrf.mxu0
  %v634 = vadd.f32 %v595, %v633
  %v635 = vpop.f32.mrf.mxu0
  %v636 = vadd.f32 %v597, %v635
  %637 = vmatmul.bf16.gmra.mxu0 %v127
  %v638 = vpop.f32.mrf.mxu0
  %v639 = vadd.f32 %v600, %v638
  %v640 = vpop.f32.mrf.mxu0
  %v641 = vadd.f32 %v602, %v640
  %642 = vmatmul.bf16.gmra.mxu0 %v128
  %v643 = vpop.f32.mrf.mxu0
  %v644 = vadd.f32 %v605, %v643
  %v645 = vpop.f32.mrf.mxu0
  %v646 = vadd.f32 %v607, %v645
  %647 = vmatmul.bf16.gmra.mxu0 %v129
  %v648 = vpop.f32.mrf.mxu0
  %v649 = vadd.f32 %v610, %v648
  %v650 = vpop.f32.mrf.mxu0
  %v651 = vadd.f32 %v612, %v650
  %652 = vdwg.mxu0
  %653 = vmatpush.bf16.msra.mxu0 %v409
  %654 = vmatpush.bf16.msra.mxu0 %v407
  %655 = vmatpush.bf16.msra.mxu0 %v405
  %656 = vmatpush.bf16.msra.mxu0 %v403
  %657 = vmatpush.bf16.msra.mxu0 %v401
  %658 = vmatpush.bf16.msra.mxu0 %v399
  %659 = vmatpush.bf16.msra.mxu0 %v397
  %660 = vmatpush.bf16.msra.mxu0 %v395
  %661 = vmatmul.bf16.gmra.mxu0 %v138
  %v662 = vpop.f32.mrf.mxu0
  %v663 = vadd.f32 %v624, %v662
  %v664 = vpop.f32.mrf.mxu0
  %v665 = vadd.f32 %v626, %v664
  %666 = vmatmul.bf16.gmra.mxu0 %v139
  %v667 = vpop.f32.mrf.mxu0
  %v668 = vadd.f32 %v629, %v667
  %v669 = vpop.f32.mrf.mxu0
  %v670 = vadd.f32 %v631, %v669
  %671 = vmatmul.bf16.gmra.mxu0 %v140
  %v672 = vpop.f32.mrf.mxu0
  %v673 = vadd.f32 %v634, %v672
  %v674 = vpop.f32.mrf.mxu0
  %v675 = vadd.f32 %v636, %v674
  %676 = vmatmul.bf16.gmra.mxu0 %v141
  %v677 = vpop.f32.mrf.mxu0
  %v678 = vadd.f32 %v639, %v677
  %v679 = vpop.f32.mrf.mxu0
  %v680 = vadd.f32 %v641, %v679
  %681 = vmatmul.bf16.gmra.mxu0 %v142
  %v682 = vpop.f32.mrf.mxu0
  %v683 = vadd.f32 %v644, %v682
  %v684 = vpop.f32.mrf.mxu0
  %v685 = vadd.f32 %v646, %v684
  %686 = vmatmul.bf16.gmra.mxu0 %v143
  %v687 = vpop.f32.mrf.mxu0
  %v688 = vadd.f32 %v649, %v687
  %v689 = vpop.f32.mrf.mxu0
  %v690 = vadd.f32 %v651, %v689
  %691 = vdwg.mxu0
  %v692 = vmax.f32 %v546, 0.0
  %v693 = vmax.f32 %v663, 0.0
  %v694 = vmax.f32 %v548, 0.0
  %v695 = vmax.f32 %v665, 0.0
  %v696 = vmax.f32 %v551, 0.0
  %v697 = vmax.f32 %v668, 0.0
  %v698 = vmax.f32 %v553, 0.0
  %v699 = vmax.f32 %v670, 0.0
  %v700 = vmax.f32 %v556, 0.0
  %v701 = vmax.f32 %v673, 0.0
  %v702 = vmax.f32 %v558, 0.0
  %v703 = vmax.f32 %v675, 0.0
  %v704 = vmax.f32 %v561, 0.0
  %v705 = vmax.f32 %v678, 0.0
  %v706 = vmax.f32 %v563, 0.0
  %v707 = vmax.f32 %v680, 0.0
  %v708 = vmax.f32 %v566, 0.0
  %v709 = vmax.f32 %v683, 0.0
  %v710 = vmax.f32 %v568, 0.0
  %v711 = vmax.f32 %v685, 0.0
  %v712 = vmax.f32 %v571, 0.0
  %v713 = vmax.f32 %v688, 0.0
  %v714 = vmax.f32 %v573, 0.0
  %v715 = vmax.f32 %v690, 0.0
  %716 = vmatpush.bf16.msra.mxu0 %v376
  %717 = vmatpush.bf16.msra.mxu0 %v374
  %718 = vmatpush.bf16.msra.mxu0 %v372
  %719 = vmatpush.bf16.msra.mxu0 %v370
  %720 = vmatpush.bf16.msra.mxu0 %v368
  %721 = vmatpush.bf16.msra.mxu0 %v366
  %722 = vmatpush.bf16.msra.mxu0 %v364
  %723 = vmatpush.bf16.msra.mxu0 %v362
  %724 = vmatmul.bf16.gmra.mxu0 %v124
  %v725 = vpop.f32.mrf.mxu0
  %v726 = vadd.f32 %v214, %v725
  %v727 = vpop.f32.mrf.mxu0
  %v728 = vadd.f32 %v214, %v727
  %729 = vmatmul.bf16.gmra.mxu0 %v125
  %v730 = vpop.f32.mrf.mxu0
  %v731 = vadd.f32 %v214, %v730
  %v732 = vpop.f32.mrf.mxu0
  %v733 = vadd.f32 %v214, %v732
  %734 = vmatmul.bf16.gmra.mxu0 %v126
  %v735 = vpop.f32.mrf.mxu0
  %v736 = vadd.f32 %v214, %v735
  %v737 = vpop.f32.mrf.mxu0
  %v738 = vadd.f32 %v214, %v737
  %739 = vmatmul.bf16.gmra.mxu0 %v127
  %v740 = vpop.f32.mrf.mxu0
  %v741 = vadd.f32 %v214, %v740
  %v742 = vpop.f32.mrf.mxu0
  %v743 = vadd.f32 %v214, %v742
  %744 = vmatmul.bf16.gmra.mxu0 %v128
  %v745 = vpop.f32.mrf.mxu0
  %v746 = vadd.f32 %v214, %v745
  %v747 = vpop.f32.mrf.mxu0
  %v748 = vadd.f32 %v214, %v747
  %749 = vmatmul.bf16.gmra.mxu0 %v129
  %v750 = vpop.f32.mrf.mxu0
  %v751 = vadd.f32 %v214, %v750
  %v752 = vpop.f32.mrf.mxu0
  %v753 = vadd.f32 %v214, %v752
  %754 = vdwg.mxu0
  %755 = vmatpush.bf16.msra.mxu0 %v392
  %756 = vmatpush.bf16.msra.mxu0 %v390
  %757 = vmatpush.bf16.msra.mxu0 %v388
  %758 = vmatpush.bf16.msra.mxu0 %v386
  %759 = vmatpush.bf16.msra.mxu0 %v384
  %760 = vmatpush.bf16.msra.mxu0 %v382
  %761 = vmatpush.bf16.msra.mxu0 %v380
  %762 = vmatpush.bf16.msra.mxu0 %v378
  %763 = vmatmul.bf16.gmra.mxu0 %v138
  %v764 = vpop.f32.mrf.mxu0
  %v765 = vadd.f32 %v726, %v764
  %v766 = vpop.f32.mrf.mxu0
  %v767 = vadd.f32 %v728, %v766
  %768 = vmatmul.bf16.gmra.mxu0 %v139
  %v769 = vpop.f32.mrf.mxu0
  %v770 = vadd.f32 %v731, %v769
  %v771 = vpop.f32.mrf.mxu0
  %v772 = vadd.f32 %v733, %v771
  %773 = vmatmul.bf16.gmra.mxu0 %v140
  %v774 = vpop.f32.mrf.mxu0
  %v775 = vadd.f32 %v736, %v774
  %v776 = vpop.f32.mrf.mxu0
  %v777 = vadd.f32 %v738, %v776
  %778 = vmatmul.bf16.gmra.mxu0 %v141
  %v779 = vpop.f32.mrf.mxu0
  %v780 = vadd.f32 %v741, %v779
  %v781 = vpop.f32.mrf.mxu0
  %v782 = vadd.f32 %v743, %v781
  %783 = vmatmul.bf16.gmra.mxu0 %v142
  %v784 = vpop.f32.mrf.mxu0
  %v785 = vadd.f32 %v746, %v784
  %v786 = vpop.f32.mrf.mxu0
  %v787 = vadd.f32 %v748, %v786
  %788 = vmatmul.bf16.gmra.mxu0 %v143
  %v789 = vpop.f32.mrf.mxu0
  %v790 = vadd.f32 %v751, %v789
  %v791 = vpop.f32.mrf.mxu0
  %v792 = vadd.f32 %v753, %v791
  %793 = vdwg.mxu0
  %794 = vmatpush.bf16.msra.mxu0 %v408
  %795 = vmatpush.bf16.msra.mxu0 %v406
  %796 = vmatpush.bf16.msra.mxu0 %v404
  %797 = vmatpush.bf16.msra.mxu0 %v402
  %798 = vmatpush.bf16.msra.mxu0 %v400
  %799 = vmatpush.bf16.msra.mxu0 %v398
  %800 = vmatpush.bf16.msra.mxu0 %v396
  %801 = vmatpush.bf16.msra.mxu0 %v394
  %802 = vmatmul.bf16.gmra.mxu0 %v152
  %v803 = vpop.f32.mrf.mxu0
  %v804 = vadd.f32 %v765, %v803
  %v805 = vpop.f32.mrf.mxu0
  %v806 = vadd.f32 %v767, %v805
  %807 = vmatmul.bf16.gmra.mxu0 %v153
  %v808 = vpop.f32.mrf.mxu0
  %v809 = vadd.f32 %v770, %v808
  %v810 = vpop.f32.mrf.mxu0
  %v811 = vadd.f32 %v772, %v810
  %812 = vmatmul.bf16.gmra.mxu0 %v154
  %v813 = vpop.f32.mrf.mxu0
  %v814 = vadd.f32 %v775, %v813
  %v815 = vpop.f32.mrf.mxu0
  %v816 = vadd.f32 %v777, %v815
  %817 = vmatmul.bf16.gmra.mxu0 %v155
  %v818 = vpop.f32.mrf.mxu0
  %v819 = vadd.f32 %v780, %v818
  %v820 = vpop.f32.mrf.mxu0
  %v821 = vadd.f32 %v782, %v820
  %822 = vmatmul.bf16.gmra.mxu0 %v156
  %v823 = vpop.f32.mrf.mxu0
  %v824 = vadd.f32 %v785, %v823
  %v825 = vpop.f32.mrf.mxu0
  %v826 = vadd.f32 %v787, %v825
  %827 = vmatmul.bf16.gmra.mxu0 %v157
  %v828 = vpop.f32.mrf.mxu0
  %v829 = vadd.f32 %v790, %v828
  %v830 = vpop.f32.mrf.mxu0
  %v831 = vadd.f32 %v792, %v830
  %832 = vdwg.mxu0
  %833 = vmatpush.bf16.msra.mxu0 %v377
  %834 = vmatpush.bf16.msra.mxu0 %v375
  %835 = vmatpush.bf16.msra.mxu0 %v373
  %836 = vmatpush.bf16.msra.mxu0 %v371
  %837 = vmatpush.bf16.msra.mxu0 %v369
  %838 = vmatpush.bf16.msra.mxu0 %v367
  %839 = vmatpush.bf16.msra.mxu0 %v365
  %840 = vmatpush.bf16.msra.mxu0 %v363
  %841 = vmatmul.bf16.gmra.mxu0 %v124
  %v842 = vpop.f32.mrf.mxu0
  %v843 = vadd.f32 %v215, %v842
  %v844 = vpop.f32.mrf.mxu0
  %v845 = vadd.f32 %v215, %v844
  %846 = vmatmul.bf16.gmra.mxu0 %v125
  %v847 = vpop.f32.mrf.mxu0
  %v848 = vadd.f32 %v215, %v847
  %v849 = vpop.f32.mrf.mxu0
  %v850 = vadd.f32 %v215, %v849
  %851 = vmatmul.bf16.gmra.mxu0 %v126
  %v852 = vpop.f32.mrf.mxu0
  %v853 = vadd.f32 %v215, %v852
  %v854 = vpop.f32.mrf.mxu0
  %v855 = vadd.f32 %v215, %v854
  %856 = vmatmul.bf16.gmra.mxu0 %v127
  %v857 = vpop.f32.mrf.mxu0
  %v858 = vadd.f32 %v215, %v857
  %v859 = vpop.f32.mrf.mxu0
  %v860 = vadd.f32 %v215, %v859
  %861 = vmatmul.bf16.gmra.mxu0 %v128
  %v862 = vpop.f32.mrf.mxu0
  %v863 = vadd.f32 %v215, %v862
  %v864 = vpop.f32.mrf.mxu0
  %v865 = vadd.f32 %v215, %v864
  %866 = vmatmul.bf16.gmra.mxu0 %v129
  %v867 = vpop.f32.mrf.mxu0
  %v868 = vadd.f32 %v215, %v867
  %v869 = vpop.f32.mrf.mxu0
  %v870 = vadd.f32 %v215, %v869
  %871 = vdwg.mxu0
  %872 = vmatpush.bf16.msra.mxu0 %v393
  %873 = vmatpush.bf16.msra.mxu0 %v391
  %874 = vmatpush.bf16.msra.mxu0 %v389
  %875 = vmatpush.bf16.msra.mxu0 %v387
  %876 = vmatpush.bf16.msra.mxu0 %v385
  %877 = vmatpush.bf16.msra.mxu0 %v383
  %878 = vmatpush.bf16.msra.mxu0 %v381
  %879 = vmatpush.bf16.msra.mxu0 %v379
  %880 = vmatmul.bf16.gmra.mxu0 %v138
  %v881 = vpop.f32.mrf.mxu0
  %v882 = vadd.f32 %v843, %v881
  %v883 = vpop.f32.mrf.mxu0
  %v884 = vadd.f32 %v845, %v883
  %885 = vmatmul.bf16.gmra.mxu0 %v139
  %v886 = vpop.f32.mrf.mxu0
  %v887 = vadd.f32 %v848, %v886
  %v888 = vpop.f32.mrf.mxu0
  %v889 = vadd.f32 %v850, %v888
  %890 = vmatmul.bf16.gmra.mxu0 %v140
  %v891 = vpop.f32.mrf.mxu0
  %v892 = vadd.f32 %v853, %v891
  %v893 = vpop.f32.mrf.mxu0
  %v894 = vadd.f32 %v855, %v893
  %895 = vmatmul.bf16.gmra.mxu0 %v141
  %v896 = vpop.f32.mrf.mxu0
  %v897 = vadd.f32 %v858, %v896
  %v898 = vpop.f32.mrf.mxu0
  %v899 = vadd.f32 %v860, %v898
  %900 = vmatmul.bf16.gmra.mxu0 %v142
  %v901 = vpop.f32.mrf.mxu0
  %v902 = vadd.f32 %v863, %v901
  %v903 = vpop.f32.mrf.mxu0
  %v904 = vadd.f32 %v865, %v903
  %905 = vmatmul.bf16.gmra.mxu0 %v143
  %v906 = vpop.f32.mrf.mxu0
  %v907 = vadd.f32 %v868, %v906
  %v908 = vpop.f32.mrf.mxu0
  %v909 = vadd.f32 %v870, %v908
  %910 = vdwg.mxu0
  %911 = vmatpush.bf16.msra.mxu0 %v409
  %912 = vmatpush.bf16.msra.mxu0 %v407
  %913 = vmatpush.bf16.msra.mxu0 %v405
  %914 = vmatpush.bf16.msra.mxu0 %v403
  %915 = vmatpush.bf16.msra.mxu0 %v401
  %916 = vmatpush.bf16.msra.mxu0 %v399
  %917 = vmatpush.bf16.msra.mxu0 %v397
  %918 = vmatpush.bf16.msra.mxu0 %v395
  %919 = vmatmul.bf16.gmra.mxu0 %v152
  %v920 = vpop.f32.mrf.mxu0
  %v921 = vadd.f32 %v882, %v920
  %v922 = vpop.f32.mrf.mxu0
  %v923 = vadd.f32 %v884, %v922
  %924 = vmatmul.bf16.gmra.mxu0 %v153
  %v925 = vpop.f32.mrf.mxu0
  %v926 = vadd.f32 %v887, %v925
  %v927 = vpop.f32.mrf.mxu0
  %v928 = vadd.f32 %v889, %v927
  %929 = vmatmul.bf16.gmra.mxu0 %v154
  %v930 = vpop.f32.mrf.mxu0
  %v931 = vadd.f32 %v892, %v930
  %v932 = vpop.f32.mrf.mxu0
  %v933 = vadd.f32 %v894, %v932
  %934 = vmatmul.bf16.gmra.mxu0 %v155
  %v935 = vpop.f32.mrf.mxu0
  %v936 = vadd.f32 %v897, %v935
  %v937 = vpop.f32.mrf.mxu0
  %v938 = vadd.f32 %v899, %v937
  %939 = vmatmul.bf16.gmra.mxu0 %v156
  %v940 = vpop.f32.mrf.mxu0
  %v941 = vadd.f32 %v902, %v940
  %v942 = vpop.f32.mrf.mxu0
  %v943 = vadd.f32 %v904, %v942
  %944 = vmatmul.bf16.gmra.mxu0 %v157
  %v945 = vpop.f32.mrf.mxu0
  %v946 = vadd.f32 %v907, %v945
  %v947 = vpop.f32.mrf.mxu0
  %v948 = vadd.f32 %v909, %v947
  %949 = vdwg.mxu0
  %v950 = vmax.f32 %v804, 0.0
  %v951 = vmax.f32 %v921, 0.0
  %v952 = vmax.f32 %v806, 0.0
  %v953 = vmax.f32 %v923, 0.0
  %v954 = vmax.f32 %v809, 0.0
  %v955 = vmax.f32 %v926, 0.0
  %v956 = vmax.f32 %v811, 0.0
  %v957 = vmax.f32 %v928, 0.0
  %v958 = vmax.f32 %v814, 0.0
  %v959 = vmax.f32 %v931, 0.0
  %v960 = vmax.f32 %v816, 0.0
  %v961 = vmax.f32 %v933, 0.0
  %v962 = vmax.f32 %v819, 0.0
  %v963 = vmax.f32 %v936, 0.0
  %v964 = vmax.f32 %v821, 0.0
  %v965 = vmax.f32 %v938, 0.0
  %v966 = vmax.f32 %v824, 0.0
  %v967 = vmax.f32 %v941, 0.0
  %v968 = vmax.f32 %v826, 0.0
  %v969 = vmax.f32 %v943, 0.0
  %v970 = vmax.f32 %v829, 0.0
  %v971 = vmax.f32 %v946, 0.0
  %v972 = vmax.f32 %v831, 0.0
  %v973 = vmax.f32 %v948, 0.0
  %v974 = vmax.f32 %v692, %v693
  %v975 = vmax.f32 %v694, %v695
  %v976 = vmax.f32 %v696, %v697
  %v977 = vmax.f32 %v698, %v699
  %v978 = vmax.f32 %v700, %v701
  %v979 = vmax.f32 %v702, %v703
  %v980 = vmax.f32 %v704, %v705
  %v981 = vmax.f32 %v706, %v707
  %v982 = vmax.f32 %v708, %v709
  %v983 = vmax.f32 %v710, %v711
  %v984 = vmax.f32 %v712, %v713
  %v985 = vmax.f32 %v714, %v715
  %v986 = vmax.f32 %v950, %v951
  %v987 = vmax.f32 %v952, %v953
  %v988 = vmax.f32 %v954, %v955
  %v989 = vmax.f32 %v956, %v957
  %v990 = vmax.f32 %v958, %v959
  %v991 = vmax.f32 %v960, %v961
  %v992 = vmax.f32 %v962, %v963
  %v993 = vmax.f32 %v964, %v965
  %v994 = vmax.f32 %v966, %v967
  %v995 = vmax.f32 %v968, %v969
  %v996 = vmax.f32 %v970, %v971
  %v997 = vmax.f32 %v972, %v973
  %v998 = vmax.f32 %v974, %v986
  %v999 = vmax.f32 %v975, %v987
  %v1000 = vmax.f32 %v976, %v988
  %v1001 = vmax.f32 %v977, %v989
  %v1002 = vmax.f32 %v978, %v990
  %v1003 = vmax.f32 %v979, %v991
  %v1004 = vmax.f32 %v980, %v992
  %v1005 = vmax.f32 %v981, %v993
  %v1006 = vmax.f32 %v982, %v994
  %v1007 = vmax.f32 %v983, %v995
  %v1008 = vmax.f32 %v984, %v996
  %v1009 = vmax.f32 %v985, %v997
  %v1010 = vpack.c.bf16 %v998, %v998
  %v1011 = vpack.c.bf16 %v999, %v999
  %v1012 = vpack.c.bf16 %v1000, %v1000
  %v1013 = vpack.c.bf16 %v1001, %v1001
  %v1014 = vpack.c.bf16 %v1002, %v1002
  %v1015 = vpack.c.bf16 %v1003, %v1003
  %v1016 = vpack.c.bf16 %v1004, %v1004
  %v1017 = vpack.c.bf16 %v1005, %v1005
  %v1018 = vpack.c.bf16 %v1006, %v1006
  %v1019 = vpack.c.bf16 %v1007, %v1007
  %v1020 = vpack.c.bf16 %v1008, %v1008
  %v1021 = vpack.c.bf16 %v1009, %v1009
  %v1032 = vunpack.c.l.b16 %v1010
  %v1033 = vunpack.c.l.b16 %v1011
  %v1034 = vunpack.c.l.b16 %v1012
  %v1035 = vunpack.c.l.b16 %v1013
  %v1036 = vunpack.c.l.b16 %v1014
  %v1037 = vunpack.c.l.b16 %v1015
  %v1038 = vunpack.c.l.b16 %v1016
  %v1039 = vunpack.c.l.b16 %v1017
  %v1040 = vunpack.c.l.b16 %v1018
  %v1041 = vunpack.c.l.b16 %v1019
  %v1042 = vpack.c.b16 %v1033, %v1032
  %v1043 = vpack.c.b16 %v1035, %v1034
  %v1044 = vpack.c.b16 %v1037, %v1036
  %v1045 = vpack.c.b16 %v1039, %v1038
  %v1046 = vpack.c.b16 %v1041, %v1040
  %v1053 = vunpack.c.l.b16 %v1020
  %v1054 = vpack.c.b16 %v1034, %v1033
  %v1055 = vpack.c.b16 %v1036, %v1035
  %v1056 = vpack.c.b16 %v1038, %v1037
  %v1057 = vpack.c.b16 %v1040, %v1039
  %v1058 = vpack.c.b16 %v1053, %v1041
  %v1065 = vunpack.c.l.b16 %v1021
  %v1066 = vpack.c.b16 %v1065, %v1053
  %v1068 = vld [vmem:[%s3] sm:$0xff]
  %v1069 = vld [vmem:[%s3 + $0x8] sm:$0xff]
  %v1070 = vld [vmem:[%s3 + $0x10] sm:$0xff]
  %v1071 = vld [vmem:[%s3 + $0x18] sm:$0xff]
  %v1072 = vld [vmem:[%s3 + $0x20] sm:$0xff]
  %v1073 = vld [vmem:[%s3 + $0x28] sm:$0xff]
  %v1074 = vld [vmem:[%s3 + $0x30] sm:$0xff]
  %v1075 = vld [vmem:[%s3 + $0x38] sm:$0xff]
  %v1076 = vld [vmem:[%s3 + $0x40] sm:$0xff]
  %v1077 = vld [vmem:[%s3 + $0x48] sm:$0xff]
  %v1078 = vld [vmem:[%s3 + $0x50] sm:$0xff]
  %v1079 = vld [vmem:[%s3 + $0x58] sm:$0xff]
  %v1080 = vld [vmem:[%s3 + $0x60] sm:$0xff]
  %v1081 = vld [vmem:[%s3 + $0x68] sm:$0xff]
  %v1082 = vld [vmem:[%s3 + $0x70] sm:$0xff]
  %v1083 = vld [vmem:[%s3 + $0x78] sm:$0xff]
  %v1084 = vld [vmem:[%s3 + $0x80] sm:$0xff]
  %v1085 = vld [vmem:[%s3 + $0x88] sm:$0xff]
  %v1086 = vld [vmem:[%s3 + $0x90] sm:$0xff]
  %v1087 = vld [vmem:[%s3 + $0x98] sm:$0xff]
  %v1088 = vld [vmem:[%s3 + $0xa0] sm:$0xff]
  %v1089 = vld [vmem:[%s3 + $0xa8] sm:$0xff]
  %v1090 = vld [vmem:[%s3 + $0xb0] sm:$0xff]
  %v1091 = vld [vmem:[%s3 + $0xb8] sm:$0xff]
  %v1092 = vld [vmem:[%s3 + $0xc0] sm:$0xff]
  %v1093 = vld [vmem:[%s3 + $0xc8] sm:$0xff]
  %v1094 = vld [vmem:[%s3 + $0xd0] sm:$0xff]
  %v1095 = vld [vmem:[%s3 + $0xd8] sm:$0xff]
  %v1096 = vld [vmem:[%s3 + $0xe0] sm:$0xff]
  %v1097 = vld [vmem:[%s3 + $0xe8] sm:$0xff]
  %v1098 = vld [vmem:[%s3 + $0xf0] sm:$0xff]
  %v1099 = vld [vmem:[%s3 + $0xf8] sm:$0xff]
  %v1100 = vld [vmem:[%s3 + $0x100] sm:$0xff]
  %v1101 = vld [vmem:[%s3 + $0x108] sm:$0xff]
  %v1102 = vld [vmem:[%s3 + $0x110] sm:$0xff]
  %v1103 = vld [vmem:[%s3 + $0x118] sm:$0xff]
  %v1104 = vld [vmem:[%s3 + $0x120] sm:$0xff]
  %v1105 = vld [vmem:[%s3 + $0x128] sm:$0xff]
  %v1106 = vld [vmem:[%s3 + $0x130] sm:$0xff]
  %v1107 = vld [vmem:[%s3 + $0x138] sm:$0xff]
  %v1108 = vld [vmem:[%s3 + $0x140] sm:$0xff]
  %v1109 = vld [vmem:[%s3 + $0x148] sm:$0xff]
  %v1110 = vld [vmem:[%s3 + $0x150] sm:$0xff]
  %v1111 = vld [vmem:[%s3 + $0x158] sm:$0xff]
  %v1112 = vld [vmem:[%s3 + $0x160] sm:$0xff]
  %v1113 = vld [vmem:[%s3 + $0x168] sm:$0xff]
  %v1114 = vld [vmem:[%s3 + $0x170] sm:$0xff]
  %v1115 = vld [vmem:[%s3 + $0x178] sm:$0xff]
  %v1116 = vld [vmem:[%s4] sm:$0x3]
  %v1118 = vperm.slane %v1116, 0
  %v1119 = vperm.slane %v1116, 1
  %v1170 = vunpack.c.l.b16 %v1068
  %v1171 = vunpack.c.h.b16 %v1068
  %v1172 = vunpack.c.l.b16 %v1069
  %v1173 = vunpack.c.h.b16 %v1069
  %v1174 = vunpack.c.l.b16 %v1070
  %v1175 = vunpack.c.h.b16 %v1070
  %v1176 = vunpack.c.l.b16 %v1071
  %v1177 = vunpack.c.h.b16 %v1071
  %v1178 = vunpack.c.l.b16 %v1072
  %v1179 = vunpack.c.h.b16 %v1072
  %v1180 = vunpack.c.l.b16 %v1073
  %v1181 = vunpack.c.h.b16 %v1073
  %v1182 = vunpack.c.l.b16 %v1074
  %v1183 = vunpack.c.h.b16 %v1074
  %v1184 = vunpack.c.l.b16 %v1075
  %v1185 = vunpack.c.h.b16 %v1075
  %v1186 = vunpack.c.l.b16 %v1076
  %v1187 = vunpack.c.h.b16 %v1076
  %v1188 = vunpack.c.l.b16 %v1077
  %v1189 = vunpack.c.h.b16 %v1077
  %v1190 = vunpack.c.l.b16 %v1078
  %v1191 = vunpack.c.h.b16 %v1078
  %v1192 = vunpack.c.l.b16 %v1079
  %v1193 = vunpack.c.h.b16 %v1079
  %v1194 = vunpack.c.l.b16 %v1080
  %v1195 = vunpack.c.h.b16 %v1080
  %v1196 = vunpack.c.l.b16 %v1081
  %v1197 = vunpack.c.h.b16 %v1081
  %v1198 = vunpack.c.l.b16 %v1082
  %v1199 = vunpack.c.h.b16 %v1082
  %v1200 = vunpack.c.l.b16 %v1083
  %v1201 = vunpack.c.h.b16 %v1083
  %v1202 = vunpack.c.l.b16 %v1084
  %v1203 = vunpack.c.h.b16 %v1084
  %v1204 = vunpack.c.l.b16 %v1085
  %v1205 = vunpack.c.h.b16 %v1085
  %v1206 = vunpack.c.l.b16 %v1086
  %v1207 = vunpack.c.h.b16 %v1086
  %v1208 = vunpack.c.l.b16 %v1087
  %v1209 = vunpack.c.h.b16 %v1087
  %v1210 = vunpack.c.l.b16 %v1088
  %v1211 = vunpack.c.h.b16 %v1088
  %v1212 = vunpack.c.l.b16 %v1089
  %v1213 = vunpack.c.h.b16 %v1089
  %v1214 = vunpack.c.l.b16 %v1090
  %v1215 = vunpack.c.h.b16 %v1090
  %v1216 = vunpack.c.l.b16 %v1091
  %v1217 = vunpack.c.h.b16 %v1091
  %v1218 = vunpack.c.l.b16 %v1092
  %v1219 = vunpack.c.h.b16 %v1092
  %v1220 = vunpack.c.l.b16 %v1093
  %v1221 = vunpack.c.h.b16 %v1093
  %v1222 = vunpack.c.l.b16 %v1094
  %v1223 = vunpack.c.h.b16 %v1094
  %v1224 = vunpack.c.l.b16 %v1095
  %v1225 = vunpack.c.h.b16 %v1095
  %v1226 = vunpack.c.l.b16 %v1096
  %v1227 = vunpack.c.h.b16 %v1096
  %v1228 = vunpack.c.l.b16 %v1097
  %v1229 = vunpack.c.h.b16 %v1097
  %v1230 = vunpack.c.l.b16 %v1098
  %v1231 = vunpack.c.h.b16 %v1098
  %v1232 = vunpack.c.l.b16 %v1099
  %v1233 = vunpack.c.h.b16 %v1099
  %v1234 = vunpack.c.l.b16 %v1100
  %v1235 = vunpack.c.h.b16 %v1100
  %v1236 = vunpack.c.l.b16 %v1101
  %v1237 = vunpack.c.h.b16 %v1101
  %v1238 = vunpack.c.l.b16 %v1102
  %v1239 = vunpack.c.h.b16 %v1102
  %v1240 = vunpack.c.l.b16 %v1103
  %v1241 = vunpack.c.h.b16 %v1103
  %v1242 = vunpack.c.l.b16 %v1104
  %v1243 = vunpack.c.h.b16 %v1104
  %v1244 = vunpack.c.l.b16 %v1105
  %v1245 = vunpack.c.h.b16 %v1105
  %v1246 = vunpack.c.l.b16 %v1106
  %v1247 = vunpack.c.h.b16 %v1106
  %v1248 = vunpack.c.l.b16 %v1107
  %v1249 = vunpack.c.h.b16 %v1107
  %v1250 = vunpack.c.l.b16 %v1108
  %v1251 = vunpack.c.h.b16 %v1108
  %v1252 = vunpack.c.l.b16 %v1109
  %v1253 = vunpack.c.h.b16 %v1109
  %v1254 = vunpack.c.l.b16 %v1110
  %v1255 = vunpack.c.h.b16 %v1110
  %v1256 = vunpack.c.l.b16 %v1111
  %v1257 = vunpack.c.h.b16 %v1111
  %v1258 = vunpack.c.l.b16 %v1112
  %v1259 = vunpack.c.h.b16 %v1112
  %v1260 = vunpack.c.l.b16 %v1113
  %v1261 = vunpack.c.h.b16 %v1113
  %v1262 = vunpack.c.l.b16 %v1114
  %v1263 = vunpack.c.h.b16 %v1114
  %v1264 = vunpack.c.l.b16 %v1115
  %v1265 = vunpack.c.h.b16 %v1115
  %v1266 = vpack.c.b16 %v1172, %v1170
  %v1267 = vpack.c.b16 %v1173, %v1171
  %v1268 = vpack.c.b16 %v1176, %v1174
  %v1269 = vpack.c.b16 %v1177, %v1175
  %v1270 = vpack.c.b16 %v1180, %v1178
  %v1271 = vpack.c.b16 %v1181, %v1179
  %v1272 = vpack.c.b16 %v1184, %v1182
  %v1273 = vpack.c.b16 %v1185, %v1183
  %v1274 = vpack.c.b16 %v1188, %v1186
  %v1275 = vpack.c.b16 %v1189, %v1187
  %v1276 = vpack.c.b16 %v1192, %v1190
  %v1277 = vpack.c.b16 %v1193, %v1191
  %v1278 = vpack.c.b16 %v1196, %v1194
  %v1279 = vpack.c.b16 %v1197, %v1195
  %v1280 = vpack.c.b16 %v1200, %v1198
  %v1281 = vpack.c.b16 %v1201, %v1199
  %v1282 = vpack.c.b16 %v1204, %v1202
  %v1283 = vpack.c.b16 %v1205, %v1203
  %v1284 = vpack.c.b16 %v1208, %v1206
  %v1285 = vpack.c.b16 %v1209, %v1207
  %v1286 = vpack.c.b16 %v1212, %v1210
  %v1287 = vpack.c.b16 %v1213, %v1211
  %v1288 = vpack.c.b16 %v1216, %v1214
  %v1289 = vpack.c.b16 %v1217, %v1215
  %v1290 = vpack.c.b16 %v1220, %v1218
  %v1291 = vpack.c.b16 %v1221, %v1219
  %v1292 = vpack.c.b16 %v1224, %v1222
  %v1293 = vpack.c.b16 %v1225, %v1223
  %v1294 = vpack.c.b16 %v1228, %v1226
  %v1295 = vpack.c.b16 %v1229, %v1227
  %v1296 = vpack.c.b16 %v1232, %v1230
  %v1297 = vpack.c.b16 %v1233, %v1231
  %v1298 = vpack.c.b16 %v1236, %v1234
  %v1299 = vpack.c.b16 %v1237, %v1235
  %v1300 = vpack.c.b16 %v1240, %v1238
  %v1301 = vpack.c.b16 %v1241, %v1239
  %v1302 = vpack.c.b16 %v1244, %v1242
  %v1303 = vpack.c.b16 %v1245, %v1243
  %v1304 = vpack.c.b16 %v1248, %v1246
  %v1305 = vpack.c.b16 %v1249, %v1247
  %v1306 = vpack.c.b16 %v1252, %v1250
  %v1307 = vpack.c.b16 %v1253, %v1251
  %v1308 = vpack.c.b16 %v1256, %v1254
  %v1309 = vpack.c.b16 %v1257, %v1255
  %v1310 = vpack.c.b16 %v1260, %v1258
  %v1311 = vpack.c.b16 %v1261, %v1259
  %v1312 = vpack.c.b16 %v1264, %v1262
  %v1313 = vpack.c.b16 %v1265, %v1263
  %1362 = vmatpush.bf16.msra.mxu0 %v1280
  %1363 = vmatpush.bf16.msra.mxu0 %v1278
  %1364 = vmatpush.bf16.msra.mxu0 %v1276
  %1365 = vmatpush.bf16.msra.mxu0 %v1274
  %1366 = vmatpush.bf16.msra.mxu0 %v1272
  %1367 = vmatpush.bf16.msra.mxu0 %v1270
  %1368 = vmatpush.bf16.msra.mxu0 %v1268
  %1369 = vmatpush.bf16.msra.mxu0 %v1266
  %1370 = vmatmul.bf16.gmra.mxu0 %v1042
  %v1371 = vpop.f32.mrf.mxu0
  %v1372 = vadd.f32 %v1118, %v1371
  %v1373 = vpop.f32.mrf.mxu0
  %v1374 = vadd.f32 %v1118, %v1373
  %1375 = vmatmul.bf16.gmra.mxu0 %v1043
  %v1376 = vpop.f32.mrf.mxu0
  %v1377 = vadd.f32 %v1118, %v1376
  %v1378 = vpop.f32.mrf.mxu0
  %v1379 = vadd.f32 %v1118, %v1378
  %1380 = vmatmul.bf16.gmra.mxu0 %v1044
  %v1381 = vpop.f32.mrf.mxu0
  %v1382 = vadd.f32 %v1118, %v1381
  %v1383 = vpop.f32.mrf.mxu0
  %v1384 = vadd.f32 %v1118, %v1383
  %1385 = vmatmul.bf16.gmra.mxu0 %v1045
  %v1386 = vpop.f32.mrf.mxu0
  %v1387 = vadd.f32 %v1118, %v1386
  %v1388 = vpop.f32.mrf.mxu0
  %v1389 = vadd.f32 %v1118, %v1388
  %1390 = vmatmul.bf16.gmra.mxu0 %v1046
  %v1391 = vpop.f32.mrf.mxu0
  %v1392 = vadd.f32 %v1118, %v1391
  %v1393 = vpop.f32.mrf.mxu0
  %v1394 = vadd.f32 %v1118, %v1393
  %1395 = vdwg.mxu0
  %1396 = vmatpush.bf16.msra.mxu0 %v1296
  %1397 = vmatpush.bf16.msra.mxu0 %v1294
  %1398 = vmatpush.bf16.msra.mxu0 %v1292
  %1399 = vmatpush.bf16.msra.mxu0 %v1290
  %1400 = vmatpush.bf16.msra.mxu0 %v1288
  %1401 = vmatpush.bf16.msra.mxu0 %v1286
  %1402 = vmatpush.bf16.msra.mxu0 %v1284
  %1403 = vmatpush.bf16.msra.mxu0 %v1282
  %1404 = vmatmul.bf16.gmra.mxu0 %v1054
  %v1405 = vpop.f32.mrf.mxu0
  %v1406 = vadd.f32 %v1372, %v1405
  %v1407 = vpop.f32.mrf.mxu0
  %v1408 = vadd.f32 %v1374, %v1407
  %1409 = vmatmul.bf16.gmra.mxu0 %v1055
  %v1410 = vpop.f32.mrf.mxu0
  %v1411 = vadd.f32 %v1377, %v1410
  %v1412 = vpop.f32.mrf.mxu0
  %v1413 = vadd.f32 %v1379, %v1412
  %1414 = vmatmul.bf16.gmra.mxu0 %v1056
  %v1415 = vpop.f32.mrf.mxu0
  %v1416 = vadd.f32 %v1382, %v1415
  %v1417 = vpop.f32.mrf.mxu0
  %v1418 = vadd.f32 %v1384, %v1417
  %1419 = vmatmul.bf16.gmra.mxu0 %v1057
  %v1420 = vpop.f32.mrf.mxu0
  %v1421 = vadd.f32 %v1387, %v1420
  %v1422 = vpop.f32.mrf.mxu0
  %v1423 = vadd.f32 %v1389, %v1422
  %1424 = vmatmul.bf16.gmra.mxu0 %v1058
  %v1425 = vpop.f32.mrf.mxu0
  %v1426 = vadd.f32 %v1392, %v1425
  %v1427 = vpop.f32.mrf.mxu0
  %v1428 = vadd.f32 %v1394, %v1427
  %1429 = vdwg.mxu0
  %1430 = vmatpush.bf16.msra.mxu0 %v1312
  %1431 = vmatpush.bf16.msra.mxu0 %v1310
  %1432 = vmatpush.bf16.msra.mxu0 %v1308
  %1433 = vmatpush.bf16.msra.mxu0 %v1306
  %1434 = vmatpush.bf16.msra.mxu0 %v1304
  %1435 = vmatpush.bf16.msra.mxu0 %v1302
  %1436 = vmatpush.bf16.msra.mxu0 %v1300
  %1437 = vmatpush.bf16.msra.mxu0 %v1298
  %1438 = vmatmul.bf16.gmra.mxu0 %v1043
  %v1439 = vpop.f32.mrf.mxu0
  %v1440 = vadd.f32 %v1406, %v1439
  %v1441 = vpop.f32.mrf.mxu0
  %v1442 = vadd.f32 %v1408, %v1441
  %1443 = vmatmul.bf16.gmra.mxu0 %v1044
  %v1444 = vpop.f32.mrf.mxu0
  %v1445 = vadd.f32 %v1411, %v1444
  %v1446 = vpop.f32.mrf.mxu0
  %v1447 = vadd.f32 %v1413, %v1446
  %1448 = vmatmul.bf16.gmra.mxu0 %v1045
  %v1449 = vpop.f32.mrf.mxu0
  %v1450 = vadd.f32 %v1416, %v1449
  %v1451 = vpop.f32.mrf.mxu0
  %v1452 = vadd.f32 %v1418, %v1451
  %1453 = vmatmul.bf16.gmra.mxu0 %v1046
  %v1454 = vpop.f32.mrf.mxu0
  %v1455 = vadd.f32 %v1421, %v1454
  %v1456 = vpop.f32.mrf.mxu0
  %v1457 = vadd.f32 %v1423, %v1456
  %1458 = vmatmul.bf16.gmra.mxu0 %v1066
  %v1459 = vpop.f32.mrf.mxu0
  %v1460 = vadd.f32 %v1426, %v1459
  %v1461 = vpop.f32.mrf.mxu0
  %v1462 = vadd.f32 %v1428, %v1461
  %1463 = vdwg.mxu0
  %1464 = vmatpush.bf16.msra.mxu0 %v1281
  %1465 = vmatpush.bf16.msra.mxu0 %v1279
  %1466 = vmatpush.bf16.msra.mxu0 %v1277
  %1467 = vmatpush.bf16.msra.mxu0 %v1275
  %1468 = vmatpush.bf16.msra.mxu0 %v1273
  %1469 = vmatpush.bf16.msra.mxu0 %v1271
  %1470 = vmatpush.bf16.msra.mxu0 %v1269
  %1471 = vmatpush.bf16.msra.mxu0 %v1267
  %1472 = vmatmul.bf16.gmra.mxu0 %v1042
  %v1473 = vpop.f32.mrf.mxu0
  %v1474 = vadd.f32 %v1119, %v1473
  %v1475 = vpop.f32.mrf.mxu0
  %v1476 = vadd.f32 %v1119, %v1475
  %1477 = vmatmul.bf16.gmra.mxu0 %v1043
  %v1478 = vpop.f32.mrf.mxu0
  %v1479 = vadd.f32 %v1119, %v1478
  %v1480 = vpop.f32.mrf.mxu0
  %v1481 = vadd.f32 %v1119, %v1480
  %1482 = vmatmul.bf16.gmra.mxu0 %v1044
  %v1483 = vpop.f32.mrf.mxu0
  %v1484 = vadd.f32 %v1119, %v1483
  %v1485 = vpop.f32.mrf.mxu0
  %v1486 = vadd.f32 %v1119, %v1485
  %1487 = vmatmul.bf16.gmra.mxu0 %v1045
  %v1488 = vpop.f32.mrf.mxu0
  %v1489 = vadd.f32 %v1119, %v1488
  %v1490 = vpop.f32.mrf.mxu0
  %v1491 = vadd.f32 %v1119, %v1490
  %1492 = vmatmul.bf16.gmra.mxu0 %v1046
  %v1493 = vpop.f32.mrf.mxu0
  %v1494 = vadd.f32 %v1119, %v1493
  %v1495 = vpop.f32.mrf.mxu0
  %v1496 = vadd.f32 %v1119, %v1495
  %1497 = vdwg.mxu0
  %1498 = vmatpush.bf16.msra.mxu0 %v1297
  %1499 = vmatpush.bf16.msra.mxu0 %v1295
  %1500 = vmatpush.bf16.msra.mxu0 %v1293
  %1501 = vmatpush.bf16.msra.mxu0 %v1291
  %1502 = vmatpush.bf16.msra.mxu0 %v1289
  %1503 = vmatpush.bf16.msra.mxu0 %v1287
  %1504 = vmatpush.bf16.msra.mxu0 %v1285
  %1505 = vmatpush.bf16.msra.mxu0 %v1283
  %1506 = vmatmul.bf16.gmra.mxu0 %v1054
  %v1507 = vpop.f32.mrf.mxu0
  %v1508 = vadd.f32 %v1474, %v1507
  %v1509 = vpop.f32.mrf.mxu0
  %v1510 = vadd.f32 %v1476, %v1509
  %1511 = vmatmul.bf16.gmra.mxu0 %v1055
  %v1512 = vpop.f32.mrf.mxu0
  %v1513 = vadd.f32 %v1479, %v1512
  %v1514 = vpop.f32.mrf.mxu0
  %v1515 = vadd.f32 %v1481, %v1514
  %1516 = vmatmul.bf16.gmra.mxu0 %v1056
  %v1517 = vpop.f32.mrf.mxu0
  %v1518 = vadd.f32 %v1484, %v1517
  %v1519 = vpop.f32.mrf.mxu0
  %v1520 = vadd.f32 %v1486, %v1519
  %1521 = vmatmul.bf16.gmra.mxu0 %v1057
  %v1522 = vpop.f32.mrf.mxu0
  %v1523 = vadd.f32 %v1489, %v1522
  %v1524 = vpop.f32.mrf.mxu0
  %v1525 = vadd.f32 %v1491, %v1524
  %1526 = vmatmul.bf16.gmra.mxu0 %v1058
  %v1527 = vpop.f32.mrf.mxu0
  %v1528 = vadd.f32 %v1494, %v1527
  %v1529 = vpop.f32.mrf.mxu0
  %v1530 = vadd.f32 %v1496, %v1529
  %1531 = vdwg.mxu0
  %1532 = vmatpush.bf16.msra.mxu0 %v1313
  %1533 = vmatpush.bf16.msra.mxu0 %v1311
  %1534 = vmatpush.bf16.msra.mxu0 %v1309
  %1535 = vmatpush.bf16.msra.mxu0 %v1307
  %1536 = vmatpush.bf16.msra.mxu0 %v1305
  %1537 = vmatpush.bf16.msra.mxu0 %v1303
  %1538 = vmatpush.bf16.msra.mxu0 %v1301
  %1539 = vmatpush.bf16.msra.mxu0 %v1299
  %1540 = vmatmul.bf16.gmra.mxu0 %v1043
  %v1541 = vpop.f32.mrf.mxu0
  %v1542 = vadd.f32 %v1508, %v1541
  %v1543 = vpop.f32.mrf.mxu0
  %v1544 = vadd.f32 %v1510, %v1543
  %1545 = vmatmul.bf16.gmra.mxu0 %v1044
  %v1546 = vpop.f32.mrf.mxu0
  %v1547 = vadd.f32 %v1513, %v1546
  %v1548 = vpop.f32.mrf.mxu0
  %v1549 = vadd.f32 %v1515, %v1548
  %1550 = vmatmul.bf16.gmra.mxu0 %v1045
  %v1551 = vpop.f32.mrf.mxu0
  %v1552 = vadd.f32 %v1518, %v1551
  %v1553 = vpop.f32.mrf.mxu0
  %v1554 = vadd.f32 %v1520, %v1553
  %1555 = vmatmul.bf16.gmra.mxu0 %v1046
  %v1556 = vpop.f32.mrf.mxu0
  %v1557 = vadd.f32 %v1523, %v1556
  %v1558 = vpop.f32.mrf.mxu0
  %v1559 = vadd.f32 %v1525, %v1558
  %1560 = vmatmul.bf16.gmra.mxu0 %v1066
  %v1561 = vpop.f32.mrf.mxu0
  %v1562 = vadd.f32 %v1528, %v1561
  %v1563 = vpop.f32.mrf.mxu0
  %v1564 = vadd.f32 %v1530, %v1563
  %1565 = vdwg.mxu0
  %v1566 = vmax.f32 %v1440, 0.0
  %v1567 = vmax.f32 %v1542, 0.0
  %v1568 = vmax.f32 %v1442, 0.0
  %v1569 = vmax.f32 %v1544, 0.0
  %v1570 = vmax.f32 %v1445, 0.0
  %v1571 = vmax.f32 %v1547, 0.0
  %v1572 = vmax.f32 %v1447, 0.0
  %v1573 = vmax.f32 %v1549, 0.0
  %v1574 = vmax.f32 %v1450, 0.0
  %v1575 = vmax.f32 %v1552, 0.0
  %v1576 = vmax.f32 %v1452, 0.0
  %v1577 = vmax.f32 %v1554, 0.0
  %v1578 = vmax.f32 %v1455, 0.0
  %v1579 = vmax.f32 %v1557, 0.0
  %v1580 = vmax.f32 %v1457, 0.0
  %v1581 = vmax.f32 %v1559, 0.0
  %v1582 = vmax.f32 %v1460, 0.0
  %v1583 = vmax.f32 %v1562, 0.0
  %v1584 = vmax.f32 %v1462, 0.0
  %v1585 = vmax.f32 %v1564, 0.0
  %v1586 = vpack.c.bf16 %v1567, %v1566
  %v1587 = vpack.c.bf16 %v1569, %v1568
  %v1588 = vpack.c.bf16 %v1571, %v1570
  %v1589 = vpack.c.bf16 %v1573, %v1572
  %v1590 = vpack.c.bf16 %v1575, %v1574
  %v1591 = vpack.c.bf16 %v1577, %v1576
  %v1592 = vpack.c.bf16 %v1579, %v1578
  %v1593 = vpack.c.bf16 %v1581, %v1580
  %v1594 = vpack.c.bf16 %v1583, %v1582
  %v1595 = vpack.c.bf16 %v1585, %v1584
  %v1596 = vld [vmem:[%s5] sm:$0xf]
  %v1597 = vld [vmem:[%s5 + $0x4] sm:$0xf]
  %v1598 = vld [vmem:[%s5 + $0x8] sm:$0xf]
  %v1599 = vld [vmem:[%s5 + $0xc] sm:$0xf]
  %v1600 = vld [vmem:[%s5 + $0x10] sm:$0xf]
  %v1601 = vld [vmem:[%s5 + $0x14] sm:$0xf]
  %v1602 = vld [vmem:[%s5 + $0x18] sm:$0xf]
  %v1603 = vld [vmem:[%s5 + $0x1c] sm:$0xf]
  %v1604 = vld [vmem:[%s5 + $0x20] sm:$0xf]
  %v1605 = vld [vmem:[%s5 + $0x24] sm:$0xf]
  %v1606 = vld [vmem:[%s5 + $0x28] sm:$0xf]
  %v1607 = vld [vmem:[%s5 + $0x2c] sm:$0xf]
  %v1608 = vld [vmem:[%s5 + $0x30] sm:$0xf]
  %v1609 = vld [vmem:[%s5 + $0x34] sm:$0xf]
  %v1610 = vld [vmem:[%s5 + $0x38] sm:$0xf]
  %v1611 = vld [vmem:[%s5 + $0x3c] sm:$0xf]
  %v1612 = vld [vmem:[%s5 + $0x40] sm:$0xf]
  %v1613 = vld [vmem:[%s5 + $0x44] sm:$0xf]
  %v1614 = vld [vmem:[%s5 + $0x48] sm:$0xf]
  %v1615 = vld [vmem:[%s5 + $0x4c] sm:$0xf]
  %v1616 = vld [vmem:[%s5 + $0x50] sm:$0xf]
  %v1617 = vld [vmem:[%s5 + $0x54] sm:$0xf]
  %v1618 = vld [vmem:[%s5 + $0x58] sm:$0xf]
  %v1619 = vld [vmem:[%s5 + $0x5c] sm:$0xf]
  %v1620 = vld [vmem:[%s5 + $0x60] sm:$0xf]
  %v1621 = vld [vmem:[%s5 + $0x64] sm:$0xf]
  %v1622 = vld [vmem:[%s5 + $0x68] sm:$0xf]
  %v1623 = vld [vmem:[%s5 + $0x6c] sm:$0xf]
  %v1624 = vld [vmem:[%s5 + $0x70] sm:$0xf]
  %v1625 = vld [vmem:[%s5 + $0x74] sm:$0xf]
  %v1626 = vld [vmem:[%s5 + $0x78] sm:$0xf]
  %v1627 = vld [vmem:[%s5 + $0x7c] sm:$0xf]
  %s1628 = scalar_lea.vmem %s5, 128
  %v1629 = vld [vmem:[%s1628] sm:$0xf]
  %v1630 = vld [vmem:[%s1628 + $0x4] sm:$0xf]
  %v1631 = vld [vmem:[%s1628 + $0x8] sm:$0xf]
  %v1632 = vld [vmem:[%s1628 + $0xc] sm:$0xf]
  %v1633 = vld [vmem:[%s1628 + $0x10] sm:$0xf]
  %v1634 = vld [vmem:[%s1628 + $0x14] sm:$0xf]
  %v1635 = vld [vmem:[%s1628 + $0x18] sm:$0xf]
  %v1636 = vld [vmem:[%s1628 + $0x1c] sm:$0xf]
  %v1637 = vld [vmem:[%s1628 + $0x20] sm:$0xf]
  %v1638 = vld [vmem:[%s1628 + $0x24] sm:$0xf]
  %v1639 = vld [vmem:[%s1628 + $0x28] sm:$0xf]
  %v1640 = vld [vmem:[%s1628 + $0x2c] sm:$0xf]
  %v1641 = vld [vmem:[%s1628 + $0x30] sm:$0xf]
  %v1642 = vld [vmem:[%s1628 + $0x34] sm:$0xf]
  %v1643 = vld [vmem:[%s1628 + $0x38] sm:$0xf]
  %v1644 = vld [vmem:[%s1628 + $0x3c] sm:$0xf]
  %v1645 = vld [vmem:[%s1628 + $0x40] sm:$0xf]
  %v1646 = vld [vmem:[%s1628 + $0x44] sm:$0xf]
  %v1647 = vld [vmem:[%s1628 + $0x48] sm:$0xf]
  %v1648 = vld [vmem:[%s1628 + $0x4c] sm:$0xf]
  %v1649 = vld [vmem:[%s1628 + $0x50] sm:$0xf]
  %v1650 = vld [vmem:[%s1628 + $0x54] sm:$0xf]
  %v1651 = vld [vmem:[%s1628 + $0x58] sm:$0xf]
  %v1652 = vld [vmem:[%s1628 + $0x5c] sm:$0xf]
  %v1653 = vld [vmem:[%s1628 + $0x60] sm:$0xf]
  %v1654 = vld [vmem:[%s1628 + $0x64] sm:$0xf]
  %v1655 = vld [vmem:[%s1628 + $0x68] sm:$0xf]
  %v1656 = vld [vmem:[%s1628 + $0x6c] sm:$0xf]
  %v1657 = vld [vmem:[%s1628 + $0x70] sm:$0xf]
  %v1658 = vld [vmem:[%s1628 + $0x74] sm:$0xf]
  %v1659 = vld [vmem:[%s1628 + $0x78] sm:$0xf]
  %v1660 = vld [vmem:[%s1628 + $0x7c] sm:$0xf]
  %v1662 = vunpack.c.l.b16 %v1587
  %v1663 = vunpack.c.h.b16 %v1587
  %v1664 = vpack.c.b16 %v1662, %v1662
  %v1665 = vpack.c.b16 %v1663, %v1663
  %v1700 = vunpack.c.l.b16 %v1629
  %v1701 = vunpack.c.l.b16 %v1630
  %v1702 = vunpack.c.l.b16 %v1631
  %v1703 = vunpack.c.l.b16 %v1632
  %v1704 = vunpack.c.l.b16 %v1633
  %v1705 = vunpack.c.l.b16 %v1634
  %v1706 = vunpack.c.l.b16 %v1635
  %v1707 = vunpack.c.l.b16 %v1636
  %v1708 = vunpack.c.l.b16 %v1637
  %v1709 = vunpack.c.l.b16 %v1638
  %v1710 = vunpack.c.l.b16 %v1639
  %v1711 = vunpack.c.l.b16 %v1640
  %v1712 = vunpack.c.l.b16 %v1641
  %v1713 = vunpack.c.l.b16 %v1642
  %v1714 = vunpack.c.l.b16 %v1643
  %v1715 = vunpack.c.l.b16 %v1644
  %v1716 = vunpack.c.l.b16 %v1645
  %v1717 = vunpack.c.l.b16 %v1646
  %v1718 = vunpack.c.l.b16 %v1647
  %v1719 = vunpack.c.l.b16 %v1648
  %v1720 = vunpack.c.l.b16 %v1649
  %v1721 = vunpack.c.l.b16 %v1650
  %v1722 = vunpack.c.l.b16 %v1651
  %v1723 = vunpack.c.l.b16 %v1652
  %v1724 = vunpack.c.l.b16 %v1653
  %v1725 = vunpack.c.l.b16 %v1654
  %v1726 = vunpack.c.l.b16 %v1655
  %v1727 = vunpack.c.l.b16 %v1656
  %v1728 = vunpack.c.l.b16 %v1657
  %v1729 = vunpack.c.l.b16 %v1658
  %v1730 = vunpack.c.l.b16 %v1659
  %v1731 = vunpack.c.l.b16 %v1660
  %v1732 = vpack.c.b16 %v1701, %v1700
  %v1733 = vpack.c.b16 %v1703, %v1702
  %v1734 = vpack.c.b16 %v1705, %v1704
  %v1735 = vpack.c.b16 %v1707, %v1706
  %v1736 = vpack.c.b16 %v1709, %v1708
  %v1737 = vpack.c.b16 %v1711, %v1710
  %v1738 = vpack.c.b16 %v1713, %v1712
  %v1739 = vpack.c.b16 %v1715, %v1714
  %v1740 = vpack.c.b16 %v1717, %v1716
  %v1741 = vpack.c.b16 %v1719, %v1718
  %v1742 = vpack.c.b16 %v1721, %v1720
  %v1743 = vpack.c.b16 %v1723, %v1722
  %v1744 = vpack.c.b16 %v1725, %v1724
  %v1745 = vpack.c.b16 %v1727, %v1726
  %v1746 = vpack.c.b16 %v1729, %v1728
  %v1747 = vpack.c.b16 %v1731, %v1730
  %1764 = vmatpush.bf16.msra.mxu0 %v1739
  %1765 = vmatpush.bf16.msra.mxu0 %v1738
  %1766 = vmatpush.bf16.msra.mxu0 %v1737
  %1767 = vmatpush.bf16.msra.mxu0 %v1736
  %1768 = vmatpush.bf16.msra.mxu0 %v1735
  %1769 = vmatpush.bf16.msra.mxu0 %v1734
  %1770 = vmatpush.bf16.msra.mxu0 %v1733
  %1771 = vmatpush.bf16.msra.mxu0 %v1732
  %1772 = vmatmul.bf16.gmra.mxu0 %v1664
  %v1773 = vpop.f32.mrf.mxu0
  %v1774 = vadd.f32 0.0, %v1773
  %v1775 = vpop.f32.mrf.mxu0
  %1776 = vdwg.mxu0
  %1777 = vmatpush.bf16.msra.mxu0 %v1747
  %1778 = vmatpush.bf16.msra.mxu0 %v1746
  %1779 = vmatpush.bf16.msra.mxu0 %v1745
  %1780 = vmatpush.bf16.msra.mxu0 %v1744
  %1781 = vmatpush.bf16.msra.mxu0 %v1743
  %1782 = vmatpush.bf16.msra.mxu0 %v1742
  %1783 = vmatpush.bf16.msra.mxu0 %v1741
  %1784 = vmatpush.bf16.msra.mxu0 %v1740
  %1785 = vmatmul.bf16.gmra.mxu0 %v1665
  %v1786 = vpop.f32.mrf.mxu0
  %v1787 = vadd.f32 %v1774, %v1786
  %v1788 = vpop.f32.mrf.mxu0
  %1789 = vdwg.mxu0
  %v1791 = vunpack.c.l.b16 %v1586
  %v1792 = vunpack.c.h.b16 %v1586
  %v1793 = vpack.c.b16 %v1791, %v1791
  %v1794 = vpack.c.b16 %v1792, %v1792
  %v1829 = vunpack.c.l.b16 %v1596
  %v1830 = vunpack.c.l.b16 %v1597
  %v1831 = vunpack.c.l.b16 %v1598
  %v1832 = vunpack.c.l.b16 %v1599
  %v1833 = vunpack.c.l.b16 %v1600
  %v1834 = vunpack.c.l.b16 %v1601
  %v1835 = vunpack.c.l.b16 %v1602
  %v1836 = vunpack.c.l.b16 %v1603
  %v1837 = vunpack.c.l.b16 %v1604
  %v1838 = vunpack.c.l.b16 %v1605
  %v1839 = vunpack.c.l.b16 %v1606
  %v1840 = vunpack.c.l.b16 %v1607
  %v1841 = vunpack.c.l.b16 %v1608
  %v1842 = vunpack.c.l.b16 %v1609
  %v1843 = vunpack.c.l.b16 %v1610
  %v1844 = vunpack.c.l.b16 %v1611
  %v1845 = vunpack.c.l.b16 %v1612
  %v1846 = vunpack.c.l.b16 %v1613
  %v1847 = vunpack.c.l.b16 %v1614
  %v1848 = vunpack.c.l.b16 %v1615
  %v1849 = vunpack.c.l.b16 %v1616
  %v1850 = vunpack.c.l.b16 %v1617
  %v1851 = vunpack.c.l.b16 %v1618
  %v1852 = vunpack.c.l.b16 %v1619
  %v1853 = vunpack.c.l.b16 %v1620
  %v1854 = vunpack.c.l.b16 %v1621
  %v1855 = vunpack.c.l.b16 %v1622
  %v1856 = vunpack.c.l.b16 %v1623
  %v1857 = vunpack.c.l.b16 %v1624
  %v1858 = vunpack.c.l.b16 %v1625
  %v1859 = vunpack.c.l.b16 %v1626
  %v1860 = vunpack.c.l.b16 %v1627
  %v1861 = vpack.c.b16 %v1830, %v1829
  %v1862 = vpack.c.b16 %v1832, %v1831
  %v1863 = vpack.c.b16 %v1834, %v1833
  %v1864 = vpack.c.b16 %v1836, %v1835
  %v1865 = vpack.c.b16 %v1838, %v1837
  %v1866 = vpack.c.b16 %v1840, %v1839
  %v1867 = vpack.c.b16 %v1842, %v1841
  %v1868 = vpack.c.b16 %v1844, %v1843
  %v1869 = vpack.c.b16 %v1846, %v1845
  %v1870 = vpack.c.b16 %v1848, %v1847
  %v1871 = vpack.c.b16 %v1850, %v1849
  %v1872 = vpack.c.b16 %v1852, %v1851
  %v1873 = vpack.c.b16 %v1854, %v1853
  %v1874 = vpack.c.b16 %v1856, %v1855
  %v1875 = vpack.c.b16 %v1858, %v1857
  %v1876 = vpack.c.b16 %v1860, %v1859
  %1893 = vmatpush.bf16.msra.mxu0 %v1868
  %1894 = vmatpush.bf16.msra.mxu0 %v1867
  %1895 = vmatpush.bf16.msra.mxu0 %v1866
  %1896 = vmatpush.bf16.msra.mxu0 %v1865
  %1897 = vmatpush.bf16.msra.mxu0 %v1864
  %1898 = vmatpush.bf16.msra.mxu0 %v1863
  %1899 = vmatpush.bf16.msra.mxu0 %v1862
  %1900 = vmatpush.bf16.msra.mxu0 %v1861
  %1901 = vmatmul.bf16.gmra.mxu0 %v1793
  %v1902 = vpop.f32.mrf.mxu0
  %v1903 = vadd.f32 %v1787, %v1902
  %v1904 = vpop.f32.mrf.mxu0
  %1905 = vdwg.mxu0
  %1906 = vmatpush.bf16.msra.mxu0 %v1876
  %1907 = vmatpush.bf16.msra.mxu0 %v1875
  %1908 = vmatpush.bf16.msra.mxu0 %v1874
  %1909 = vmatpush.bf16.msra.mxu0 %v1873
  %1910 = vmatpush.bf16.msra.mxu0 %v1872
  %1911 = vmatpush.bf16.msra.mxu0 %v1871
  %1912 = vmatpush.bf16.msra.mxu0 %v1870
  %1913 = vmatpush.bf16.msra.mxu0 %v1869
  %1914 = vmatmul.bf16.gmra.mxu0 %v1794
  %v1915 = vpop.f32.mrf.mxu0
  %v1916 = vadd.f32 %v1903, %v1915
  %v1917 = vpop.f32.mrf.mxu0
  %1918 = vdwg.mxu0
  %s1919 = scalar_lea.vmem %s5, 256
  %v1920 = vld [vmem:[%s1919] sm:$0xf]
  %v1921 = vld [vmem:[%s1919 + $0x4] sm:$0xf]
  %v1922 = vld [vmem:[%s1919 + $0x8] sm:$0xf]
  %v1923 = vld [vmem:[%s1919 + $0xc] sm:$0xf]
  %v1924 = vld [vmem:[%s1919 + $0x10] sm:$0xf]
  %v1925 = vld [vmem:[%s1919 + $0x14] sm:$0xf]
  %v1926 = vld [vmem:[%s1919 + $0x18] sm:$0xf]
  %v1927 = vld [vmem:[%s1919 + $0x1c] sm:$0xf]
  %v1928 = vld [vmem:[%s1919 + $0x20] sm:$0xf]
  %v1929 = vld [vmem:[%s1919 + $0x24] sm:$0xf]
  %v1930 = vld [vmem:[%s1919 + $0x28] sm:$0xf]
  %v1931 = vld [vmem:[%s1919 + $0x2c] sm:$0xf]
  %v1932 = vld [vmem:[%s1919 + $0x30] sm:$0xf]
  %v1933 = vld [vmem:[%s1919 + $0x34] sm:$0xf]
  %v1934 = vld [vmem:[%s1919 + $0x38] sm:$0xf]
  %v1935 = vld [vmem:[%s1919 + $0x3c] sm:$0xf]
  %v1936 = vld [vmem:[%s1919 + $0x40] sm:$0xf]
  %v1937 = vld [vmem:[%s1919 + $0x44] sm:$0xf]
  %v1938 = vld [vmem:[%s1919 + $0x48] sm:$0xf]
  %v1939 = vld [vmem:[%s1919 + $0x4c] sm:$0xf]
  %v1940 = vld [vmem:[%s1919 + $0x50] sm:$0xf]
  %v1941 = vld [vmem:[%s1919 + $0x54] sm:$0xf]
  %v1942 = vld [vmem:[%s1919 + $0x58] sm:$0xf]
  %v1943 = vld [vmem:[%s1919 + $0x5c] sm:$0xf]
  %v1944 = vld [vmem:[%s1919 + $0x60] sm:$0xf]
  %v1945 = vld [vmem:[%s1919 + $0x64] sm:$0xf]
  %v1946 = vld [vmem:[%s1919 + $0x68] sm:$0xf]
  %v1947 = vld [vmem:[%s1919 + $0x6c] sm:$0xf]
  %v1948 = vld [vmem:[%s1919 + $0x70] sm:$0xf]
  %v1949 = vld [vmem:[%s1919 + $0x74] sm:$0xf]
  %v1950 = vld [vmem:[%s1919 + $0x78] sm:$0xf]
  %v1951 = vld [vmem:[%s1919 + $0x7c] sm:$0xf]
  %v1953 = vunpack.c.l.b16 %v1588
  %v1954 = vunpack.c.h.b16 %v1588
  %v1955 = vpack.c.b16 %v1953, %v1953
  %v1956 = vpack.c.b16 %v1954, %v1954
  %v1991 = vunpack.c.l.b16 %v1920
  %v1992 = vunpack.c.l.b16 %v1921
  %v1993 = vunpack.c.l.b16 %v1922
  %v1994 = vunpack.c.l.b16 %v1923
  %v1995 = vunpack.c.l.b16 %v1924
  %v1996 = vunpack.c.l.b16 %v1925
  %v1997 = vunpack.c.l.b16 %v1926
  %v1998 = vunpack.c.l.b16 %v1927
  %v1999 = vunpack.c.l.b16 %v1928
  %v2000 = vunpack.c.l.b16 %v1929
  %v2001 = vunpack.c.l.b16 %v1930
  %v2002 = vunpack.c.l.b16 %v1931
  %v2003 = vunpack.c.l.b16 %v1932
  %v2004 = vunpack.c.l.b16 %v1933
  %v2005 = vunpack.c.l.b16 %v1934
  %v2006 = vunpack.c.l.b16 %v1935
  %v2007 = vunpack.c.l.b16 %v1936
  %v2008 = vunpack.c.l.b16 %v1937
  %v2009 = vunpack.c.l.b16 %v1938
  %v2010 = vunpack.c.l.b16 %v1939
  %v2011 = vunpack.c.l.b16 %v1940
  %v2012 = vunpack.c.l.b16 %v1941
  %v2013 = vunpack.c.l.b16 %v1942
  %v2014 = vunpack.c.l.b16 %v1943
  %v2015 = vunpack.c.l.b16 %v1944
  %v2016 = vunpack.c.l.b16 %v1945
  %v2017 = vunpack.c.l.b16 %v1946
  %v2018 = vunpack.c.l.b16 %v1947
  %v2019 = vunpack.c.l.b16 %v1948
  %v2020 = vunpack.c.l.b16 %v1949
  %v2021 = vunpack.c.l.b16 %v1950
  %v2022 = vunpack.c.l.b16 %v1951
  %v2023 = vpack.c.b16 %v1992, %v1991
  %v2024 = vpack.c.b16 %v1994, %v1993
  %v2025 = vpack.c.b16 %v1996, %v1995
  %v2026 = vpack.c.b16 %v1998, %v1997
  %v2027 = vpack.c.b16 %v2000, %v1999
  %v2028 = vpack.c.b16 %v2002, %v2001
  %v2029 = vpack.c.b16 %v2004, %v2003
  %v2030 = vpack.c.b16 %v2006, %v2005
  %v2031 = vpack.c.b16 %v2008, %v2007
  %v2032 = vpack.c.b16 %v2010, %v2009
  %v2033 = vpack.c.b16 %v2012, %v2011
  %v2034 = vpack.c.b16 %v2014, %v2013
  %v2035 = vpack.c.b16 %v2016, %v2015
  %v2036 = vpack.c.b16 %v2018, %v2017
  %v2037 = vpack.c.b16 %v2020, %v2019
  %v2038 = vpack.c.b16 %v2022, %v2021
  %2055 = vmatpush.bf16.msra.mxu0 %v2030
  %2056 = vmatpush.bf16.msra.mxu0 %v2029
  %2057 = vmatpush.bf16.msra.mxu0 %v2028
  %2058 = vmatpush.bf16.msra.mxu0 %v2027
  %2059 = vmatpush.bf16.msra.mxu0 %v2026
  %2060 = vmatpush.bf16.msra.mxu0 %v2025
  %2061 = vmatpush.bf16.msra.mxu0 %v2024
  %2062 = vmatpush.bf16.msra.mxu0 %v2023
  %2063 = vmatmul.bf16.gmra.mxu0 %v1955
  %v2064 = vpop.f32.mrf.mxu0
  %v2065 = vadd.f32 0.0, %v2064
  %v2066 = vpop.f32.mrf.mxu0
  %2067 = vdwg.mxu0
  %2068 = vmatpush.bf16.msra.mxu0 %v2038
  %2069 = vmatpush.bf16.msra.mxu0 %v2037
  %2070 = vmatpush.bf16.msra.mxu0 %v2036
  %2071 = vmatpush.bf16.msra.mxu0 %v2035
  %2072 = vmatpush.bf16.msra.mxu0 %v2034
  %2073 = vmatpush.bf16.msra.mxu0 %v2033
  %2074 = vmatpush.bf16.msra.mxu0 %v2032
  %2075 = vmatpush.bf16.msra.mxu0 %v2031
  %2076 = vmatmul.bf16.gmra.mxu0 %v1956
  %v2077 = vpop.f32.mrf.mxu0
  %v2078 = vadd.f32 %v2065, %v2077
  %v2079 = vpop.f32.mrf.mxu0
  %2080 = vdwg.mxu0
  %v2081 = vadd.f32 %v1916, %v2078
  %s2082 = scalar_lea.vmem %s5, 384
  %v2083 = vld [vmem:[%s2082] sm:$0xf]
  %v2084 = vld [vmem:[%s2082 + $0x4] sm:$0xf]
  %v2085 = vld [vmem:[%s2082 + $0x8] sm:$0xf]
  %v2086 = vld [vmem:[%s2082 + $0xc] sm:$0xf]
  %v2087 = vld [vmem:[%s2082 + $0x10] sm:$0xf]
  %v2088 = vld [vmem:[%s2082 + $0x14] sm:$0xf]
  %v2089 = vld [vmem:[%s2082 + $0x18] sm:$0xf]
  %v2090 = vld [vmem:[%s2082 + $0x1c] sm:$0xf]
  %v2091 = vld [vmem:[%s2082 + $0x20] sm:$0xf]
  %v2092 = vld [vmem:[%s2082 + $0x24] sm:$0xf]
  %v2093 = vld [vmem:[%s2082 + $0x28] sm:$0xf]
  %v2094 = vld [vmem:[%s2082 + $0x2c] sm:$0xf]
  %v2095 = vld [vmem:[%s2082 + $0x30] sm:$0xf]
  %v2096 = vld [vmem:[%s2082 + $0x34] sm:$0xf]
  %v2097 = vld [vmem:[%s2082 + $0x38] sm:$0xf]
  %v2098 = vld [vmem:[%s2082 + $0x3c] sm:$0xf]
  %v2099 = vld [vmem:[%s2082 + $0x40] sm:$0xf]
  %v2100 = vld [vmem:[%s2082 + $0x44] sm:$0xf]
  %v2101 = vld [vmem:[%s2082 + $0x48] sm:$0xf]
  %v2102 = vld [vmem:[%s2082 + $0x4c] sm:$0xf]
  %v2103 = vld [vmem:[%s2082 + $0x50] sm:$0xf]
  %v2104 = vld [vmem:[%s2082 + $0x54] sm:$0xf]
  %v2105 = vld [vmem:[%s2082 + $0x58] sm:$0xf]
  %v2106 = vld [vmem:[%s2082 + $0x5c] sm:$0xf]
  %v2107 = vld [vmem:[%s2082 + $0x60] sm:$0xf]
  %v2108 = vld [vmem:[%s2082 + $0x64] sm:$0xf]
  %v2109 = vld [vmem:[%s2082 + $0x68] sm:$0xf]
  %v2110 = vld [vmem:[%s2082 + $0x6c] sm:$0xf]
  %v2111 = vld [vmem:[%s2082 + $0x70] sm:$0xf]
  %v2112 = vld [vmem:[%s2082 + $0x74] sm:$0xf]
  %v2113 = vld [vmem:[%s2082 + $0x78] sm:$0xf]
  %v2114 = vld [vmem:[%s2082 + $0x7c] sm:$0xf]
  %v2116 = vunpack.c.l.b16 %v1589
  %v2117 = vunpack.c.h.b16 %v1589
  %v2118 = vpack.c.b16 %v2116, %v2116
  %v2119 = vpack.c.b16 %v2117, %v2117
  %v2154 = vunpack.c.l.b16 %v2083
  %v2155 = vunpack.c.l.b16 %v2084
  %v2156 = vunpack.c.l.b16 %v2085
  %v2157 = vunpack.c.l.b16 %v2086
  %v2158 = vunpack.c.l.b16 %v2087
  %v2159 = vunpack.c.l.b16 %v2088
  %v2160 = vunpack.c.l.b16 %v2089
  %v2161 = vunpack.c.l.b16 %v2090
  %v2162 = vunpack.c.l.b16 %v2091
  %v2163 = vunpack.c.l.b16 %v2092
  %v2164 = vunpack.c.l.b16 %v2093
  %v2165 = vunpack.c.l.b16 %v2094
  %v2166 = vunpack.c.l.b16 %v2095
  %v2167 = vunpack.c.l.b16 %v2096
  %v2168 = vunpack.c.l.b16 %v2097
  %v2169 = vunpack.c.l.b16 %v2098
  %v2170 = vunpack.c.l.b16 %v2099
  %v2171 = vunpack.c.l.b16 %v2100
  %v2172 = vunpack.c.l.b16 %v2101
  %v2173 = vunpack.c.l.b16 %v2102
  %v2174 = vunpack.c.l.b16 %v2103
  %v2175 = vunpack.c.l.b16 %v2104
  %v2176 = vunpack.c.l.b16 %v2105
  %v2177 = vunpack.c.l.b16 %v2106
  %v2178 = vunpack.c.l.b16 %v2107
  %v2179 = vunpack.c.l.b16 %v2108
  %v2180 = vunpack.c.l.b16 %v2109
  %v2181 = vunpack.c.l.b16 %v2110
  %v2182 = vunpack.c.l.b16 %v2111
  %v2183 = vunpack.c.l.b16 %v2112
  %v2184 = vunpack.c.l.b16 %v2113
  %v2185 = vunpack.c.l.b16 %v2114
  %v2186 = vpack.c.b16 %v2155, %v2154
  %v2187 = vpack.c.b16 %v2157, %v2156
  %v2188 = vpack.c.b16 %v2159, %v2158
  %v2189 = vpack.c.b16 %v2161, %v2160
  %v2190 = vpack.c.b16 %v2163, %v2162
  %v2191 = vpack.c.b16 %v2165, %v2164
  %v2192 = vpack.c.b16 %v2167, %v2166
  %v2193 = vpack.c.b16 %v2169, %v2168
  %v2194 = vpack.c.b16 %v2171, %v2170
  %v2195 = vpack.c.b16 %v2173, %v2172
  %v2196 = vpack.c.b16 %v2175, %v2174
  %v2197 = vpack.c.b16 %v2177, %v2176
  %v2198 = vpack.c.b16 %v2179, %v2178
  %v2199 = vpack.c.b16 %v2181, %v2180
  %v2200 = vpack.c.b16 %v2183, %v2182
  %v2201 = vpack.c.b16 %v2185, %v2184
  %2218 = vmatpush.bf16.msra.mxu0 %v2193
  %2219 = vmatpush.bf16.msra.mxu0 %v2192
  %2220 = vmatpush.bf16.msra.mxu0 %v2191
  %2221 = vmatpush.bf16.msra.mxu0 %v2190
  %2222 = vmatpush.bf16.msra.mxu0 %v2189
  %2223 = vmatpush.bf16.msra.mxu0 %v2188
  %2224 = vmatpush.bf16.msra.mxu0 %v2187
  %2225 = vmatpush.bf16.msra.mxu0 %v2186
  %2226 = vmatmul.bf16.gmra.mxu0 %v2118
  %v2227 = vpop.f32.mrf.mxu0
  %v2228 = vadd.f32 0.0, %v2227
  %v2229 = vpop.f32.mrf.mxu0
  %2230 = vdwg.mxu0
  %2231 = vmatpush.bf16.msra.mxu0 %v2201
  %2232 = vmatpush.bf16.msra.mxu0 %v2200
  %2233 = vmatpush.bf16.msra.mxu0 %v2199
  %2234 = vmatpush.bf16.msra.mxu0 %v2198
  %2235 = vmatpush.bf16.msra.mxu0 %v2197
  %2236 = vmatpush.bf16.msra.mxu0 %v2196
  %2237 = vmatpush.bf16.msra.mxu0 %v2195
  %2238 = vmatpush.bf16.msra.mxu0 %v2194
  %2239 = vmatmul.bf16.gmra.mxu0 %v2119
  %v2240 = vpop.f32.mrf.mxu0
  %v2241 = vadd.f32 %v2228, %v2240
  %v2242 = vpop.f32.mrf.mxu0
  %2243 = vdwg.mxu0
  %v2244 = vadd.f32 %v2081, %v2241
  %s2245 = scalar_lea.vmem %s5, 512
  %v2246 = vld [vmem:[%s2245] sm:$0xf]
  %v2247 = vld [vmem:[%s2245 + $0x4] sm:$0xf]
  %v2248 = vld [vmem:[%s2245 + $0x8] sm:$0xf]
  %v2249 = vld [vmem:[%s2245 + $0xc] sm:$0xf]
  %v2250 = vld [vmem:[%s2245 + $0x10] sm:$0xf]
  %v2251 = vld [vmem:[%s2245 + $0x14] sm:$0xf]
  %v2252 = vld [vmem:[%s2245 + $0x18] sm:$0xf]
  %v2253 = vld [vmem:[%s2245 + $0x1c] sm:$0xf]
  %v2254 = vld [vmem:[%s2245 + $0x20] sm:$0xf]
  %v2255 = vld [vmem:[%s2245 + $0x24] sm:$0xf]
  %v2256 = vld [vmem:[%s2245 + $0x28] sm:$0xf]
  %v2257 = vld [vmem:[%s2245 + $0x2c] sm:$0xf]
  %v2258 = vld [vmem:[%s2245 + $0x30] sm:$0xf]
  %v2259 = vld [vmem:[%s2245 + $0x34] sm:$0xf]
  %v2260 = vld [vmem:[%s2245 + $0x38] sm:$0xf]
  %v2261 = vld [vmem:[%s2245 + $0x3c] sm:$0xf]
  %v2262 = vld [vmem:[%s2245 + $0x40] sm:$0xf]
  %v2263 = vld [vmem:[%s2245 + $0x44] sm:$0xf]
  %v2264 = vld [vmem:[%s2245 + $0x48] sm:$0xf]
  %v2265 = vld [vmem:[%s2245 + $0x4c] sm:$0xf]
  %v2266 = vld [vmem:[%s2245 + $0x50] sm:$0xf]
  %v2267 = vld [vmem:[%s2245 + $0x54] sm:$0xf]
  %v2268 = vld [vmem:[%s2245 + $0x58] sm:$0xf]
  %v2269 = vld [vmem:[%s2245 + $0x5c] sm:$0xf]
  %v2270 = vld [vmem:[%s2245 + $0x60] sm:$0xf]
  %v2271 = vld [vmem:[%s2245 + $0x64] sm:$0xf]
  %v2272 = vld [vmem:[%s2245 + $0x68] sm:$0xf]
  %v2273 = vld [vmem:[%s2245 + $0x6c] sm:$0xf]
  %v2274 = vld [vmem:[%s2245 + $0x70] sm:$0xf]
  %v2275 = vld [vmem:[%s2245 + $0x74] sm:$0xf]
  %v2276 = vld [vmem:[%s2245 + $0x78] sm:$0xf]
  %v2277 = vld [vmem:[%s2245 + $0x7c] sm:$0xf]
  %v2279 = vunpack.c.l.b16 %v1590
  %v2280 = vunpack.c.h.b16 %v1590
  %v2281 = vpack.c.b16 %v2279, %v2279
  %v2282 = vpack.c.b16 %v2280, %v2280
  %v2317 = vunpack.c.l.b16 %v2246
  %v2318 = vunpack.c.l.b16 %v2247
  %v2319 = vunpack.c.l.b16 %v2248
  %v2320 = vunpack.c.l.b16 %v2249
  %v2321 = vunpack.c.l.b16 %v2250
  %v2322 = vunpack.c.l.b16 %v2251
  %v2323 = vunpack.c.l.b16 %v2252
  %v2324 = vunpack.c.l.b16 %v2253
  %v2325 = vunpack.c.l.b16 %v2254
  %v2326 = vunpack.c.l.b16 %v2255
  %v2327 = vunpack.c.l.b16 %v2256
  %v2328 = vunpack.c.l.b16 %v2257
  %v2329 = vunpack.c.l.b16 %v2258
  %v2330 = vunpack.c.l.b16 %v2259
  %v2331 = vunpack.c.l.b16 %v2260
  %v2332 = vunpack.c.l.b16 %v2261
  %v2333 = vunpack.c.l.b16 %v2262
  %v2334 = vunpack.c.l.b16 %v2263
  %v2335 = vunpack.c.l.b16 %v2264
  %v2336 = vunpack.c.l.b16 %v2265
  %v2337 = vunpack.c.l.b16 %v2266
  %v2338 = vunpack.c.l.b16 %v2267
  %v2339 = vunpack.c.l.b16 %v2268
  %v2340 = vunpack.c.l.b16 %v2269
  %v2341 = vunpack.c.l.b16 %v2270
  %v2342 = vunpack.c.l.b16 %v2271
  %v2343 = vunpack.c.l.b16 %v2272
  %v2344 = vunpack.c.l.b16 %v2273
  %v2345 = vunpack.c.l.b16 %v2274
  %v2346 = vunpack.c.l.b16 %v2275
  %v2347 = vunpack.c.l.b16 %v2276
  %v2348 = vunpack.c.l.b16 %v2277
  %v2349 = vpack.c.b16 %v2318, %v2317
  %v2350 = vpack.c.b16 %v2320, %v2319
  %v2351 = vpack.c.b16 %v2322, %v2321
  %v2352 = vpack.c.b16 %v2324, %v2323
  %v2353 = vpack.c.b16 %v2326, %v2325
  %v2354 = vpack.c.b16 %v2328, %v2327
  %v2355 = vpack.c.b16 %v2330, %v2329
  %v2356 = vpack.c.b16 %v2332, %v2331
  %v2357 = vpack.c.b16 %v2334, %v2333
  %v2358 = vpack.c.b16 %v2336, %v2335
  %v2359 = vpack.c.b16 %v2338, %v2337
  %v2360 = vpack.c.b16 %v2340, %v2339
  %v2361 = vpack.c.b16 %v2342, %v2341
  %v2362 = vpack.c.b16 %v2344, %v2343
  %v2363 = vpack.c.b16 %v2346, %v2345
  %v2364 = vpack.c.b16 %v2348, %v2347
  %2381 = vmatpush.bf16.msra.mxu0 %v2356
  %2382 = vmatpush.bf16.msra.mxu0 %v2355
  %2383 = vmatpush.bf16.msra.mxu0 %v2354
  %2384 = vmatpush.bf16.msra.mxu0 %v2353
  %2385 = vmatpush.bf16.msra.mxu0 %v2352
  %2386 = vmatpush.bf16.msra.mxu0 %v2351
  %2387 = vmatpush.bf16.msra.mxu0 %v2350
  %2388 = vmatpush.bf16.msra.mxu0 %v2349
  %2389 = vmatmul.bf16.gmra.mxu0 %v2281
  %v2390 = vpop.f32.mrf.mxu0
  %v2391 = vadd.f32 0.0, %v2390
  %v2392 = vpop.f32.mrf.mxu0
  %2393 = vdwg.mxu0
  %2394 = vmatpush.bf16.msra.mxu0 %v2364
  %2395 = vmatpush.bf16.msra.mxu0 %v2363
  %2396 = vmatpush.bf16.msra.mxu0 %v2362
  %2397 = vmatpush.bf16.msra.mxu0 %v2361
  %2398 = vmatpush.bf16.msra.mxu0 %v2360
  %2399 = vmatpush.bf16.msra.mxu0 %v2359
  %2400 = vmatpush.bf16.msra.mxu0 %v2358
  %2401 = vmatpush.bf16.msra.mxu0 %v2357
  %2402 = vmatmul.bf16.gmra.mxu0 %v2282
  %v2403 = vpop.f32.mrf.mxu0
  %v2404 = vadd.f32 %v2391, %v2403
  %v2405 = vpop.f32.mrf.mxu0
  %2406 = vdwg.mxu0
  %v2407 = vadd.f32 %v2244, %v2404
  %s2408 = scalar_lea.vmem %s5, 640
  %v2409 = vld [vmem:[%s2408] sm:$0xf]
  %v2410 = vld [vmem:[%s2408 + $0x4] sm:$0xf]
  %v2411 = vld [vmem:[%s2408 + $0x8] sm:$0xf]
  %v2412 = vld [vmem:[%s2408 + $0xc] sm:$0xf]
  %v2413 = vld [vmem:[%s2408 + $0x10] sm:$0xf]
  %v2414 = vld [vmem:[%s2408 + $0x14] sm:$0xf]
  %v2415 = vld [vmem:[%s2408 + $0x18] sm:$0xf]
  %v2416 = vld [vmem:[%s2408 + $0x1c] sm:$0xf]
  %v2417 = vld [vmem:[%s2408 + $0x20] sm:$0xf]
  %v2418 = vld [vmem:[%s2408 + $0x24] sm:$0xf]
  %v2419 = vld [vmem:[%s2408 + $0x28] sm:$0xf]
  %v2420 = vld [vmem:[%s2408 + $0x2c] sm:$0xf]
  %v2421 = vld [vmem:[%s2408 + $0x30] sm:$0xf]
  %v2422 = vld [vmem:[%s2408 + $0x34] sm:$0xf]
  %v2423 = vld [vmem:[%s2408 + $0x38] sm:$0xf]
  %v2424 = vld [vmem:[%s2408 + $0x3c] sm:$0xf]
  %v2425 = vld [vmem:[%s2408 + $0x40] sm:$0xf]
  %v2426 = vld [vmem:[%s2408 + $0x44] sm:$0xf]
  %v2427 = vld [vmem:[%s2408 + $0x48] sm:$0xf]
  %v2428 = vld [vmem:[%s2408 + $0x4c] sm:$0xf]
  %v2429 = vld [vmem:[%s2408 + $0x50] sm:$0xf]
  %v2430 = vld [vmem:[%s2408 + $0x54] sm:$0xf]
  %v2431 = vld [vmem:[%s2408 + $0x58] sm:$0xf]
  %v2432 = vld [vmem:[%s2408 + $0x5c] sm:$0xf]
  %v2433 = vld [vmem:[%s2408 + $0x60] sm:$0xf]
  %v2434 = vld [vmem:[%s2408 + $0x64] sm:$0xf]
  %v2435 = vld [vmem:[%s2408 + $0x68] sm:$0xf]
  %v2436 = vld [vmem:[%s2408 + $0x6c] sm:$0xf]
  %v2437 = vld [vmem:[%s2408 + $0x70] sm:$0xf]
  %v2438 = vld [vmem:[%s2408 + $0x74] sm:$0xf]
  %v2439 = vld [vmem:[%s2408 + $0x78] sm:$0xf]
  %v2440 = vld [vmem:[%s2408 + $0x7c] sm:$0xf]
  %v2442 = vunpack.c.l.b16 %v1591
  %v2443 = vunpack.c.h.b16 %v1591
  %v2444 = vpack.c.b16 %v2442, %v2442
  %v2445 = vpack.c.b16 %v2443, %v2443
  %v2480 = vunpack.c.l.b16 %v2409
  %v2481 = vunpack.c.l.b16 %v2410
  %v2482 = vunpack.c.l.b16 %v2411
  %v2483 = vunpack.c.l.b16 %v2412
  %v2484 = vunpack.c.l.b16 %v2413
  %v2485 = vunpack.c.l.b16 %v2414
  %v2486 = vunpack.c.l.b16 %v2415
  %v2487 = vunpack.c.l.b16 %v2416
  %v2488 = vunpack.c.l.b16 %v2417
  %v2489 = vunpack.c.l.b16 %v2418
  %v2490 = vunpack.c.l.b16 %v2419
  %v2491 = vunpack.c.l.b16 %v2420
  %v2492 = vunpack.c.l.b16 %v2421
  %v2493 = vunpack.c.l.b16 %v2422
  %v2494 = vunpack.c.l.b16 %v2423
  %v2495 = vunpack.c.l.b16 %v2424
  %v2496 = vunpack.c.l.b16 %v2425
  %v2497 = vunpack.c.l.b16 %v2426
  %v2498 = vunpack.c.l.b16 %v2427
  %v2499 = vunpack.c.l.b16 %v2428
  %v2500 = vunpack.c.l.b16 %v2429
  %v2501 = vunpack.c.l.b16 %v2430
  %v2502 = vunpack.c.l.b16 %v2431
  %v2503 = vunpack.c.l.b16 %v2432
  %v2504 = vunpack.c.l.b16 %v2433
  %v2505 = vunpack.c.l.b16 %v2434
  %v2506 = vunpack.c.l.b16 %v2435
  %v2507 = vunpack.c.l.b16 %v2436
  %v2508 = vunpack.c.l.b16 %v2437
  %v2509 = vunpack.c.l.b16 %v2438
  %v2510 = vunpack.c.l.b16 %v2439
  %v2511 = vunpack.c.l.b16 %v2440
  %v2512 = vpack.c.b16 %v2481, %v2480
  %v2513 = vpack.c.b16 %v2483, %v2482
  %v2514 = vpack.c.b16 %v2485, %v2484
  %v2515 = vpack.c.b16 %v2487, %v2486
  %v2516 = vpack.c.b16 %v2489, %v2488
  %v2517 = vpack.c.b16 %v2491, %v2490
  %v2518 = vpack.c.b16 %v2493, %v2492
  %v2519 = vpack.c.b16 %v2495, %v2494
  %v2520 = vpack.c.b16 %v2497, %v2496
  %v2521 = vpack.c.b16 %v2499, %v2498
  %v2522 = vpack.c.b16 %v2501, %v2500
  %v2523 = vpack.c.b16 %v2503, %v2502
  %v2524 = vpack.c.b16 %v2505, %v2504
  %v2525 = vpack.c.b16 %v2507, %v2506
  %v2526 = vpack.c.b16 %v2509, %v2508
  %v2527 = vpack.c.b16 %v2511, %v2510
  %2544 = vmatpush.bf16.msra.mxu0 %v2519
  %2545 = vmatpush.bf16.msra.mxu0 %v2518
  %2546 = vmatpush.bf16.msra.mxu0 %v2517
  %2547 = vmatpush.bf16.msra.mxu0 %v2516
  %2548 = vmatpush.bf16.msra.mxu0 %v2515
  %2549 = vmatpush.bf16.msra.mxu0 %v2514
  %2550 = vmatpush.bf16.msra.mxu0 %v2513
  %2551 = vmatpush.bf16.msra.mxu0 %v2512
  %2552 = vmatmul.bf16.gmra.mxu0 %v2444
  %v2553 = vpop.f32.mrf.mxu0
  %v2554 = vadd.f32 0.0, %v2553
  %v2555 = vpop.f32.mrf.mxu0
  %2556 = vdwg.mxu0
  %2557 = vmatpush.bf16.msra.mxu0 %v2527
  %2558 = vmatpush.bf16.msra.mxu0 %v2526
  %2559 = vmatpush.bf16.msra.mxu0 %v2525
  %2560 = vmatpush.bf16.msra.mxu0 %v2524
  %2561 = vmatpush.bf16.msra.mxu0 %v2523
  %2562 = vmatpush.bf16.msra.mxu0 %v2522
  %2563 = vmatpush.bf16.msra.mxu0 %v2521
  %2564 = vmatpush.bf16.msra.mxu0 %v2520
  %2565 = vmatmul.bf16.gmra.mxu0 %v2445
  %v2566 = vpop.f32.mrf.mxu0
  %v2567 = vadd.f32 %v2554, %v2566
  %v2568 = vpop.f32.mrf.mxu0
  %2569 = vdwg.mxu0
  %v2570 = vadd.f32 %v2407, %v2567
  %s2571 = scalar_lea.vmem %s5, 768
  %v2572 = vld [vmem:[%s2571] sm:$0xf]
  %v2573 = vld [vmem:[%s2571 + $0x4] sm:$0xf]
  %v2574 = vld [vmem:[%s2571 + $0x8] sm:$0xf]
  %v2575 = vld [vmem:[%s2571 + $0xc] sm:$0xf]
  %v2576 = vld [vmem:[%s2571 + $0x10] sm:$0xf]
  %v2577 = vld [vmem:[%s2571 + $0x14] sm:$0xf]
  %v2578 = vld [vmem:[%s2571 + $0x18] sm:$0xf]
  %v2579 = vld [vmem:[%s2571 + $0x1c] sm:$0xf]
  %v2580 = vld [vmem:[%s2571 + $0x20] sm:$0xf]
  %v2581 = vld [vmem:[%s2571 + $0x24] sm:$0xf]
  %v2582 = vld [vmem:[%s2571 + $0x28] sm:$0xf]
  %v2583 = vld [vmem:[%s2571 + $0x2c] sm:$0xf]
  %v2584 = vld [vmem:[%s2571 + $0x30] sm:$0xf]
  %v2585 = vld [vmem:[%s2571 + $0x34] sm:$0xf]
  %v2586 = vld [vmem:[%s2571 + $0x38] sm:$0xf]
  %v2587 = vld [vmem:[%s2571 + $0x3c] sm:$0xf]
  %v2588 = vld [vmem:[%s2571 + $0x40] sm:$0xf]
  %v2589 = vld [vmem:[%s2571 + $0x44] sm:$0xf]
  %v2590 = vld [vmem:[%s2571 + $0x48] sm:$0xf]
  %v2591 = vld [vmem:[%s2571 + $0x4c] sm:$0xf]
  %v2592 = vld [vmem:[%s2571 + $0x50] sm:$0xf]
  %v2593 = vld [vmem:[%s2571 + $0x54] sm:$0xf]
  %v2594 = vld [vmem:[%s2571 + $0x58] sm:$0xf]
  %v2595 = vld [vmem:[%s2571 + $0x5c] sm:$0xf]
  %v2596 = vld [vmem:[%s2571 + $0x60] sm:$0xf]
  %v2597 = vld [vmem:[%s2571 + $0x64] sm:$0xf]
  %v2598 = vld [vmem:[%s2571 + $0x68] sm:$0xf]
  %v2599 = vld [vmem:[%s2571 + $0x6c] sm:$0xf]
  %v2600 = vld [vmem:[%s2571 + $0x70] sm:$0xf]
  %v2601 = vld [vmem:[%s2571 + $0x74] sm:$0xf]
  %v2602 = vld [vmem:[%s2571 + $0x78] sm:$0xf]
  %v2603 = vld [vmem:[%s2571 + $0x7c] sm:$0xf]
  %v2605 = vunpack.c.l.b16 %v1592
  %v2606 = vunpack.c.h.b16 %v1592
  %v2607 = vpack.c.b16 %v2605, %v2605
  %v2608 = vpack.c.b16 %v2606, %v2606
  %v2643 = vunpack.c.l.b16 %v2572
  %v2644 = vunpack.c.l.b16 %v2573
  %v2645 = vunpack.c.l.b16 %v2574
  %v2646 = vunpack.c.l.b16 %v2575
  %v2647 = vunpack.c.l.b16 %v2576
  %v2648 = vunpack.c.l.b16 %v2577
  %v2649 = vunpack.c.l.b16 %v2578
  %v2650 = vunpack.c.l.b16 %v2579
  %v2651 = vunpack.c.l.b16 %v2580
  %v2652 = vunpack.c.l.b16 %v2581
  %v2653 = vunpack.c.l.b16 %v2582
  %v2654 = vunpack.c.l.b16 %v2583
  %v2655 = vunpack.c.l.b16 %v2584
  %v2656 = vunpack.c.l.b16 %v2585
  %v2657 = vunpack.c.l.b16 %v2586
  %v2658 = vunpack.c.l.b16 %v2587
  %v2659 = vunpack.c.l.b16 %v2588
  %v2660 = vunpack.c.l.b16 %v2589
  %v2661 = vunpack.c.l.b16 %v2590
  %v2662 = vunpack.c.l.b16 %v2591
  %v2663 = vunpack.c.l.b16 %v2592
  %v2664 = vunpack.c.l.b16 %v2593
  %v2665 = vunpack.c.l.b16 %v2594
  %v2666 = vunpack.c.l.b16 %v2595
  %v2667 = vunpack.c.l.b16 %v2596
  %v2668 = vunpack.c.l.b16 %v2597
  %v2669 = vunpack.c.l.b16 %v2598
  %v2670 = vunpack.c.l.b16 %v2599
  %v2671 = vunpack.c.l.b16 %v2600
  %v2672 = vunpack.c.l.b16 %v2601
  %v2673 = vunpack.c.l.b16 %v2602
  %v2674 = vunpack.c.l.b16 %v2603
  %v2675 = vpack.c.b16 %v2644, %v2643
  %v2676 = vpack.c.b16 %v2646, %v2645
  %v2677 = vpack.c.b16 %v2648, %v2647
  %v2678 = vpack.c.b16 %v2650, %v2649
  %v2679 = vpack.c.b16 %v2652, %v2651
  %v2680 = vpack.c.b16 %v2654, %v2653
  %v2681 = vpack.c.b16 %v2656, %v2655
  %v2682 = vpack.c.b16 %v2658, %v2657
  %v2683 = vpack.c.b16 %v2660, %v2659
  %v2684 = vpack.c.b16 %v2662, %v2661
  %v2685 = vpack.c.b16 %v2664, %v2663
  %v2686 = vpack.c.b16 %v2666, %v2665
  %v2687 = vpack.c.b16 %v2668, %v2667
  %v2688 = vpack.c.b16 %v2670, %v2669
  %v2689 = vpack.c.b16 %v2672, %v2671
  %v2690 = vpack.c.b16 %v2674, %v2673
  %2707 = vmatpush.bf16.msra.mxu0 %v2682
  %2708 = vmatpush.bf16.msra.mxu0 %v2681
  %2709 = vmatpush.bf16.msra.mxu0 %v2680
  %2710 = vmatpush.bf16.msra.mxu0 %v2679
  %2711 = vmatpush.bf16.msra.mxu0 %v2678
  %2712 = vmatpush.bf16.msra.mxu0 %v2677
  %2713 = vmatpush.bf16.msra.mxu0 %v2676
  %2714 = vmatpush.bf16.msra.mxu0 %v2675
  %2715 = vmatmul.bf16.gmra.mxu0 %v2607
  %v2716 = vpop.f32.mrf.mxu0
  %v2717 = vadd.f32 0.0, %v2716
  %v2718 = vpop.f32.mrf.mxu0
  %2719 = vdwg.mxu0
  %2720 = vmatpush.bf16.msra.mxu0 %v2690
  %2721 = vmatpush.bf16.msra.mxu0 %v2689
  %2722 = vmatpush.bf16.msra.mxu0 %v2688
  %2723 = vmatpush.bf16.msra.mxu0 %v2687
  %2724 = vmatpush.bf16.msra.mxu0 %v2686
  %2725 = vmatpush.bf16.msra.mxu0 %v2685
  %2726 = vmatpush.bf16.msra.mxu0 %v2684
  %2727 = vmatpush.bf16.msra.mxu0 %v2683
  %2728 = vmatmul.bf16.gmra.mxu0 %v2608
  %v2729 = vpop.f32.mrf.mxu0
  %v2730 = vadd.f32 %v2717, %v2729
  %v2731 = vpop.f32.mrf.mxu0
  %2732 = vdwg.mxu0
  %v2733 = vadd.f32 %v2570, %v2730
  %s2734 = scalar_lea.vmem %s5, 896
  %v2735 = vld [vmem:[%s2734] sm:$0xf]
  %v2736 = vld [vmem:[%s2734 + $0x4] sm:$0xf]
  %v2737 = vld [vmem:[%s2734 + $0x8] sm:$0xf]
  %v2738 = vld [vmem:[%s2734 + $0xc] sm:$0xf]
  %v2739 = vld [vmem:[%s2734 + $0x10] sm:$0xf]
  %v2740 = vld [vmem:[%s2734 + $0x14] sm:$0xf]
  %v2741 = vld [vmem:[%s2734 + $0x18] sm:$0xf]
  %v2742 = vld [vmem:[%s2734 + $0x1c] sm:$0xf]
  %v2743 = vld [vmem:[%s2734 + $0x20] sm:$0xf]
  %v2744 = vld [vmem:[%s2734 + $0x24] sm:$0xf]
  %v2745 = vld [vmem:[%s2734 + $0x28] sm:$0xf]
  %v2746 = vld [vmem:[%s2734 + $0x2c] sm:$0xf]
  %v2747 = vld [vmem:[%s2734 + $0x30] sm:$0xf]
  %v2748 = vld [vmem:[%s2734 + $0x34] sm:$0xf]
  %v2749 = vld [vmem:[%s2734 + $0x38] sm:$0xf]
  %v2750 = vld [vmem:[%s2734 + $0x3c] sm:$0xf]
  %v2751 = vld [vmem:[%s2734 + $0x40] sm:$0xf]
  %v2752 = vld [vmem:[%s2734 + $0x44] sm:$0xf]
  %v2753 = vld [vmem:[%s2734 + $0x48] sm:$0xf]
  %v2754 = vld [vmem:[%s2734 + $0x4c] sm:$0xf]
  %v2755 = vld [vmem:[%s2734 + $0x50] sm:$0xf]
  %v2756 = vld [vmem:[%s2734 + $0x54] sm:$0xf]
  %v2757 = vld [vmem:[%s2734 + $0x58] sm:$0xf]
  %v2758 = vld [vmem:[%s2734 + $0x5c] sm:$0xf]
  %v2759 = vld [vmem:[%s2734 + $0x60] sm:$0xf]
  %v2760 = vld [vmem:[%s2734 + $0x64] sm:$0xf]
  %v2761 = vld [vmem:[%s2734 + $0x68] sm:$0xf]
  %v2762 = vld [vmem:[%s2734 + $0x6c] sm:$0xf]
  %v2763 = vld [vmem:[%s2734 + $0x70] sm:$0xf]
  %v2764 = vld [vmem:[%s2734 + $0x74] sm:$0xf]
  %v2765 = vld [vmem:[%s2734 + $0x78] sm:$0xf]
  %v2766 = vld [vmem:[%s2734 + $0x7c] sm:$0xf]
  %v2768 = vunpack.c.l.b16 %v1593
  %v2769 = vunpack.c.h.b16 %v1593
  %v2770 = vpack.c.b16 %v2768, %v2768
  %v2771 = vpack.c.b16 %v2769, %v2769
  %v2806 = vunpack.c.l.b16 %v2735
  %v2807 = vunpack.c.l.b16 %v2736
  %v2808 = vunpack.c.l.b16 %v2737
  %v2809 = vunpack.c.l.b16 %v2738
  %v2810 = vunpack.c.l.b16 %v2739
  %v2811 = vunpack.c.l.b16 %v2740
  %v2812 = vunpack.c.l.b16 %v2741
  %v2813 = vunpack.c.l.b16 %v2742
  %v2814 = vunpack.c.l.b16 %v2743
  %v2815 = vunpack.c.l.b16 %v2744
  %v2816 = vunpack.c.l.b16 %v2745
  %v2817 = vunpack.c.l.b16 %v2746
  %v2818 = vunpack.c.l.b16 %v2747
  %v2819 = vunpack.c.l.b16 %v2748
  %v2820 = vunpack.c.l.b16 %v2749
  %v2821 = vunpack.c.l.b16 %v2750
  %v2822 = vunpack.c.l.b16 %v2751
  %v2823 = vunpack.c.l.b16 %v2752
  %v2824 = vunpack.c.l.b16 %v2753
  %v2825 = vunpack.c.l.b16 %v2754
  %v2826 = vunpack.c.l.b16 %v2755
  %v2827 = vunpack.c.l.b16 %v2756
  %v2828 = vunpack.c.l.b16 %v2757
  %v2829 = vunpack.c.l.b16 %v2758
  %v2830 = vunpack.c.l.b16 %v2759
  %v2831 = vunpack.c.l.b16 %v2760
  %v2832 = vunpack.c.l.b16 %v2761
  %v2833 = vunpack.c.l.b16 %v2762
  %v2834 = vunpack.c.l.b16 %v2763
  %v2835 = vunpack.c.l.b16 %v2764
  %v2836 = vunpack.c.l.b16 %v2765
  %v2837 = vunpack.c.l.b16 %v2766
  %v2838 = vpack.c.b16 %v2807, %v2806
  %v2839 = vpack.c.b16 %v2809, %v2808
  %v2840 = vpack.c.b16 %v2811, %v2810
  %v2841 = vpack.c.b16 %v2813, %v2812
  %v2842 = vpack.c.b16 %v2815, %v2814
  %v2843 = vpack.c.b16 %v2817, %v2816
  %v2844 = vpack.c.b16 %v2819, %v2818
  %v2845 = vpack.c.b16 %v2821, %v2820
  %v2846 = vpack.c.b16 %v2823, %v2822
  %v2847 = vpack.c.b16 %v2825, %v2824
  %v2848 = vpack.c.b16 %v2827, %v2826
  %v2849 = vpack.c.b16 %v2829, %v2828
  %v2850 = vpack.c.b16 %v2831, %v2830
  %v2851 = vpack.c.b16 %v2833, %v2832
  %v2852 = vpack.c.b16 %v2835, %v2834
  %v2853 = vpack.c.b16 %v2837, %v2836
  %2870 = vmatpush.bf16.msra.mxu0 %v2845
  %2871 = vmatpush.bf16.msra.mxu0 %v2844
  %2872 = vmatpush.bf16.msra.mxu0 %v2843
  %2873 = vmatpush.bf16.msra.mxu0 %v2842
  %2874 = vmatpush.bf16.msra.mxu0 %v2841
  %2875 = vmatpush.bf16.msra.mxu0 %v2840
  %2876 = vmatpush.bf16.msra.mxu0 %v2839
  %2877 = vmatpush.bf16.msra.mxu0 %v2838
  %2878 = vmatmul.bf16.gmra.mxu0 %v2770
  %v2879 = vpop.f32.mrf.mxu0
  %v2880 = vadd.f32 0.0, %v2879
  %v2881 = vpop.f32.mrf.mxu0
  %2882 = vdwg.mxu0
  %2883 = vmatpush.bf16.msra.mxu0 %v2853
  %2884 = vmatpush.bf16.msra.mxu0 %v2852
  %2885 = vmatpush.bf16.msra.mxu0 %v2851
  %2886 = vmatpush.bf16.msra.mxu0 %v2850
  %2887 = vmatpush.bf16.msra.mxu0 %v2849
  %2888 = vmatpush.bf16.msra.mxu0 %v2848
  %2889 = vmatpush.bf16.msra.mxu0 %v2847
  %2890 = vmatpush.bf16.msra.mxu0 %v2846
  %2891 = vmatmul.bf16.gmra.mxu0 %v2771
  %v2892 = vpop.f32.mrf.mxu0
  %v2893 = vadd.f32 %v2880, %v2892
  %v2894 = vpop.f32.mrf.mxu0
  %2895 = vdwg.mxu0
  %v2896 = vadd.f32 %v2733, %v2893
  %s2897 = scalar_lea.vmem %s5, 1024
  %v2898 = vld [vmem:[%s2897] sm:$0xf]
  %v2899 = vld [vmem:[%s2897 + $0x4] sm:$0xf]
  %v2900 = vld [vmem:[%s2897 + $0x8] sm:$0xf]
  %v2901 = vld [vmem:[%s2897 + $0xc] sm:$0xf]
  %v2902 = vld [vmem:[%s2897 + $0x10] sm:$0xf]
  %v2903 = vld [vmem:[%s2897 + $0x14] sm:$0xf]
  %v2904 = vld [vmem:[%s2897 + $0x18] sm:$0xf]
  %v2905 = vld [vmem:[%s2897 + $0x1c] sm:$0xf]
  %v2906 = vld [vmem:[%s2897 + $0x20] sm:$0xf]
  %v2907 = vld [vmem:[%s2897 + $0x24] sm:$0xf]
  %v2908 = vld [vmem:[%s2897 + $0x28] sm:$0xf]
  %v2909 = vld [vmem:[%s2897 + $0x2c] sm:$0xf]
  %v2910 = vld [vmem:[%s2897 + $0x30] sm:$0xf]
  %v2911 = vld [vmem:[%s2897 + $0x34] sm:$0xf]
  %v2912 = vld [vmem:[%s2897 + $0x38] sm:$0xf]
  %v2913 = vld [vmem:[%s2897 + $0x3c] sm:$0xf]
  %v2914 = vld [vmem:[%s2897 + $0x40] sm:$0xf]
  %v2915 = vld [vmem:[%s2897 + $0x44] sm:$0xf]
  %v2916 = vld [vmem:[%s2897 + $0x48] sm:$0xf]
  %v2917 = vld [vmem:[%s2897 + $0x4c] sm:$0xf]
  %v2918 = vld [vmem:[%s2897 + $0x50] sm:$0xf]
  %v2919 = vld [vmem:[%s2897 + $0x54] sm:$0xf]
  %v2920 = vld [vmem:[%s2897 + $0x58] sm:$0xf]
  %v2921 = vld [vmem:[%s2897 + $0x5c] sm:$0xf]
  %v2922 = vld [vmem:[%s2897 + $0x60] sm:$0xf]
  %v2923 = vld [vmem:[%s2897 + $0x64] sm:$0xf]
  %v2924 = vld [vmem:[%s2897 + $0x68] sm:$0xf]
  %v2925 = vld [vmem:[%s2897 + $0x6c] sm:$0xf]
  %v2926 = vld [vmem:[%s2897 + $0x70] sm:$0xf]
  %v2927 = vld [vmem:[%s2897 + $0x74] sm:$0xf]
  %v2928 = vld [vmem:[%s2897 + $0x78] sm:$0xf]
  %v2929 = vld [vmem:[%s2897 + $0x7c] sm:$0xf]
  %v2931 = vunpack.c.l.b16 %v1594
  %v2932 = vunpack.c.h.b16 %v1594
  %v2933 = vpack.c.b16 %v2931, %v2931
  %v2934 = vpack.c.b16 %v2932, %v2932
  %v2969 = vunpack.c.l.b16 %v2898
  %v2970 = vunpack.c.l.b16 %v2899
  %v2971 = vunpack.c.l.b16 %v2900
  %v2972 = vunpack.c.l.b16 %v2901
  %v2973 = vunpack.c.l.b16 %v2902
  %v2974 = vunpack.c.l.b16 %v2903
  %v2975 = vunpack.c.l.b16 %v2904
  %v2976 = vunpack.c.l.b16 %v2905
  %v2977 = vunpack.c.l.b16 %v2906
  %v2978 = vunpack.c.l.b16 %v2907
  %v2979 = vunpack.c.l.b16 %v2908
  %v2980 = vunpack.c.l.b16 %v2909
  %v2981 = vunpack.c.l.b16 %v2910
  %v2982 = vunpack.c.l.b16 %v2911
  %v2983 = vunpack.c.l.b16 %v2912
  %v2984 = vunpack.c.l.b16 %v2913
  %v2985 = vunpack.c.l.b16 %v2914
  %v2986 = vunpack.c.l.b16 %v2915
  %v2987 = vunpack.c.l.b16 %v2916
  %v2988 = vunpack.c.l.b16 %v2917
  %v2989 = vunpack.c.l.b16 %v2918
  %v2990 = vunpack.c.l.b16 %v2919
  %v2991 = vunpack.c.l.b16 %v2920
  %v2992 = vunpack.c.l.b16 %v2921
  %v2993 = vunpack.c.l.b16 %v2922
  %v2994 = vunpack.c.l.b16 %v2923
  %v2995 = vunpack.c.l.b16 %v2924
  %v2996 = vunpack.c.l.b16 %v2925
  %v2997 = vunpack.c.l.b16 %v2926
  %v2998 = vunpack.c.l.b16 %v2927
  %v2999 = vunpack.c.l.b16 %v2928
  %v3000 = vunpack.c.l.b16 %v2929
  %v3001 = vpack.c.b16 %v2970, %v2969
  %v3002 = vpack.c.b16 %v2972, %v2971
  %v3003 = vpack.c.b16 %v2974, %v2973
  %v3004 = vpack.c.b16 %v2976, %v2975
  %v3005 = vpack.c.b16 %v2978, %v2977
  %v3006 = vpack.c.b16 %v2980, %v2979
  %v3007 = vpack.c.b16 %v2982, %v2981
  %v3008 = vpack.c.b16 %v2984, %v2983
  %v3009 = vpack.c.b16 %v2986, %v2985
  %v3010 = vpack.c.b16 %v2988, %v2987
  %v3011 = vpack.c.b16 %v2990, %v2989
  %v3012 = vpack.c.b16 %v2992, %v2991
  %v3013 = vpack.c.b16 %v2994, %v2993
  %v3014 = vpack.c.b16 %v2996, %v2995
  %v3015 = vpack.c.b16 %v2998, %v2997
  %v3016 = vpack.c.b16 %v3000, %v2999
  %3033 = vmatpush.bf16.msra.mxu0 %v3008
  %3034 = vmatpush.bf16.msra.mxu0 %v3007
  %3035 = vmatpush.bf16.msra.mxu0 %v3006
  %3036 = vmatpush.bf16.msra.mxu0 %v3005
  %3037 = vmatpush.bf16.msra.mxu0 %v3004
  %3038 = vmatpush.bf16.msra.mxu0 %v3003
  %3039 = vmatpush.bf16.msra.mxu0 %v3002
  %3040 = vmatpush.bf16.msra.mxu0 %v3001
  %3041 = vmatmul.bf16.gmra.mxu0 %v2933
  %v3042 = vpop.f32.mrf.mxu0
  %v3043 = vadd.f32 0.0, %v3042
  %v3044 = vpop.f32.mrf.mxu0
  %3045 = vdwg.mxu0
  %3046 = vmatpush.bf16.msra.mxu0 %v3016
  %3047 = vmatpush.bf16.msra.mxu0 %v3015
  %3048 = vmatpush.bf16.msra.mxu0 %v3014
  %3049 = vmatpush.bf16.msra.mxu0 %v3013
  %3050 = vmatpush.bf16.msra.mxu0 %v3012
  %3051 = vmatpush.bf16.msra.mxu0 %v3011
  %3052 = vmatpush.bf16.msra.mxu0 %v3010
  %3053 = vmatpush.bf16.msra.mxu0 %v3009
  %3054 = vmatmul.bf16.gmra.mxu0 %v2934
  %v3055 = vpop.f32.mrf.mxu0
  %v3056 = vadd.f32 %v3043, %v3055
  %v3057 = vpop.f32.mrf.mxu0
  %3058 = vdwg.mxu0
  %v3059 = vadd.f32 %v2896, %v3056
  %s3060 = scalar_lea.vmem %s5, 1152
  %v3061 = vld [vmem:[%s3060] sm:$0xf]
  %v3062 = vld [vmem:[%s3060 + $0x4] sm:$0xf]
  %v3063 = vld [vmem:[%s3060 + $0x8] sm:$0xf]
  %v3064 = vld [vmem:[%s3060 + $0xc] sm:$0xf]
  %v3065 = vld [vmem:[%s3060 + $0x10] sm:$0xf]
  %v3066 = vld [vmem:[%s3060 + $0x14] sm:$0xf]
  %v3067 = vld [vmem:[%s3060 + $0x18] sm:$0xf]
  %v3068 = vld [vmem:[%s3060 + $0x1c] sm:$0xf]
  %v3069 = vld [vmem:[%s3060 + $0x20] sm:$0xf]
  %v3070 = vld [vmem:[%s3060 + $0x24] sm:$0xf]
  %v3071 = vld [vmem:[%s3060 + $0x28] sm:$0xf]
  %v3072 = vld [vmem:[%s3060 + $0x2c] sm:$0xf]
  %v3073 = vld [vmem:[%s3060 + $0x30] sm:$0xf]
  %v3074 = vld [vmem:[%s3060 + $0x34] sm:$0xf]
  %v3075 = vld [vmem:[%s3060 + $0x38] sm:$0xf]
  %v3076 = vld [vmem:[%s3060 + $0x3c] sm:$0xf]
  %v3077 = vld [vmem:[%s3060 + $0x40] sm:$0xf]
  %v3078 = vld [vmem:[%s3060 + $0x44] sm:$0xf]
  %v3079 = vld [vmem:[%s3060 + $0x48] sm:$0xf]
  %v3080 = vld [vmem:[%s3060 + $0x4c] sm:$0xf]
  %v3081 = vld [vmem:[%s3060 + $0x50] sm:$0xf]
  %v3082 = vld [vmem:[%s3060 + $0x54] sm:$0xf]
  %v3083 = vld [vmem:[%s3060 + $0x58] sm:$0xf]
  %v3084 = vld [vmem:[%s3060 + $0x5c] sm:$0xf]
  %v3085 = vld [vmem:[%s3060 + $0x60] sm:$0xf]
  %v3086 = vld [vmem:[%s3060 + $0x64] sm:$0xf]
  %v3087 = vld [vmem:[%s3060 + $0x68] sm:$0xf]
  %v3088 = vld [vmem:[%s3060 + $0x6c] sm:$0xf]
  %v3089 = vld [vmem:[%s3060 + $0x70] sm:$0xf]
  %v3090 = vld [vmem:[%s3060 + $0x74] sm:$0xf]
  %v3091 = vld [vmem:[%s3060 + $0x78] sm:$0xf]
  %v3092 = vld [vmem:[%s3060 + $0x7c] sm:$0xf]
  %v3094 = vunpack.c.l.b16 %v1595
  %v3095 = vunpack.c.h.b16 %v1595
  %v3096 = vpack.c.b16 %v3094, %v3094
  %v3097 = vpack.c.b16 %v3095, %v3095
  %v3132 = vunpack.c.l.b16 %v3061
  %v3133 = vunpack.c.l.b16 %v3062
  %v3134 = vunpack.c.l.b16 %v3063
  %v3135 = vunpack.c.l.b16 %v3064
  %v3136 = vunpack.c.l.b16 %v3065
  %v3137 = vunpack.c.l.b16 %v3066
  %v3138 = vunpack.c.l.b16 %v3067
  %v3139 = vunpack.c.l.b16 %v3068
  %v3140 = vunpack.c.l.b16 %v3069
  %v3141 = vunpack.c.l.b16 %v3070
  %v3142 = vunpack.c.l.b16 %v3071
  %v3143 = vunpack.c.l.b16 %v3072
  %v3144 = vunpack.c.l.b16 %v3073
  %v3145 = vunpack.c.l.b16 %v3074
  %v3146 = vunpack.c.l.b16 %v3075
  %v3147 = vunpack.c.l.b16 %v3076
  %v3148 = vunpack.c.l.b16 %v3077
  %v3149 = vunpack.c.l.b16 %v3078
  %v3150 = vunpack.c.l.b16 %v3079
  %v3151 = vunpack.c.l.b16 %v3080
  %v3152 = vunpack.c.l.b16 %v3081
  %v3153 = vunpack.c.l.b16 %v3082
  %v3154 = vunpack.c.l.b16 %v3083
  %v3155 = vunpack.c.l.b16 %v3084
  %v3156 = vunpack.c.l.b16 %v3085
  %v3157 = vunpack.c.l.b16 %v3086
  %v3158 = vunpack.c.l.b16 %v3087
  %v3159 = vunpack.c.l.b16 %v3088
  %v3160 = vunpack.c.l.b16 %v3089
  %v3161 = vunpack.c.l.b16 %v3090
  %v3162 = vunpack.c.l.b16 %v3091
  %v3163 = vunpack.c.l.b16 %v3092
  %v3164 = vpack.c.b16 %v3133, %v3132
  %v3165 = vpack.c.b16 %v3135, %v3134
  %v3166 = vpack.c.b16 %v3137, %v3136
  %v3167 = vpack.c.b16 %v3139, %v3138
  %v3168 = vpack.c.b16 %v3141, %v3140
  %v3169 = vpack.c.b16 %v3143, %v3142
  %v3170 = vpack.c.b16 %v3145, %v3144
  %v3171 = vpack.c.b16 %v3147, %v3146
  %v3172 = vpack.c.b16 %v3149, %v3148
  %v3173 = vpack.c.b16 %v3151, %v3150
  %v3174 = vpack.c.b16 %v3153, %v3152
  %v3175 = vpack.c.b16 %v3155, %v3154
  %v3176 = vpack.c.b16 %v3157, %v3156
  %v3177 = vpack.c.b16 %v3159, %v3158
  %v3178 = vpack.c.b16 %v3161, %v3160
  %v3179 = vpack.c.b16 %v3163, %v3162
  %3196 = vmatpush.bf16.msra.mxu0 %v3171
  %3197 = vmatpush.bf16.msra.mxu0 %v3170
  %3198 = vmatpush.bf16.msra.mxu0 %v3169
  %3199 = vmatpush.bf16.msra.mxu0 %v3168
  %3200 = vmatpush.bf16.msra.mxu0 %v3167
  %3201 = vmatpush.bf16.msra.mxu0 %v3166
  %3202 = vmatpush.bf16.msra.mxu0 %v3165
  %3203 = vmatpush.bf16.msra.mxu0 %v3164
  %3204 = vmatmul.bf16.gmra.mxu0 %v3096
  %v3205 = vpop.f32.mrf.mxu0
  %v3206 = vadd.f32 0.0, %v3205
  %v3207 = vpop.f32.mrf.mxu0
  %3208 = vdwg.mxu0
  %3209 = vmatpush.bf16.msra.mxu0 %v3179
  %3210 = vmatpush.bf16.msra.mxu0 %v3178
  %3211 = vmatpush.bf16.msra.mxu0 %v3177
  %3212 = vmatpush.bf16.msra.mxu0 %v3176
  %3213 = vmatpush.bf16.msra.mxu0 %v3175
  %3214 = vmatpush.bf16.msra.mxu0 %v3174
  %3215 = vmatpush.bf16.msra.mxu0 %v3173
  %3216 = vmatpush.bf16.msra.mxu0 %v3172
  %3217 = vmatmul.bf16.gmra.mxu0 %v3097
  %v3218 = vpop.f32.mrf.mxu0
  %v3219 = vadd.f32 %v3206, %v3218
  %v3220 = vpop.f32.mrf.mxu0
  %3221 = vdwg.mxu0
  %v3222 = vadd.f32 %v3059, %v3219
  %v3223 = vld [vmem:[%s6] sm:$0x1]
  %v3225 = vperm.slane %v3223, 0
  %v3227 = vadd.f32 %v3222, %v3225
  %v3228 = vmax.f32 %v3227, 0.0
  %v3229 = vpack.c.bf16 %v3228, %v3228
  %v3230 = vld [vmem:[%s7] sm:$0xf]
  %v3231 = vld [vmem:[%s7 + $0x4] sm:$0xf]
  %v3232 = vld [vmem:[%s7 + $0x8] sm:$0xf]
  %v3233 = vld [vmem:[%s7 + $0xc] sm:$0xf]
  %v3234 = vld [vmem:[%s7 + $0x10] sm:$0xf]
  %v3235 = vld [vmem:[%s7 + $0x14] sm:$0xf]
  %v3236 = vld [vmem:[%s7 + $0x18] sm:$0xf]
  %v3237 = vld [vmem:[%s7 + $0x1c] sm:$0xf]
  %v3238 = vld [vmem:[%s7 + $0x20] sm:$0xf]
  %v3239 = vld [vmem:[%s7 + $0x24] sm:$0xf]
  %v3240 = vld [vmem:[%s7 + $0x28] sm:$0xf]
  %v3241 = vld [vmem:[%s7 + $0x2c] sm:$0xf]
  %v3242 = vld [vmem:[%s7 + $0x30] sm:$0xf]
  %v3243 = vld [vmem:[%s7 + $0x34] sm:$0xf]
  %v3244 = vld [vmem:[%s7 + $0x38] sm:$0xf]
  %v3245 = vld [vmem:[%s7 + $0x3c] sm:$0xf]
  %v3246 = vld [vmem:[%s8] sm:$0x1]
  %v3248 = vperm.slane %v3246, 0
  %v3266 = vunpack.c.l.b16 %v3230
  %v3267 = vunpack.c.l.b16 %v3231
  %v3268 = vunpack.c.l.b16 %v3232
  %v3269 = vunpack.c.l.b16 %v3233
  %v3270 = vunpack.c.l.b16 %v3234
  %v3271 = vunpack.c.l.b16 %v3235
  %v3272 = vunpack.c.l.b16 %v3236
  %v3273 = vunpack.c.l.b16 %v3237
  %v3274 = vunpack.c.l.b16 %v3238
  %v3275 = vunpack.c.l.b16 %v3239
  %v3276 = vunpack.c.l.b16 %v3240
  %v3277 = vunpack.c.l.b16 %v3241
  %v3278 = vunpack.c.l.b16 %v3242
  %v3279 = vunpack.c.l.b16 %v3243
  %v3280 = vunpack.c.l.b16 %v3244
  %v3281 = vunpack.c.l.b16 %v3245
  %v3282 = vpack.c.b16 %v3267, %v3266
  %v3283 = vpack.c.b16 %v3269, %v3268
  %v3284 = vpack.c.b16 %v3271, %v3270
  %v3285 = vpack.c.b16 %v3273, %v3272
  %v3286 = vpack.c.b16 %v3275, %v3274
  %v3287 = vpack.c.b16 %v3277, %v3276
  %v3288 = vpack.c.b16 %v3279, %v3278
  %v3289 = vpack.c.b16 %v3281, %v3280
  %3298 = vmatpush.bf16.msra.mxu0 %v3289
  %3299 = vmatpush.bf16.msra.mxu0 %v3288
  %3300 = vmatpush.bf16.msra.mxu0 %v3287
  %3301 = vmatpush.bf16.msra.mxu0 %v3286
  %3302 = vmatpush.bf16.msra.mxu0 %v3285
  %3303 = vmatpush.bf16.msra.mxu0 %v3284
  %3304 = vmatpush.bf16.msra.mxu0 %v3283
  %3305 = vmatpush.bf16.msra.mxu0 %v3282
  %3306 = vmatmul.bf16.gmra.mxu0 %v3229
  %v3307 = vpop.f32.mrf.mxu0
  %v3308 = vadd.f32 %v3248, %v3307
  %v3309 = vpop.f32.mrf.mxu0
  %3310 = vdwg.mxu0
  %v3311 = vmax.f32 %v3308, 0.0
  %v3312 = vpack.c.bf16 %v3311, %v3311
  %v3313 = vld [vmem:[%s9] sm:$0xf]
  %v3314 = vld [vmem:[%s9 + $0x4] sm:$0xf]
  %v3315 = vld [vmem:[%s9 + $0x8] sm:$0xf]
  %v3316 = vld [vmem:[%s9 + $0xc] sm:$0xf]
  %v3317 = vld [vmem:[%s9 + $0x10] sm:$0xf]
  %v3318 = vld [vmem:[%s9 + $0x14] sm:$0xf]
  %v3319 = vld [vmem:[%s9 + $0x18] sm:$0xf]
  %v3320 = vld [vmem:[%s9 + $0x1c] sm:$0xf]
  %v3321 = vld [vmem:[%s9 + $0x20] sm:$0xf]
  %v3322 = vld [vmem:[%s9 + $0x24] sm:$0xf]
  %v3323 = vld [vmem:[%s9 + $0x28] sm:$0xf]
  %v3324 = vld [vmem:[%s9 + $0x2c] sm:$0xf]
  %v3325 = vld [vmem:[%s9 + $0x30] sm:$0xf]
  %v3326 = vld [vmem:[%s9 + $0x34] sm:$0xf]
  %v3327 = vld [vmem:[%s9 + $0x38] sm:$0xf]
  %v3328 = vld [vmem:[%s9 + $0x3c] sm:$0xf]
  %v3329 = vld [vmem:[%s10] sm:$0x1]
  %v3331 = vperm.slane %v3329, 0
  %v3349 = vunpack.c.l.b16 %v3313
  %v3350 = vunpack.c.l.b16 %v3314
  %v3351 = vunpack.c.l.b16 %v3315
  %v3352 = vunpack.c.l.b16 %v3316
  %v3353 = vunpack.c.l.b16 %v3317
  %v3354 = vunpack.c.l.b16 %v3318
  %v3355 = vunpack.c.l.b16 %v3319
  %v3356 = vunpack.c.l.b16 %v3320
  %v3357 = vunpack.c.l.b16 %v3321
  %v3358 = vunpack.c.l.b16 %v3322
  %v3359 = vunpack.c.l.b16 %v3323
  %v3360 = vunpack.c.l.b16 %v3324
  %v3361 = vunpack.c.l.b16 %v3325
  %v3362 = vunpack.c.l.b16 %v3326
  %v3363 = vunpack.c.l.b16 %v3327
  %v3364 = vunpack.c.l.b16 %v3328
  %v3365 = vpack.c.b16 %v3350, %v3349
  %v3366 = vpack.c.b16 %v3352, %v3351
  %v3367 = vpack.c.b16 %v3354, %v3353
  %v3368 = vpack.c.b16 %v3356, %v3355
  %v3369 = vpack.c.b16 %v3358, %v3357
  %v3370 = vpack.c.b16 %v3360, %v3359
  %v3371 = vpack.c.b16 %v3362, %v3361
  %v3372 = vpack.c.b16 %v3364, %v3363
  %3381 = vmatpush.bf16.msra.mxu0 %v3372
  %3382 = vmatpush.bf16.msra.mxu0 %v3371
  %3383 = vmatpush.bf16.msra.mxu0 %v3370
  %3384 = vmatpush.bf16.msra.mxu0 %v3369
  %3385 = vmatpush.bf16.msra.mxu0 %v3368
  %3386 = vmatpush.bf16.msra.mxu0 %v3367
  %3387 = vmatpush.bf16.msra.mxu0 %v3366
  %3388 = vmatpush.bf16.msra.mxu0 %v3365
  %3389 = vmatmul.bf16.gmra.mxu0 %v3312
  %v3390 = vpop.f32.mrf.mxu0
  %v3391 = vadd.f32 %v3331, %v3390
  %v3392 = vpop.f32.mrf.mxu0
  %3393 = vdwg.mxu0
  %v3394 = vxor.u32 %v3391, 2147483648
  %v3395 = vmul.f32 %v3394, 1.442695
  %v3396 = vpow.pop %v3395
  %v3397 = vadd.f32 %v3396, 1.0
  %v3398 = vrcp.pop %v3397
  %v3399 = vmul.f32 %v3397, %v3398
  %v3400 = vsub.f32 1.0, %v3399
  %v3401 = vmul.f32 %v3398, %v3400
  %v3402 = vadd.f32 %v3398, %v3401
  %vm3403 = vweird.f32 %v3397
  %vm3404 = vweird.f32 %v3398
  %vm3405 = vmor %vm3403, %vm3404
  %v3406 = vsel %vm3405, %v3398, %v3402
  %v3407 = vand.u32 2147483647, %v3397
  %vm3408 = vcmp.eq.f32.partialorder %v3407, 8.507059e+37
  %v3409 = vand.u32 %v3397, 2147483648
  %v3410 = vor.u32 1.1754944e-38, %v3409
  %v3411 = vsel %vm3408, %v3410, %v3406
  %v3412 = vmul.f32 1.0, %v3411
  %3413 = vst [vmem:[%s11] sm:$0xff] %v3412
  // Predicated region
  $region46: #{hyper_params_conv_nn_forward.1} parent=0 // pred_check
    _
  $region47: #{hyper_params_conv_nn_forward.1} parent=0 // pred_check_branch
    %3415 = sbr.rel (0) target = $region49
  $region48: #{hyper_params_conv_nn_forward.1} parent=0 // pred_region
    _
  $region49: #{hyper_params_conv_nn_forward.1} parent=0 // pred_fallthru
    _
  // Predicated region
  $region50: #{hyper_params_conv_nn_forward.1} parent=0 // pred_check
    _
  $region51: #{hyper_params_conv_nn_forward.1} parent=0 // pred_check_branch
    %3417 = sbr.rel (0) target = $region53
  $region52: #{hyper_params_conv_nn_forward.1} parent=0 // pred_region
    _
  $region53: #{hyper_params_conv_nn_forward.1} parent=0 // pred_fallthru
    _

</llo_original>
